<compile_context>
chip_gen: v6e
topology: v6e:2x2x1
jax: 0.10.0
libtpu: 0.0.40
codegen_flags: <defaults>
</compile_context>

<pallas_src>
import functools
import math

import jax
import jax.numpy as jnp
from jax.experimental import pallas as pl
from jax.experimental.pallas import tpu as pltpu  # noqa: F401  (not needed at these shapes)


# ----------------------------------------------------------------------------
# Fused Pallas kernel: QKV proj + multi-head attention + output proj (1 step)
# ----------------------------------------------------------------------------
def _fused_self_attention_kernel(
    x_ref, wqkv_ref, bqkv_ref, wo_ref, bo_ref, o_ref, *, batch, n_tokens, n_heads, d_head
):
    B, N, H, D = batch, n_tokens, n_heads, d_head
    C = H * D

    # ---- Fused QKV projection over ALL tokens of ALL batches at once --------
    # (B*N, C) @ (C, 3C), bf16 operands on the MXU, f32 accumulation.
    # The 1/sqrt(d_k) score scaling is pre-folded into the Q columns of
    # wqkv / bqkv at parameter-fusion time, so no in-kernel scaling is needed.
    x16 = x_ref[...].astype(jnp.bfloat16)                                  # (B*N, C)
    qkv = (
        jnp.dot(x16, wqkv_ref[...], preferred_element_type=jnp.float32)
        + bqkv_ref[...]
    )                                                                      # (B*N, 3C) f32
    qkv16 = qkv.astype(jnp.bfloat16)                                       # MXU operand copy

    # Per-batch output accumulators (f32).  resid_drop / attn_drop are identity
    # at inference; the out_proj bias is added once at store time.
    y = [jnp.zeros((N, C), jnp.float32) for _ in range(B)]

    # ---- Per-head attention + per-head-accumulated output projection --------
    for h in range(H):
        # One 8-lane window per head per tensor (extracted once, reused for all
        # batches).  Column block [h*D:(h+1)*D] of each projection corresponds
        # to head h, matching torch's .view(b_s, n, h, d).permute(...) split.
        qh = qkv16[:, h * D:(h + 1) * D]                    # (B*N, D)  (scale pre-folded)
        kh = qkv16[:, C + h * D:C + (h + 1) * D]            # (B*N, D)
        vh = qkv16[:, 2 * C + h * D:2 * C + (h + 1) * D]    # (B*N, D)
        wo_h = wo_ref[h]                                    # (D, C) head slab of Wo (free)

        for b in range(B):
            r0 = b * N
            q_b = qh[r0:r0 + N]                             # (N, D) sublane slice (free)
            k_b = kh[r0:r0 + N]
            v_b = vh[r0:r0 + N]

            # Q @ K^T without materializing K^T: contract the last dims directly.
            s = jnp.einsum(
                "qd,kd->qk", q_b, k_b, preferred_element_type=jnp.float32
            )                                               # (N, N) f32

            # Numerically stable softmax, exact division (matches torch.softmax).
            s = s - jnp.max(s, axis=-1, keepdims=True)
            p = jnp.exp(s)
            p = p / jnp.sum(p, axis=-1, keepdims=True)

            ctx = jnp.dot(
                p.astype(jnp.bfloat16), v_b, preferred_element_type=jnp.float32
            )                                               # (N, D) f32

            # Output projection accumulated per head:
            #   sum_h ctx_h @ Wo[h*D:(h+1)*D, :]  ==  concat_h(ctx_h) @ Wo
            # (no cross-lane concat, identical MXU work).
            y[b] = y[b] + jnp.dot(
                ctx.astype(jnp.bfloat16), wo_h, preferred_element_type=jnp.float32
            )

    for b in range(B):
        o_ref[b * N:(b + 1) * N, :] = (y[b] + bo_ref[...]).astype(o_ref.dtype)


def self_attention_forward(x, fused, h):
    """x: (B, N, C) -> (B, N, C).  Single fused pallas_call, single grid step."""
    B, N, C = x.shape
    d_head = C // h
    x2 = x.reshape(B * N, C)  # contiguous view: batch folded into the row dim

    kernel = functools.partial(
        _fused_self_attention_kernel, batch=B, n_tokens=N, n_heads=h, d_head=d_head
    )

    out = pl.pallas_call(
        kernel,
        out_shape=jax.ShapeDtypeStruct((B * N, C), x.dtype),
        # No grid / BlockSpecs: single step, every operand resident in VMEM in
        # full (total working set << 1 MiB on all of v5e / v6e / v7x).
    )(x2, fused["wqkv"], fused["bqkv"], fused["wo_hdc"], fused["bo"])
    return out.reshape(B, N, C)


# ----------------------------------------------------------------------------
# Parameter init (matches nn.Linear init in init_weights: W ~ N(0, 0.001), b = 0)
# ----------------------------------------------------------------------------
def init_params(key, d_model):
    ks = jax.random.split(key, 4)

    def lin(k):
        w = 0.001 * jax.random.normal(k, (d_model, d_model), dtype=jnp.float32)  # (out, in)
        b = jnp.zeros((d_model,), dtype=jnp.float32)
        return w.T, b  # transposed so the forward computes x @ w_t

    wq_t, bq = lin(ks[0])
    wk_t, bk = lin(ks[1])
    wv_t, bv = lin(ks[2])
    wo_t, bo = lin(ks[3])
    return dict(wq_t=wq_t, bq=bq, wk_t=wk_t, bk=bk,
                wv_t=wv_t, bv=bv, wo_t=wo_t, bo=bo)


def fuse_params(params, h):
    """ONE-TIME (load-time) fusion: [Wq|Wk|Wv] -> a single (C, 3C) bf16 matrix
    with 1/sqrt(d_k) folded into the Q block, biases fused likewise, and Wo
    reshaped head-major to (H, D, C) bf16."""
    C = params["wq_t"].shape[0]
    d_head = C // h
    scale = 1.0 / math.sqrt(d_head)

    wqkv = jnp.concatenate(
        [params["wq_t"] * scale, params["wk_t"], params["wv_t"]], axis=1
    ).astype(jnp.bfloat16)                                                  # (C, 3C)
    bqkv = jnp.concatenate(
        [params["bq"] * scale, params["bk"], params["bv"]]
    ).reshape(1, 3 * C).astype(jnp.float32)                                 # (1, 3C)
    wo_hdc = params["wo_t"].reshape(h, d_head, C).astype(jnp.bfloat16)      # (H, D, C)
    bo = params["bo"].reshape(1, C).astype(jnp.float32)                     # (1, C)
    return dict(wqkv=wqkv, bqkv=bqkv, wo_hdc=wo_hdc, bo=bo)


def reference_forward(x, params, h):
    """Pure-JAX (f32) reference of the same math, for a correctness check."""
    B, N, C = x.shape
    d_k = C // h
    q = (x @ params["wq_t"] + params["bq"]).reshape(B, N, h, d_k).transpose(0, 2, 1, 3)
    k = (x @ params["wk_t"] + params["bk"]).reshape(B, N, h, d_k).transpose(0, 2, 3, 1)
    v = (x @ params["wv_t"] + params["bv"]).reshape(B, N, h, d_k).transpose(0, 2, 1, 3)
    att = jnp.einsum("bhqd,bhdk->bhqk", q, k) / math.sqrt(d_k)
    att = jax.nn.softmax(att, axis=-1)
    o = jnp.einsum("bhqk,bhkd->bhqd", att, v).transpose(0, 2, 1, 3).reshape(B, N, C)
    return o @ params["wo_t"] + params["bo"]


if __name__ == "__main__":
    # Shapes consistent with the module: d_model=32, h=4, tokens nx=64 (=8*8), batch=2
    B, NX, D_MODEL, H = 2, 64, 32, 4

    key = jax.random.PRNGKey(0)
    k_x, k_p = jax.random.split(key)
    x = jax.random.normal(k_x, (B, NX, D_MODEL), dtype=jnp.float32)
    params = init_params(k_p, D_MODEL)
    fused = fuse_params(params, H)  # one-time, load-time weight fusion

    out = self_attention_forward(x, fused, H)
    out = jax.block_until_ready(out)

    ref = reference_forward(x, params, H)
    assert out.shape == (B, NX, D_MODEL)
    # bf16 MXU operands (f32 accumulation) -> tiny deviation vs the f32 reference
    assert jnp.allclose(out, ref, atol=1e-5, rtol=1e-2), "mismatch vs pure-JAX reference"

    print("KERNEL_OK")
</pallas_src>

<mosaic_0001>
module attributes {stable_mosaic.version = 11 : i64} {
  func.func @_fused_self_attention_kernel(%arg0: memref<128x32xf32, #tpu.memory_space<vmem>>, %arg1: memref<32x96xbf16, #tpu.memory_space<vmem>>, %arg2: memref<1x96xf32, #tpu.memory_space<vmem>>, %arg3: memref<4x8x32xbf16, #tpu.memory_space<vmem>>, %arg4: memref<1x32xf32, #tpu.memory_space<vmem>>, %arg5: memref<128x32xf32, #tpu.memory_space<vmem>>) attributes {dimension_semantics = [], scalar_prefetch = 0 : i64, scratch_operands = 0 : i64, tpu.core_type = #tpu.core_type<tc>} {
    %c0 = arith.constant 0 : index
    %c0_0 = arith.constant 0 : index
    %0 = vector.load %arg0[%c0, %c0_0] : memref<128x32xf32, #tpu.memory_space<vmem>>, vector<128x32xf32>
    %1 = arith.truncf %0 : vector<128x32xf32> to vector<128x32xbf16>
    %c0_1 = arith.constant 0 : index
    %c0_2 = arith.constant 0 : index
    %2 = vector.load %arg1[%c0_1, %c0_2] : memref<32x96xbf16, #tpu.memory_space<vmem>>, vector<32x96xbf16>
    %cst = arith.constant dense<0.000000e+00> : vector<128x96xf32>
    %3 = tpu.matmul %1, %2, %cst {dimension_numbers = #tpu.dot_dimension_numbers<[1], [0], [0], [1], [0, 0, 1, 1], [], []>} : vector<128x32xbf16>, vector<32x96xbf16>, vector<128x96xf32> -> vector<128x96xf32>
    %c0_3 = arith.constant 0 : index
    %c0_4 = arith.constant 0 : index
    %4 = vector.load %arg2[%c0_3, %c0_4] : memref<1x96xf32, #tpu.memory_space<vmem>>, vector<1x96xf32>
    %5 = vector.broadcast %4 : vector<1x96xf32> to vector<128x96xf32>
    %6 = arith.addf %3, %5 : vector<128x96xf32>
    %7 = arith.truncf %6 : vector<128x96xf32> to vector<128x96xbf16>
    %cst_5 = arith.constant 0.000000e+00 : f32
    %8 = vector.broadcast %cst_5 : f32 to vector<64x32xf32>
    %cst_6 = arith.constant 0.000000e+00 : f32
    %9 = vector.broadcast %cst_6 : f32 to vector<64x32xf32>
    %10 = vector.extract_strided_slice %7 {offsets = [0, 0], sizes = [128, 8], strides = [1, 1]} : vector<128x96xbf16> to vector<128x8xbf16>
    %11 = vector.extract_strided_slice %7 {offsets = [0, 32], sizes = [128, 8], strides = [1, 1]} : vector<128x96xbf16> to vector<128x8xbf16>
    %12 = vector.extract_strided_slice %7 {offsets = [0, 64], sizes = [128, 8], strides = [1, 1]} : vector<128x96xbf16> to vector<128x8xbf16>
    %c0_7 = arith.constant 0 : index
    %c0_8 = arith.constant 0 : index
    %c0_9 = arith.constant 0 : index
    %13 = vector.load %arg3[%c0_7, %c0_8, %c0_9] : memref<4x8x32xbf16, #tpu.memory_space<vmem>>, vector<1x8x32xbf16>
    %14 = vector.shape_cast %13 : vector<1x8x32xbf16> to vector<8x32xbf16>
    %15 = vector.extract_strided_slice %10 {offsets = [0, 0], sizes = [64, 8], strides = [1, 1]} : vector<128x8xbf16> to vector<64x8xbf16>
    %16 = vector.extract_strided_slice %11 {offsets = [0, 0], sizes = [64, 8], strides = [1, 1]} : vector<128x8xbf16> to vector<64x8xbf16>
    %17 = vector.extract_strided_slice %12 {offsets = [0, 0], sizes = [64, 8], strides = [1, 1]} : vector<128x8xbf16> to vector<64x8xbf16>
    "tpu.trace_start"() <{level = 10 : i32, message = "qd,kd->qk"}> : () -> ()
    %cst_10 = arith.constant dense<0.000000e+00> : vector<64x64xf32>
    %18 = tpu.matmul %15, %16, %cst_10 {dimension_numbers = #tpu.dot_dimension_numbers<[1], [1], [0], [0], [0, 0, 1, 0], [], []>} : vector<64x8xbf16>, vector<64x8xbf16>, vector<64x64xf32> -> vector<64x64xf32>
    "tpu.trace_stop"() : () -> ()
    %cst_11 = arith.constant dense<0xFF800000> : vector<64xf32>
    %19 = vector.multi_reduction <maximumf>, %18, %cst_11 [1] : vector<64x64xf32> to vector<64xf32>
    %20 = vector.shape_cast %19 : vector<64xf32> to vector<64x1xf32>
    %21 = vector.broadcast %20 : vector<64x1xf32> to vector<64x64xf32>
    %22 = arith.subf %18, %21 : vector<64x64xf32>
    %23 = math.exp %22 : vector<64x64xf32>
    %cst_12 = arith.constant dense<0.000000e+00> : vector<64xf32>
    %24 = vector.multi_reduction <add>, %23, %cst_12 [1] : vector<64x64xf32> to vector<64xf32>
    %25 = vector.shape_cast %24 : vector<64xf32> to vector<64x1xf32>
    %26 = vector.broadcast %25 : vector<64x1xf32> to vector<64x64xf32>
    %27 = arith.divf %23, %26 : vector<64x64xf32>
    %28 = arith.truncf %27 : vector<64x64xf32> to vector<64x64xbf16>
    %cst_13 = arith.constant dense<0.000000e+00> : vector<64x8xf32>
    %29 = tpu.matmul %28, %17, %cst_13 {dimension_numbers = #tpu.dot_dimension_numbers<[1], [0], [0], [1], [0, 0, 1, 1], [], []>} : vector<64x64xbf16>, vector<64x8xbf16>, vector<64x8xf32> -> vector<64x8xf32>
    %30 = arith.truncf %29 : vector<64x8xf32> to vector<64x8xbf16>
    %cst_14 = arith.constant dense<0.000000e+00> : vector<64x32xf32>
    %31 = tpu.matmul %30, %14, %cst_14 {dimension_numbers = #tpu.dot_dimension_numbers<[1], [0], [0], [1], [0, 0, 1, 1], [], []>} : vector<64x8xbf16>, vector<8x32xbf16>, vector<64x32xf32> -> vector<64x32xf32>
    %32 = arith.addf %8, %31 : vector<64x32xf32>
    %33 = vector.extract_strided_slice %10 {offsets = [64, 0], sizes = [64, 8], strides = [1, 1]} : vector<128x8xbf16> to vector<64x8xbf16>
    %34 = vector.extract_strided_slice %11 {offsets = [64, 0], sizes = [64, 8], strides = [1, 1]} : vector<128x8xbf16> to vector<64x8xbf16>
    %35 = vector.extract_strided_slice %12 {offsets = [64, 0], sizes = [64, 8], strides = [1, 1]} : vector<128x8xbf16> to vector<64x8xbf16>
    "tpu.trace_start"() <{level = 10 : i32, message = "qd,kd->qk"}> : () -> ()
    %cst_15 = arith.constant dense<0.000000e+00> : vector<64x64xf32>
    %36 = tpu.matmul %33, %34, %cst_15 {dimension_numbers = #tpu.dot_dimension_numbers<[1], [1], [0], [0], [0, 0, 1, 0], [], []>} : vector<64x8xbf16>, vector<64x8xbf16>, vector<64x64xf32> -> vector<64x64xf32>
    "tpu.trace_stop"() : () -> ()
    %cst_16 = arith.constant dense<0xFF800000> : vector<64xf32>
    %37 = vector.multi_reduction <maximumf>, %36, %cst_16 [1] : vector<64x64xf32> to vector<64xf32>
    %38 = vector.shape_cast %37 : vector<64xf32> to vector<64x1xf32>
    %39 = vector.broadcast %38 : vector<64x1xf32> to vector<64x64xf32>
    %40 = arith.subf %36, %39 : vector<64x64xf32>
    %41 = math.exp %40 : vector<64x64xf32>
    %cst_17 = arith.constant dense<0.000000e+00> : vector<64xf32>
    %42 = vector.multi_reduction <add>, %41, %cst_17 [1] : vector<64x64xf32> to vector<64xf32>
    %43 = vector.shape_cast %42 : vector<64xf32> to vector<64x1xf32>
    %44 = vector.broadcast %43 : vector<64x1xf32> to vector<64x64xf32>
    %45 = arith.divf %41, %44 : vector<64x64xf32>
    %46 = arith.truncf %45 : vector<64x64xf32> to vector<64x64xbf16>
    %cst_18 = arith.constant dense<0.000000e+00> : vector<64x8xf32>
    %47 = tpu.matmul %46, %35, %cst_18 {dimension_numbers = #tpu.dot_dimension_numbers<[1], [0], [0], [1], [0, 0, 1, 1], [], []>} : vector<64x64xbf16>, vector<64x8xbf16>, vector<64x8xf32> -> vector<64x8xf32>
    %48 = arith.truncf %47 : vector<64x8xf32> to vector<64x8xbf16>
    %cst_19 = arith.constant dense<0.000000e+00> : vector<64x32xf32>
    %49 = tpu.matmul %48, %14, %cst_19 {dimension_numbers = #tpu.dot_dimension_numbers<[1], [0], [0], [1], [0, 0, 1, 1], [], []>} : vector<64x8xbf16>, vector<8x32xbf16>, vector<64x32xf32> -> vector<64x32xf32>
    %50 = arith.addf %9, %49 : vector<64x32xf32>
    %51 = vector.extract_strided_slice %7 {offsets = [0, 8], sizes = [128, 8], strides = [1, 1]} : vector<128x96xbf16> to vector<128x8xbf16>
    %52 = vector.extract_strided_slice %7 {offsets = [0, 40], sizes = [128, 8], strides = [1, 1]} : vector<128x96xbf16> to vector<128x8xbf16>
    %53 = vector.extract_strided_slice %7 {offsets = [0, 72], sizes = [128, 8], strides = [1, 1]} : vector<128x96xbf16> to vector<128x8xbf16>
    %c1 = arith.constant 1 : index
    %c0_20 = arith.constant 0 : index
    %c0_21 = arith.constant 0 : index
    %54 = vector.load %arg3[%c1, %c0_20, %c0_21] : memref<4x8x32xbf16, #tpu.memory_space<vmem>>, vector<1x8x32xbf16>
    %55 = vector.shape_cast %54 : vector<1x8x32xbf16> to vector<8x32xbf16>
    %56 = vector.extract_strided_slice %51 {offsets = [0, 0], sizes = [64, 8], strides = [1, 1]} : vector<128x8xbf16> to vector<64x8xbf16>
    %57 = vector.extract_strided_slice %52 {offsets = [0, 0], sizes = [64, 8], strides = [1, 1]} : vector<128x8xbf16> to vector<64x8xbf16>
    %58 = vector.extract_strided_slice %53 {offsets = [0, 0], sizes = [64, 8], strides = [1, 1]} : vector<128x8xbf16> to vector<64x8xbf16>
    "tpu.trace_start"() <{level = 10 : i32, message = "qd,kd->qk"}> : () -> ()
    %cst_22 = arith.constant dense<0.000000e+00> : vector<64x64xf32>
    %59 = tpu.matmul %56, %57, %cst_22 {dimension_numbers = #tpu.dot_dimension_numbers<[1], [1], [0], [0], [0, 0, 1, 0], [], []>} : vector<64x8xbf16>, vector<64x8xbf16>, vector<64x64xf32> -> vector<64x64xf32>
    "tpu.trace_stop"() : () -> ()
    %cst_23 = arith.constant dense<0xFF800000> : vector<64xf32>
    %60 = vector.multi_reduction <maximumf>, %59, %cst_23 [1] : vector<64x64xf32> to vector<64xf32>
    %61 = vector.shape_cast %60 : vector<64xf32> to vector<64x1xf32>
    %62 = vector.broadcast %61 : vector<64x1xf32> to vector<64x64xf32>
    %63 = arith.subf %59, %62 : vector<64x64xf32>
    %64 = math.exp %63 : vector<64x64xf32>
    %cst_24 = arith.constant dense<0.000000e+00> : vector<64xf32>
    %65 = vector.multi_reduction <add>, %64, %cst_24 [1] : vector<64x64xf32> to vector<64xf32>
    %66 = vector.shape_cast %65 : vector<64xf32> to vector<64x1xf32>
    %67 = vector.broadcast %66 : vector<64x1xf32> to vector<64x64xf32>
    %68 = arith.divf %64, %67 : vector<64x64xf32>
    %69 = arith.truncf %68 : vector<64x64xf32> to vector<64x64xbf16>
    %cst_25 = arith.constant dense<0.000000e+00> : vector<64x8xf32>
    %70 = tpu.matmul %69, %58, %cst_25 {dimension_numbers = #tpu.dot_dimension_numbers<[1], [0], [0], [1], [0, 0, 1, 1], [], []>} : vector<64x64xbf16>, vector<64x8xbf16>, vector<64x8xf32> -> vector<64x8xf32>
    %71 = arith.truncf %70 : vector<64x8xf32> to vector<64x8xbf16>
    %cst_26 = arith.constant dense<0.000000e+00> : vector<64x32xf32>
    %72 = tpu.matmul %71, %55, %cst_26 {dimension_numbers = #tpu.dot_dimension_numbers<[1], [0], [0], [1], [0, 0, 1, 1], [], []>} : vector<64x8xbf16>, vector<8x32xbf16>, vector<64x32xf32> -> vector<64x32xf32>
    %73 = arith.addf %32, %72 : vector<64x32xf32>
    %74 = vector.extract_strided_slice %51 {offsets = [64, 0], sizes = [64, 8], strides = [1, 1]} : vector<128x8xbf16> to vector<64x8xbf16>
    %75 = vector.extract_strided_slice %52 {offsets = [64, 0], sizes = [64, 8], strides = [1, 1]} : vector<128x8xbf16> to vector<64x8xbf16>
    %76 = vector.extract_strided_slice %53 {offsets = [64, 0], sizes = [64, 8], strides = [1, 1]} : vector<128x8xbf16> to vector<64x8xbf16>
    "tpu.trace_start"() <{level = 10 : i32, message = "qd,kd->qk"}> : () -> ()
    %cst_27 = arith.constant dense<0.000000e+00> : vector<64x64xf32>
    %77 = tpu.matmul %74, %75, %cst_27 {dimension_numbers = #tpu.dot_dimension_numbers<[1], [1], [0], [0], [0, 0, 1, 0], [], []>} : vector<64x8xbf16>, vector<64x8xbf16>, vector<64x64xf32> -> vector<64x64xf32>
    "tpu.trace_stop"() : () -> ()
    %cst_28 = arith.constant dense<0xFF800000> : vector<64xf32>
    %78 = vector.multi_reduction <maximumf>, %77, %cst_28 [1] : vector<64x64xf32> to vector<64xf32>
    %79 = vector.shape_cast %78 : vector<64xf32> to vector<64x1xf32>
    %80 = vector.broadcast %79 : vector<64x1xf32> to vector<64x64xf32>
    %81 = arith.subf %77, %80 : vector<64x64xf32>
    %82 = math.exp %81 : vector<64x64xf32>
    %cst_29 = arith.constant dense<0.000000e+00> : vector<64xf32>
    %83 = vector.multi_reduction <add>, %82, %cst_29 [1] : vector<64x64xf32> to vector<64xf32>
    %84 = vector.shape_cast %83 : vector<64xf32> to vector<64x1xf32>
    %85 = vector.broadcast %84 : vector<64x1xf32> to vector<64x64xf32>
    %86 = arith.divf %82, %85 : vector<64x64xf32>
    %87 = arith.truncf %86 : vector<64x64xf32> to vector<64x64xbf16>
    %cst_30 = arith.constant dense<0.000000e+00> : vector<64x8xf32>
    %88 = tpu.matmul %87, %76, %cst_30 {dimension_numbers = #tpu.dot_dimension_numbers<[1], [0], [0], [1], [0, 0, 1, 1], [], []>} : vector<64x64xbf16>, vector<64x8xbf16>, vector<64x8xf32> -> vector<64x8xf32>
    %89 = arith.truncf %88 : vector<64x8xf32> to vector<64x8xbf16>
    %cst_31 = arith.constant dense<0.000000e+00> : vector<64x32xf32>
    %90 = tpu.matmul %89, %55, %cst_31 {dimension_numbers = #tpu.dot_dimension_numbers<[1], [0], [0], [1], [0, 0, 1, 1], [], []>} : vector<64x8xbf16>, vector<8x32xbf16>, vector<64x32xf32> -> vector<64x32xf32>
    %91 = arith.addf %50, %90 : vector<64x32xf32>
    %92 = vector.extract_strided_slice %7 {offsets = [0, 16], sizes = [128, 8], strides = [1, 1]} : vector<128x96xbf16> to vector<128x8xbf16>
    %93 = vector.extract_strided_slice %7 {offsets = [0, 48], sizes = [128, 8], strides = [1, 1]} : vector<128x96xbf16> to vector<128x8xbf16>
    %94 = vector.extract_strided_slice %7 {offsets = [0, 80], sizes = [128, 8], strides = [1, 1]} : vector<128x96xbf16> to vector<128x8xbf16>
    %c2 = arith.constant 2 : index
    %c0_32 = arith.constant 0 : index
    %c0_33 = arith.constant 0 : index
    %95 = vector.load %arg3[%c2, %c0_32, %c0_33] : memref<4x8x32xbf16, #tpu.memory_space<vmem>>, vector<1x8x32xbf16>
    %96 = vector.shape_cast %95 : vector<1x8x32xbf16> to vector<8x32xbf16>
    %97 = vector.extract_strided_slice %92 {offsets = [0, 0], sizes = [64, 8], strides = [1, 1]} : vector<128x8xbf16> to vector<64x8xbf16>
    %98 = vector.extract_strided_slice %93 {offsets = [0, 0], sizes = [64, 8], strides = [1, 1]} : vector<128x8xbf16> to vector<64x8xbf16>
    %99 = vector.extract_strided_slice %94 {offsets = [0, 0], sizes = [64, 8], strides = [1, 1]} : vector<128x8xbf16> to vector<64x8xbf16>
    "tpu.trace_start"() <{level = 10 : i32, message = "qd,kd->qk"}> : () -> ()
    %cst_34 = arith.constant dense<0.000000e+00> : vector<64x64xf32>
    %100 = tpu.matmul %97, %98, %cst_34 {dimension_numbers = #tpu.dot_dimension_numbers<[1], [1], [0], [0], [0, 0, 1, 0], [], []>} : vector<64x8xbf16>, vector<64x8xbf16>, vector<64x64xf32> -> vector<64x64xf32>
    "tpu.trace_stop"() : () -> ()
    %cst_35 = arith.constant dense<0xFF800000> : vector<64xf32>
    %101 = vector.multi_reduction <maximumf>, %100, %cst_35 [1] : vector<64x64xf32> to vector<64xf32>
    %102 = vector.shape_cast %101 : vector<64xf32> to vector<64x1xf32>
    %103 = vector.broadcast %102 : vector<64x1xf32> to vector<64x64xf32>
    %104 = arith.subf %100, %103 : vector<64x64xf32>
    %105 = math.exp %104 : vector<64x64xf32>
    %cst_36 = arith.constant dense<0.000000e+00> : vector<64xf32>
    %106 = vector.multi_reduction <add>, %105, %cst_36 [1] : vector<64x64xf32> to vector<64xf32>
    %107 = vector.shape_cast %106 : vector<64xf32> to vector<64x1xf32>
    %108 = vector.broadcast %107 : vector<64x1xf32> to vector<64x64xf32>
    %109 = arith.divf %105, %108 : vector<64x64xf32>
    %110 = arith.truncf %109 : vector<64x64xf32> to vector<64x64xbf16>
    %cst_37 = arith.constant dense<0.000000e+00> : vector<64x8xf32>
    %111 = tpu.matmul %110, %99, %cst_37 {dimension_numbers = #tpu.dot_dimension_numbers<[1], [0], [0], [1], [0, 0, 1, 1], [], []>} : vector<64x64xbf16>, vector<64x8xbf16>, vector<64x8xf32> -> vector<64x8xf32>
    %112 = arith.truncf %111 : vector<64x8xf32> to vector<64x8xbf16>
    %cst_38 = arith.constant dense<0.000000e+00> : vector<64x32xf32>
    %113 = tpu.matmul %112, %96, %cst_38 {dimension_numbers = #tpu.dot_dimension_numbers<[1], [0], [0], [1], [0, 0, 1, 1], [], []>} : vector<64x8xbf16>, vector<8x32xbf16>, vector<64x32xf32> -> vector<64x32xf32>
    %114 = arith.addf %73, %113 : vector<64x32xf32>
    %115 = vector.extract_strided_slice %92 {offsets = [64, 0], sizes = [64, 8], strides = [1, 1]} : vector<128x8xbf16> to vector<64x8xbf16>
    %116 = vector.extract_strided_slice %93 {offsets = [64, 0], sizes = [64, 8], strides = [1, 1]} : vector<128x8xbf16> to vector<64x8xbf16>
    %117 = vector.extract_strided_slice %94 {offsets = [64, 0], sizes = [64, 8], strides = [1, 1]} : vector<128x8xbf16> to vector<64x8xbf16>
    "tpu.trace_start"() <{level = 10 : i32, message = "qd,kd->qk"}> : () -> ()
    %cst_39 = arith.constant dense<0.000000e+00> : vector<64x64xf32>
    %118 = tpu.matmul %115, %116, %cst_39 {dimension_numbers = #tpu.dot_dimension_numbers<[1], [1], [0], [0], [0, 0, 1, 0], [], []>} : vector<64x8xbf16>, vector<64x8xbf16>, vector<64x64xf32> -> vector<64x64xf32>
    "tpu.trace_stop"() : () -> ()
    %cst_40 = arith.constant dense<0xFF800000> : vector<64xf32>
    %119 = vector.multi_reduction <maximumf>, %118, %cst_40 [1] : vector<64x64xf32> to vector<64xf32>
    %120 = vector.shape_cast %119 : vector<64xf32> to vector<64x1xf32>
    %121 = vector.broadcast %120 : vector<64x1xf32> to vector<64x64xf32>
    %122 = arith.subf %118, %121 : vector<64x64xf32>
    %123 = math.exp %122 : vector<64x64xf32>
    %cst_41 = arith.constant dense<0.000000e+00> : vector<64xf32>
    %124 = vector.multi_reduction <add>, %123, %cst_41 [1] : vector<64x64xf32> to vector<64xf32>
    %125 = vector.shape_cast %124 : vector<64xf32> to vector<64x1xf32>
    %126 = vector.broadcast %125 : vector<64x1xf32> to vector<64x64xf32>
    %127 = arith.divf %123, %126 : vector<64x64xf32>
    %128 = arith.truncf %127 : vector<64x64xf32> to vector<64x64xbf16>
    %cst_42 = arith.constant dense<0.000000e+00> : vector<64x8xf32>
    %129 = tpu.matmul %128, %117, %cst_42 {dimension_numbers = #tpu.dot_dimension_numbers<[1], [0], [0], [1], [0, 0, 1, 1], [], []>} : vector<64x64xbf16>, vector<64x8xbf16>, vector<64x8xf32> -> vector<64x8xf32>
    %130 = arith.truncf %129 : vector<64x8xf32> to vector<64x8xbf16>
    %cst_43 = arith.constant dense<0.000000e+00> : vector<64x32xf32>
    %131 = tpu.matmul %130, %96, %cst_43 {dimension_numbers = #tpu.dot_dimension_numbers<[1], [0], [0], [1], [0, 0, 1, 1], [], []>} : vector<64x8xbf16>, vector<8x32xbf16>, vector<64x32xf32> -> vector<64x32xf32>
    %132 = arith.addf %91, %131 : vector<64x32xf32>
    %133 = vector.extract_strided_slice %7 {offsets = [0, 24], sizes = [128, 8], strides = [1, 1]} : vector<128x96xbf16> to vector<128x8xbf16>
    %134 = vector.extract_strided_slice %7 {offsets = [0, 56], sizes = [128, 8], strides = [1, 1]} : vector<128x96xbf16> to vector<128x8xbf16>
    %135 = vector.extract_strided_slice %7 {offsets = [0, 88], sizes = [128, 8], strides = [1, 1]} : vector<128x96xbf16> to vector<128x8xbf16>
    %c3 = arith.constant 3 : index
    %c0_44 = arith.constant 0 : index
    %c0_45 = arith.constant 0 : index
    %136 = vector.load %arg3[%c3, %c0_44, %c0_45] : memref<4x8x32xbf16, #tpu.memory_space<vmem>>, vector<1x8x32xbf16>
    %137 = vector.shape_cast %136 : vector<1x8x32xbf16> to vector<8x32xbf16>
    %138 = vector.extract_strided_slice %133 {offsets = [0, 0], sizes = [64, 8], strides = [1, 1]} : vector<128x8xbf16> to vector<64x8xbf16>
    %139 = vector.extract_strided_slice %134 {offsets = [0, 0], sizes = [64, 8], strides = [1, 1]} : vector<128x8xbf16> to vector<64x8xbf16>
    %140 = vector.extract_strided_slice %135 {offsets = [0, 0], sizes = [64, 8], strides = [1, 1]} : vector<128x8xbf16> to vector<64x8xbf16>
    "tpu.trace_start"() <{level = 10 : i32, message = "qd,kd->qk"}> : () -> ()
    %cst_46 = arith.constant dense<0.000000e+00> : vector<64x64xf32>
    %141 = tpu.matmul %138, %139, %cst_46 {dimension_numbers = #tpu.dot_dimension_numbers<[1], [1], [0], [0], [0, 0, 1, 0], [], []>} : vector<64x8xbf16>, vector<64x8xbf16>, vector<64x64xf32> -> vector<64x64xf32>
    "tpu.trace_stop"() : () -> ()
    %cst_47 = arith.constant dense<0xFF800000> : vector<64xf32>
    %142 = vector.multi_reduction <maximumf>, %141, %cst_47 [1] : vector<64x64xf32> to vector<64xf32>
    %143 = vector.shape_cast %142 : vector<64xf32> to vector<64x1xf32>
    %144 = vector.broadcast %143 : vector<64x1xf32> to vector<64x64xf32>
    %145 = arith.subf %141, %144 : vector<64x64xf32>
    %146 = math.exp %145 : vector<64x64xf32>
    %cst_48 = arith.constant dense<0.000000e+00> : vector<64xf32>
    %147 = vector.multi_reduction <add>, %146, %cst_48 [1] : vector<64x64xf32> to vector<64xf32>
    %148 = vector.shape_cast %147 : vector<64xf32> to vector<64x1xf32>
    %149 = vector.broadcast %148 : vector<64x1xf32> to vector<64x64xf32>
    %150 = arith.divf %146, %149 : vector<64x64xf32>
    %151 = arith.truncf %150 : vector<64x64xf32> to vector<64x64xbf16>
    %cst_49 = arith.constant dense<0.000000e+00> : vector<64x8xf32>
    %152 = tpu.matmul %151, %140, %cst_49 {dimension_numbers = #tpu.dot_dimension_numbers<[1], [0], [0], [1], [0, 0, 1, 1], [], []>} : vector<64x64xbf16>, vector<64x8xbf16>, vector<64x8xf32> -> vector<64x8xf32>
    %153 = arith.truncf %152 : vector<64x8xf32> to vector<64x8xbf16>
    %cst_50 = arith.constant dense<0.000000e+00> : vector<64x32xf32>
    %154 = tpu.matmul %153, %137, %cst_50 {dimension_numbers = #tpu.dot_dimension_numbers<[1], [0], [0], [1], [0, 0, 1, 1], [], []>} : vector<64x8xbf16>, vector<8x32xbf16>, vector<64x32xf32> -> vector<64x32xf32>
    %155 = arith.addf %114, %154 : vector<64x32xf32>
    %156 = vector.extract_strided_slice %133 {offsets = [64, 0], sizes = [64, 8], strides = [1, 1]} : vector<128x8xbf16> to vector<64x8xbf16>
    %157 = vector.extract_strided_slice %134 {offsets = [64, 0], sizes = [64, 8], strides = [1, 1]} : vector<128x8xbf16> to vector<64x8xbf16>
    %158 = vector.extract_strided_slice %135 {offsets = [64, 0], sizes = [64, 8], strides = [1, 1]} : vector<128x8xbf16> to vector<64x8xbf16>
    "tpu.trace_start"() <{level = 10 : i32, message = "qd,kd->qk"}> : () -> ()
    %cst_51 = arith.constant dense<0.000000e+00> : vector<64x64xf32>
    %159 = tpu.matmul %156, %157, %cst_51 {dimension_numbers = #tpu.dot_dimension_numbers<[1], [1], [0], [0], [0, 0, 1, 0], [], []>} : vector<64x8xbf16>, vector<64x8xbf16>, vector<64x64xf32> -> vector<64x64xf32>
    "tpu.trace_stop"() : () -> ()
    %cst_52 = arith.constant dense<0xFF800000> : vector<64xf32>
    %160 = vector.multi_reduction <maximumf>, %159, %cst_52 [1] : vector<64x64xf32> to vector<64xf32>
    %161 = vector.shape_cast %160 : vector<64xf32> to vector<64x1xf32>
    %162 = vector.broadcast %161 : vector<64x1xf32> to vector<64x64xf32>
    %163 = arith.subf %159, %162 : vector<64x64xf32>
    %164 = math.exp %163 : vector<64x64xf32>
    %cst_53 = arith.constant dense<0.000000e+00> : vector<64xf32>
    %165 = vector.multi_reduction <add>, %164, %cst_53 [1] : vector<64x64xf32> to vector<64xf32>
    %166 = vector.shape_cast %165 : vector<64xf32> to vector<64x1xf32>
    %167 = vector.broadcast %166 : vector<64x1xf32> to vector<64x64xf32>
    %168 = arith.divf %164, %167 : vector<64x64xf32>
    %169 = arith.truncf %168 : vector<64x64xf32> to vector<64x64xbf16>
    %cst_54 = arith.constant dense<0.000000e+00> : vector<64x8xf32>
    %170 = tpu.matmul %169, %158, %cst_54 {dimension_numbers = #tpu.dot_dimension_numbers<[1], [0], [0], [1], [0, 0, 1, 1], [], []>} : vector<64x64xbf16>, vector<64x8xbf16>, vector<64x8xf32> -> vector<64x8xf32>
    %171 = arith.truncf %170 : vector<64x8xf32> to vector<64x8xbf16>
    %cst_55 = arith.constant dense<0.000000e+00> : vector<64x32xf32>
    %172 = tpu.matmul %171, %137, %cst_55 {dimension_numbers = #tpu.dot_dimension_numbers<[1], [0], [0], [1], [0, 0, 1, 1], [], []>} : vector<64x8xbf16>, vector<8x32xbf16>, vector<64x32xf32> -> vector<64x32xf32>
    %173 = arith.addf %132, %172 : vector<64x32xf32>
    %c0_56 = arith.constant 0 : index
    %c0_57 = arith.constant 0 : index
    %174 = vector.load %arg4[%c0_56, %c0_57] : memref<1x32xf32, #tpu.memory_space<vmem>>, vector<1x32xf32>
    %175 = vector.broadcast %174 : vector<1x32xf32> to vector<64x32xf32>
    %176 = arith.addf %155, %175 : vector<64x32xf32>
    %c0_58 = arith.constant 0 : index
    %c0_59 = arith.constant 0 : index
    %177 = vector.load %arg5[%c0_58, %c0_59] : memref<128x32xf32, #tpu.memory_space<vmem>>, vector<64x32xf32>
    tpu.vector_store %arg5[%c0_58, %c0_59], %176 {strides = array<i32>} : memref<128x32xf32, #tpu.memory_space<vmem>>, vector<64x32xf32>,
    %c0_60 = arith.constant 0 : index
    %c0_61 = arith.constant 0 : index
    %178 = vector.load %arg4[%c0_60, %c0_61] : memref<1x32xf32, #tpu.memory_space<vmem>>, vector<1x32xf32>
    %179 = vector.broadcast %178 : vector<1x32xf32> to vector<64x32xf32>
    %180 = arith.addf %173, %179 : vector<64x32xf32>
    %c64 = arith.constant 64 : index
    %c0_62 = arith.constant 0 : index
    %181 = vector.load %arg5[%c64, %c0_62] : memref<128x32xf32, #tpu.memory_space<vmem>>, vector<64x32xf32>
    tpu.vector_store %arg5[%c64, %c0_62], %180 {strides = array<i32>} : memref<128x32xf32, #tpu.memory_space<vmem>>, vector<64x32xf32>,
    return
  }
}

</mosaic_0001>

<llo_original>
// kernel: tpu_custom_call.1
$region0: #{tpu_custom_call.1}
  #allocation0 [shape = 'u32[]', space=smem, size = 0x4, offset = 0x4, fixed_abs, tag = 'smem constant byte address 0x4 - core index']
  #allocation1 [shape = 'u32[144,128]{1,0:T(1,128)}', space=vmem, size = 0x12000, scoped, tag = 'internal scratch']
  %s0 = inlined_call_operand.vmem [shape: f32[128,32], index: 0, kind: input, shape index: {}]
  %s1 = inlined_call_operand.vmem [shape: bf16[32,96], index: 1, kind: input, shape index: {}]
  %s2 = inlined_call_operand.vmem [shape: f32[1,96], index: 2, kind: input, shape index: {}]
  %s3 = inlined_call_operand.vmem [shape: bf16[4,8,32], index: 3, kind: input, shape index: {}]
  %s4 = inlined_call_operand.vmem [shape: f32[1,32], index: 4, kind: input, shape index: {}]
  %s5 = inlined_call_operand.vmem [shape: f32[128,32], index: 5, kind: output, shape index: {}]
  %s6 = sld [smem:[#allocation0]]
  $region30: #{tpu_custom_call.1} parent=0
    _
  %s8 = ssub.s32 1, %s6
  %s9 = scalar_select 0, %s8, %s6
  // Predicated region
  $region2: #{tpu_custom_call.1} parent=0 // pred_check
    _
  $region3: #{tpu_custom_call.1} parent=0 // pred_check_branch
    %11 = sbr.rel (0) target = $region5
  $region4: #{tpu_custom_call.1} parent=0 // pred_region
    _
  $region5: #{tpu_custom_call.1} parent=0 // pred_fallthru
    _
  // Predicated region
  $region6: #{tpu_custom_call.1} parent=0 // pred_check
    _
  $region7: #{tpu_custom_call.1} parent=0 // pred_check_branch
    %13 = sbr.rel (0) target = $region9
  $region8: #{tpu_custom_call.1} parent=0 // pred_region
    _
  $region9: #{tpu_custom_call.1} parent=0 // pred_fallthru
    _
  // Predicated region
  $region10: #{tpu_custom_call.1} parent=0 // pred_check
    _
  $region11: #{tpu_custom_call.1} parent=0 // pred_check_branch
    %15 = sbr.rel (0) target = $region13
  $region12: #{tpu_custom_call.1} parent=0 // pred_region
    _
  $region13: #{tpu_custom_call.1} parent=0 // pred_fallthru
    _
  // Predicated region
  $region14: #{tpu_custom_call.1} parent=0 // pred_check
    _
  $region15: #{tpu_custom_call.1} parent=0 // pred_check_branch
    %17 = sbr.rel (0) target = $region17
  $region16: #{tpu_custom_call.1} parent=0 // pred_region
    _
  $region17: #{tpu_custom_call.1} parent=0 // pred_fallthru
    _
  // Predicated region
  $region18: #{tpu_custom_call.1} parent=0 // pred_check
    _
  $region19: #{tpu_custom_call.1} parent=0 // pred_check_branch
    %19 = sbr.rel (0) target = $region21
  $region20: #{tpu_custom_call.1} parent=0 // pred_region
    _
  $region21: #{tpu_custom_call.1} parent=0 // pred_fallthru
    _
  %v21 = vld [vmem:[%s0] sm:$0xff]
  %v22 = vld [vmem:[%s0 + $0x8] sm:$0xff]
  %v23 = vld [vmem:[%s0 + $0x10] sm:$0xff]
  %v24 = vld [vmem:[%s0 + $0x18] sm:$0xff]
  %v25 = vld [vmem:[%s0 + $0x20] sm:$0xff]
  %v26 = vld [vmem:[%s0 + $0x28] sm:$0xff]
  %v27 = vld [vmem:[%s0 + $0x30] sm:$0xff]
  %v28 = vld [vmem:[%s0 + $0x38] sm:$0xff]
  %v29 = vld [vmem:[%s0 + $0x40] sm:$0xff]
  %v30 = vld [vmem:[%s0 + $0x48] sm:$0xff]
  %v31 = vld [vmem:[%s0 + $0x50] sm:$0xff]
  %v32 = vld [vmem:[%s0 + $0x58] sm:$0xff]
  %v33 = vld [vmem:[%s0 + $0x60] sm:$0xff]
  %v34 = vld [vmem:[%s0 + $0x68] sm:$0xff]
  %v35 = vld [vmem:[%s0 + $0x70] sm:$0xff]
  %v36 = vld [vmem:[%s0 + $0x78] sm:$0xff]
  %v37 = vpack.c.bf16 %v22, %v21
  %v38 = vpack.c.bf16 %v24, %v23
  %v39 = vpack.c.bf16 %v26, %v25
  %v40 = vpack.c.bf16 %v28, %v27
  %v41 = vpack.c.bf16 %v30, %v29
  %v42 = vpack.c.bf16 %v32, %v31
  %v43 = vpack.c.bf16 %v34, %v33
  %v44 = vpack.c.bf16 %v36, %v35
  %v45 = vld [vmem:[%s1] sm:$0xf]
  %v46 = vld [vmem:[%s1 + $0x4] sm:$0xf]
  %v47 = vld [vmem:[%s1 + $0x8] sm:$0xf]
  %v48 = vld [vmem:[%s1 + $0xc] sm:$0xf]
  %v49 = vld [vmem:[%s2] sm:$0x1]
  %v51 = vlaneseq
  %v52 = vshrl.u32 %v51, 7
  %v53 = vsub.s32 0, %v52
  %v54 = vrot.slane %v49, %v53
  %v60 = vunpack.c.l.b16 %v45
  %v61 = vunpack.c.l.b16 %v46
  %v62 = vunpack.c.l.b16 %v47
  %v63 = vunpack.c.l.b16 %v48
  %v64 = vpack.c.b16 %v61, %v60
  %v65 = vpack.c.b16 %v63, %v62
  %vm68 = vcmask 261120
  %v70 = vsel %vm68, %v37, 0
  %v73 = vsel %vm68, %v38, 0
  %v76 = vsel %vm68, %v39, 0
  %v79 = vsel %vm68, %v40, 0
  %v82 = vsel %vm68, %v41, 0
  %v85 = vsel %vm68, %v42, 0
  %v88 = vsel %vm68, %v43, 0
  %v91 = vsel %vm68, %v44, 0
  %93 = vmatprep.subr.bf16.mxu0 0
  %94 = vmatpush1.bf16.msra.mxu0 0
  %95 = vmatprep.subr.bf16.mxu0 0
  %96 = vmatpush1.bf16.msra.mxu0 0
  %97 = vmatprep.subr.bf16.mxu0 0
  %98 = vmatpush1.bf16.msra.mxu0 0
  %99 = vmatprep.subr.bf16.mxu0 0
  %100 = vmatpush1.bf16.msra.mxu0 0
  %101 = vmatprep.subr.bf16.mxu0 0
  %102 = vmatpush1.bf16.msra.mxu0 0
  %103 = vmatprep.subr.bf16.mxu0 0
  %104 = vmatpush1.bf16.msra.mxu0 0
  %105 = vmatprep.subr.bf16.mxu0 0
  %106 = vmatpush1.bf16.msra.mxu0 %v65
  %107 = vmatprep.subr.bf16.mxu0 0
  %108 = vmatpush1.bf16.msra.mxu0 %v64
  %109 = vmatprep.subr.bf16.mxu0 0
  %110 = vmatpush2.bf16.msra.mxu0 0
  %111 = vmatprep.subr.bf16.mxu0 0
  %112 = vmatpush2.bf16.msra.mxu0 0
  %113 = vmatprep.subr.bf16.mxu0 0
  %114 = vmatpush2.bf16.msra.mxu0 0
  %115 = vmatprep.subr.bf16.mxu0 0
  %116 = vmatpush2.bf16.msra.mxu0 0
  %117 = vmatprep.subr.bf16.mxu0 0
  %118 = vmatpush2.bf16.msra.mxu0 0
  %119 = vmatprep.subr.bf16.mxu0 0
  %120 = vmatpush2.bf16.msra.mxu0 0
  %121 = vmatprep.subr.bf16.mxu0 0
  %122 = vmatpush2.bf16.msra.mxu0 0
  %123 = vmatprep.subr.bf16.mxu0 0
  %124 = vmatpush2.bf16.msra.mxu0 0
  %125 = vmatprep.mubr.bf16.mxu0 0
  %126 = vmatmul.mubr.bf16.gmra.mxu0 %v70
  %v127 = vpop.f32.mrf.mxu0
  %v128 = vadd.f32 %v54, %v127
  %v129 = vpop.f32.mrf.mxu0
  %v130 = vpop.f32.mrf.mxu0
  %v131 = vadd.f32 %v54, %v130
  %v132 = vpop.f32.mrf.mxu0
  %133 = vmatprep.mubr.bf16.mxu0 0
  %134 = vmatmul.mubr.bf16.gmra.mxu0 %v73
  %v135 = vpop.f32.mrf.mxu0
  %v136 = vadd.f32 %v54, %v135
  %v137 = vpop.f32.mrf.mxu0
  %v138 = vpop.f32.mrf.mxu0
  %v139 = vadd.f32 %v54, %v138
  %v140 = vpop.f32.mrf.mxu0
  %141 = vmatprep.mubr.bf16.mxu0 0
  %142 = vmatmul.mubr.bf16.gmra.mxu0 %v76
  %v143 = vpop.f32.mrf.mxu0
  %v144 = vadd.f32 %v54, %v143
  %v145 = vpop.f32.mrf.mxu0
  %v146 = vpop.f32.mrf.mxu0
  %v147 = vadd.f32 %v54, %v146
  %v148 = vpop.f32.mrf.mxu0
  %149 = vmatprep.mubr.bf16.mxu0 0
  %150 = vmatmul.mubr.bf16.gmra.mxu0 %v79
  %v151 = vpop.f32.mrf.mxu0
  %v152 = vadd.f32 %v54, %v151
  %v153 = vpop.f32.mrf.mxu0
  %v154 = vpop.f32.mrf.mxu0
  %v155 = vadd.f32 %v54, %v154
  %v156 = vpop.f32.mrf.mxu0
  %157 = vmatprep.mubr.bf16.mxu0 0
  %158 = vmatmul.mubr.bf16.gmra.mxu0 %v82
  %v159 = vpop.f32.mrf.mxu0
  %v160 = vadd.f32 %v54, %v159
  %v161 = vpop.f32.mrf.mxu0
  %v162 = vpop.f32.mrf.mxu0
  %v163 = vadd.f32 %v54, %v162
  %v164 = vpop.f32.mrf.mxu0
  %165 = vmatprep.mubr.bf16.mxu0 0
  %166 = vmatmul.mubr.bf16.gmra.mxu0 %v85
  %v167 = vpop.f32.mrf.mxu0
  %v168 = vadd.f32 %v54, %v167
  %v169 = vpop.f32.mrf.mxu0
  %v170 = vpop.f32.mrf.mxu0
  %v171 = vadd.f32 %v54, %v170
  %v172 = vpop.f32.mrf.mxu0
  %173 = vmatprep.mubr.bf16.mxu0 0
  %174 = vmatmul.mubr.bf16.gmra.mxu0 %v88
  %v175 = vpop.f32.mrf.mxu0
  %v176 = vadd.f32 %v54, %v175
  %v177 = vpop.f32.mrf.mxu0
  %v178 = vpop.f32.mrf.mxu0
  %v179 = vadd.f32 %v54, %v178
  %v180 = vpop.f32.mrf.mxu0
  %181 = vmatprep.mubr.bf16.mxu0 0
  %182 = vmatmul.mubr.bf16.gmra.mxu0 %v91
  %v183 = vpop.f32.mrf.mxu0
  %v184 = vadd.f32 %v54, %v183
  %v185 = vpop.f32.mrf.mxu0
  %v186 = vpop.f32.mrf.mxu0
  %v187 = vadd.f32 %v54, %v186
  %v188 = vpop.f32.mrf.mxu0
  %189 = vdwg.mxu0
  %v190 = vpack.c.bf16 %v131, %v128
  %v191 = vpack.c.bf16 %v139, %v136
  %v192 = vpack.c.bf16 %v147, %v144
  %v193 = vpack.c.bf16 %v155, %v152
  %v194 = vpack.c.bf16 %v163, %v160
  %v195 = vpack.c.bf16 %v171, %v168
  %v196 = vpack.c.bf16 %v179, %v176
  %v197 = vpack.c.bf16 %v187, %v184
  %v198 = vld [vmem:[%s3] sm:$0xf]
  %203 = vrot.lane.b32.xlu0 %v190, 96
  %v204 = vpop.permute.xlu0 %203
  %205 = vrot.lane.b32.xlu0 %v191, 96
  %v206 = vpop.permute.xlu0 %205
  %207 = vrot.lane.b32.xlu0 %v192, 96
  %v208 = vpop.permute.xlu0 %207
  %209 = vrot.lane.b32.xlu0 %v193, 96
  %v210 = vpop.permute.xlu0 %209
  %vm211 = vcmask 64512
  %v213 = vsel %vm211, %v190, 0
  %v216 = vsel %vm211, %v191, 0
  %v219 = vsel %vm211, %v192, 0
  %v222 = vsel %vm211, %v193, 0
  %v225 = vsel %vm211, %v204, 0
  %v228 = vsel %vm211, %v206, 0
  %v231 = vsel %vm211, %v208, 0
  %v234 = vsel %vm211, %v210, 0
  %236 = vmatprep.subr.bf16.mxu0 0
  %237 = vmatpush1.bf16.xpose.msra.mxu0 0
  %238 = vmatprep.subr.bf16.mxu0 0
  %239 = vmatpush1.bf16.xpose.msra.mxu0 0
  %240 = vmatprep.subr.bf16.mxu0 0
  %241 = vmatpush1.bf16.xpose.msra.mxu0 0
  %242 = vmatprep.subr.bf16.mxu0 0
  %243 = vmatpush1.bf16.xpose.msra.mxu0 0
  %244 = vmatprep.subr.bf16.mxu0 0
  %245 = vmatpush1.bf16.xpose.msra.mxu0 %v234
  %246 = vmatprep.subr.bf16.mxu0 0
  %247 = vmatpush1.bf16.xpose.msra.mxu0 %v231
  %248 = vmatprep.subr.bf16.mxu0 0
  %249 = vmatpush1.bf16.xpose.msra.mxu0 %v228
  %250 = vmatprep.subr.bf16.mxu0 0
  %251 = vmatpush1.bf16.xpose.msra.mxu0 %v225
  %252 = vmatprep.subr.bf16.mxu0 0
  %253 = vmatpush2.bf16.xpose.msra.mxu0 0
  %254 = vmatprep.subr.bf16.mxu0 0
  %255 = vmatpush2.bf16.xpose.msra.mxu0 0
  %256 = vmatprep.subr.bf16.mxu0 0
  %257 = vmatpush2.bf16.xpose.msra.mxu0 0
  %258 = vmatprep.subr.bf16.mxu0 0
  %259 = vmatpush2.bf16.xpose.msra.mxu0 0
  %260 = vmatprep.subr.bf16.mxu0 0
  %261 = vmatpush2.bf16.xpose.msra.mxu0 0
  %262 = vmatprep.subr.bf16.mxu0 0
  %263 = vmatpush2.bf16.xpose.msra.mxu0 0
  %264 = vmatprep.subr.bf16.mxu0 0
  %265 = vmatpush2.bf16.xpose.msra.mxu0 0
  %266 = vmatprep.subr.bf16.mxu0 0
  %267 = vmatpush2.bf16.xpose.msra.mxu0 0
  %268 = vmatprep.mubr.bf16.mxu0 0
  %269 = vmatmul.mubr.bf16.gmra.mxu0 %v213
  %v270 = vpop.f32.mrf.mxu0
  %v271 = vadd.f32 0.0, %v270
  %v272 = vpop.f32.mrf.mxu0
  %v273 = vpop.f32.mrf.mxu0
  %v274 = vadd.f32 0.0, %v273
  %v275 = vpop.f32.mrf.mxu0
  %276 = vmatprep.mubr.bf16.mxu0 0
  %277 = vmatmul.mubr.bf16.gmra.mxu0 %v216
  %v278 = vpop.f32.mrf.mxu0
  %v279 = vadd.f32 0.0, %v278
  %v280 = vpop.f32.mrf.mxu0
  %v281 = vpop.f32.mrf.mxu0
  %v282 = vadd.f32 0.0, %v281
  %v283 = vpop.f32.mrf.mxu0
  %284 = vmatprep.mubr.bf16.mxu0 0
  %285 = vmatmul.mubr.bf16.gmra.mxu0 %v219
  %v286 = vpop.f32.mrf.mxu0
  %v287 = vadd.f32 0.0, %v286
  %v288 = vpop.f32.mrf.mxu0
  %v289 = vpop.f32.mrf.mxu0
  %v290 = vadd.f32 0.0, %v289
  %v291 = vpop.f32.mrf.mxu0
  %292 = vmatprep.mubr.bf16.mxu0 0
  %293 = vmatmul.mubr.bf16.gmra.mxu0 %v222
  %v294 = vpop.f32.mrf.mxu0
  %v295 = vadd.f32 0.0, %v294
  %v296 = vpop.f32.mrf.mxu0
  %v297 = vpop.f32.mrf.mxu0
  %v298 = vadd.f32 0.0, %v297
  %v299 = vpop.f32.mrf.mxu0
  %300 = vdwg.mxu0
  %vm301 = vcmask 523264
  %v302 = vsel %vm301, %v271, -inf
  %303 = vmax.xlane.f32.xlu0 %v302
  %v304 = vpop.xlane.xlu0 %303
  %v305 = vsel %vm301, %v274, -inf
  %306 = vmax.xlane.f32.xlu0 %v305
  %v307 = vpop.xlane.xlu0 %306
  %v308 = vsel %vm301, %v279, -inf
  %309 = vmax.xlane.f32.xlu0 %v308
  %v310 = vpop.xlane.xlu0 %309
  %v311 = vsel %vm301, %v282, -inf
  %312 = vmax.xlane.f32.xlu0 %v311
  %v313 = vpop.xlane.xlu0 %312
  %v314 = vsel %vm301, %v287, -inf
  %315 = vmax.xlane.f32.xlu0 %v314
  %v316 = vpop.xlane.xlu0 %315
  %v317 = vsel %vm301, %v290, -inf
  %318 = vmax.xlane.f32.xlu0 %v317
  %v319 = vpop.xlane.xlu0 %318
  %v320 = vsel %vm301, %v295, -inf
  %321 = vmax.xlane.f32.xlu0 %v320
  %v322 = vpop.xlane.xlu0 %321
  %v323 = vsel %vm301, %v298, -inf
  %324 = vmax.xlane.f32.xlu0 %v323
  %v325 = vpop.xlane.xlu0 %324
  %v326 = vsub.f32 %v271, %v304
  %v327 = vsub.f32 %v274, %v307
  %v328 = vsub.f32 %v279, %v310
  %v329 = vsub.f32 %v282, %v313
  %v330 = vsub.f32 %v287, %v316
  %v331 = vsub.f32 %v290, %v319
  %v332 = vsub.f32 %v295, %v322
  %v333 = vsub.f32 %v298, %v325
  %v334 = vmul.f32 %v326, 1.442695
  %v335 = vpow.pop %v334
  %v336 = vmul.f32 %v327, 1.442695
  %v337 = vpow.pop %v336
  %v338 = vmul.f32 %v328, 1.442695
  %v339 = vpow.pop %v338
  %v340 = vmul.f32 %v329, 1.442695
  %v341 = vpow.pop %v340
  %v342 = vmul.f32 %v330, 1.442695
  %v343 = vpow.pop %v342
  %v344 = vmul.f32 %v331, 1.442695
  %v345 = vpow.pop %v344
  %v346 = vmul.f32 %v332, 1.442695
  %v347 = vpow.pop %v346
  %v348 = vmul.f32 %v333, 1.442695
  %v349 = vpow.pop %v348
  %v350 = vsel %vm301, %v335, 0.0
  %351 = vadd.xlane.f32.xlu0 %v350
  %v352 = vpop.xlane.xlu0 %351
  %v353 = vsel %vm301, %v337, 0.0
  %354 = vadd.xlane.f32.xlu0 %v353
  %v355 = vpop.xlane.xlu0 %354
  %v356 = vsel %vm301, %v339, 0.0
  %357 = vadd.xlane.f32.xlu0 %v356
  %v358 = vpop.xlane.xlu0 %357
  %v359 = vsel %vm301, %v341, 0.0
  %360 = vadd.xlane.f32.xlu0 %v359
  %v361 = vpop.xlane.xlu0 %360
  %v362 = vsel %vm301, %v343, 0.0
  %363 = vadd.xlane.f32.xlu0 %v362
  %v364 = vpop.xlane.xlu0 %363
  %v365 = vsel %vm301, %v345, 0.0
  %366 = vadd.xlane.f32.xlu0 %v365
  %v367 = vpop.xlane.xlu0 %366
  %v368 = vsel %vm301, %v347, 0.0
  %369 = vadd.xlane.f32.xlu0 %v368
  %v370 = vpop.xlane.xlu0 %369
  %v371 = vsel %vm301, %v349, 0.0
  %372 = vadd.xlane.f32.xlu0 %v371
  %v373 = vpop.xlane.xlu0 %372
  %v374 = vrcp.pop %v352
  %v375 = vmul.f32 %v335, %v374
  %v376 = vrcp.pop %v355
  %v377 = vmul.f32 %v337, %v376
  %v378 = vrcp.pop %v358
  %v379 = vmul.f32 %v339, %v378
  %v380 = vrcp.pop %v361
  %v381 = vmul.f32 %v341, %v380
  %v382 = vrcp.pop %v364
  %v383 = vmul.f32 %v343, %v382
  %v384 = vrcp.pop %v367
  %v385 = vmul.f32 %v345, %v384
  %v386 = vrcp.pop %v370
  %v387 = vmul.f32 %v347, %v386
  %v388 = vrcp.pop %v373
  %v389 = vmul.f32 %v349, %v388
  %v390 = vpack.c.bf16 %v377, %v375
  %v391 = vpack.c.bf16 %v381, %v379
  %v392 = vpack.c.bf16 %v385, %v383
  %v393 = vpack.c.bf16 %v389, %v387
  %394 = vrot.lane.b32.xlu0 %v190, 64
  %v395 = vpop.permute.xlu0 %394
  %396 = vrot.lane.b32.xlu0 %v191, 64
  %v397 = vpop.permute.xlu0 %396
  %398 = vrot.lane.b32.xlu0 %v192, 64
  %v399 = vpop.permute.xlu0 %398
  %400 = vrot.lane.b32.xlu0 %v193, 64
  %v401 = vpop.permute.xlu0 %400
  %v407 = vsel %vm301, %v390, 0
  %v410 = vsel %vm301, %v391, 0
  %v413 = vsel %vm301, %v392, 0
  %v416 = vsel %vm301, %v393, 0
  %418 = vmatprep.subr.bf16.mxu0 0
  %419 = vmatpush1.bf16.msra.mxu0 0
  %420 = vmatprep.subr.bf16.mxu0 0
  %421 = vmatpush1.bf16.msra.mxu0 0
  %422 = vmatprep.subr.bf16.mxu0 0
  %423 = vmatpush1.bf16.msra.mxu0 0
  %424 = vmatprep.subr.bf16.mxu0 0
  %425 = vmatpush1.bf16.msra.mxu0 0
  %426 = vmatprep.subr.bf16.mxu0 0
  %427 = vmatpush1.bf16.msra.mxu0 %v401
  %428 = vmatprep.subr.bf16.mxu0 0
  %429 = vmatpush1.bf16.msra.mxu0 %v399
  %430 = vmatprep.subr.bf16.mxu0 0
  %431 = vmatpush1.bf16.msra.mxu0 %v397
  %432 = vmatprep.subr.bf16.mxu0 0
  %433 = vmatpush1.bf16.msra.mxu0 %v395
  %434 = vmatprep.subr.bf16.mxu0 0
  %435 = vmatpush2.bf16.msra.mxu0 0
  %436 = vmatprep.subr.bf16.mxu0 0
  %437 = vmatpush2.bf16.msra.mxu0 0
  %438 = vmatprep.subr.bf16.mxu0 0
  %439 = vmatpush2.bf16.msra.mxu0 0
  %440 = vmatprep.subr.bf16.mxu0 0
  %441 = vmatpush2.bf16.msra.mxu0 0
  %442 = vmatprep.subr.bf16.mxu0 0
  %443 = vmatpush2.bf16.msra.mxu0 0
  %444 = vmatprep.subr.bf16.mxu0 0
  %445 = vmatpush2.bf16.msra.mxu0 0
  %446 = vmatprep.subr.bf16.mxu0 0
  %447 = vmatpush2.bf16.msra.mxu0 0
  %448 = vmatprep.subr.bf16.mxu0 0
  %449 = vmatpush2.bf16.msra.mxu0 0
  %450 = vmatprep.mubr.bf16.mxu0 0
  %451 = vmatmul.mubr.bf16.gmra.mxu0 %v407
  %v452 = vpop.f32.mrf.mxu0
  %v453 = vadd.f32 0.0, %v452
  %v454 = vpop.f32.mrf.mxu0
  %v455 = vpop.f32.mrf.mxu0
  %v456 = vadd.f32 0.0, %v455
  %v457 = vpop.f32.mrf.mxu0
  %458 = vmatprep.mubr.bf16.mxu0 0
  %459 = vmatmul.mubr.bf16.gmra.mxu0 %v410
  %v460 = vpop.f32.mrf.mxu0
  %v461 = vadd.f32 0.0, %v460
  %v462 = vpop.f32.mrf.mxu0
  %v463 = vpop.f32.mrf.mxu0
  %v464 = vadd.f32 0.0, %v463
  %v465 = vpop.f32.mrf.mxu0
  %466 = vmatprep.mubr.bf16.mxu0 0
  %467 = vmatmul.mubr.bf16.gmra.mxu0 %v413
  %v468 = vpop.f32.mrf.mxu0
  %v469 = vadd.f32 0.0, %v468
  %v470 = vpop.f32.mrf.mxu0
  %v471 = vpop.f32.mrf.mxu0
  %v472 = vadd.f32 0.0, %v471
  %v473 = vpop.f32.mrf.mxu0
  %474 = vmatprep.mubr.bf16.mxu0 0
  %475 = vmatmul.mubr.bf16.gmra.mxu0 %v416
  %v476 = vpop.f32.mrf.mxu0
  %v477 = vadd.f32 0.0, %v476
  %v478 = vpop.f32.mrf.mxu0
  %v479 = vpop.f32.mrf.mxu0
  %v480 = vadd.f32 0.0, %v479
  %v481 = vpop.f32.mrf.mxu0
  %482 = vdwg.mxu0
  %v483 = vpack.c.bf16 %v456, %v453
  %v484 = vpack.c.bf16 %v464, %v461
  %v485 = vpack.c.bf16 %v472, %v469
  %v486 = vpack.c.bf16 %v480, %v477
  %491 = vrot.lane.b32.xlu0 %v194, 96
  %v492 = vpop.permute.xlu0 %491
  %493 = vrot.lane.b32.xlu0 %v195, 96
  %v494 = vpop.permute.xlu0 %493
  %495 = vrot.lane.b32.xlu0 %v196, 96
  %v496 = vpop.permute.xlu0 %495
  %497 = vrot.lane.b32.xlu0 %v197, 96
  %v498 = vpop.permute.xlu0 %497
  %v500 = vsel %vm211, %v194, 0
  %v503 = vsel %vm211, %v195, 0
  %v506 = vsel %vm211, %v196, 0
  %v509 = vsel %vm211, %v197, 0
  %v512 = vsel %vm211, %v492, 0
  %v515 = vsel %vm211, %v494, 0
  %v518 = vsel %vm211, %v496, 0
  %v521 = vsel %vm211, %v498, 0
  %523 = vmatprep.subr.bf16.mxu0 0
  %524 = vmatpush1.bf16.xpose.msra.mxu0 0
  %525 = vmatprep.subr.bf16.mxu0 0
  %526 = vmatpush1.bf16.xpose.msra.mxu0 0
  %527 = vmatprep.subr.bf16.mxu0 0
  %528 = vmatpush1.bf16.xpose.msra.mxu0 0
  %529 = vmatprep.subr.bf16.mxu0 0
  %530 = vmatpush1.bf16.xpose.msra.mxu0 0
  %531 = vmatprep.subr.bf16.mxu0 0
  %532 = vmatpush1.bf16.xpose.msra.mxu0 %v521
  %533 = vmatprep.subr.bf16.mxu0 0
  %534 = vmatpush1.bf16.xpose.msra.mxu0 %v518
  %535 = vmatprep.subr.bf16.mxu0 0
  %536 = vmatpush1.bf16.xpose.msra.mxu0 %v515
  %537 = vmatprep.subr.bf16.mxu0 0
  %538 = vmatpush1.bf16.xpose.msra.mxu0 %v512
  %539 = vmatprep.subr.bf16.mxu0 0
  %540 = vmatpush2.bf16.xpose.msra.mxu0 0
  %541 = vmatprep.subr.bf16.mxu0 0
  %542 = vmatpush2.bf16.xpose.msra.mxu0 0
  %543 = vmatprep.subr.bf16.mxu0 0
  %544 = vmatpush2.bf16.xpose.msra.mxu0 0
  %545 = vmatprep.subr.bf16.mxu0 0
  %546 = vmatpush2.bf16.xpose.msra.mxu0 0
  %547 = vmatprep.subr.bf16.mxu0 0
  %548 = vmatpush2.bf16.xpose.msra.mxu0 0
  %549 = vmatprep.subr.bf16.mxu0 0
  %550 = vmatpush2.bf16.xpose.msra.mxu0 0
  %551 = vmatprep.subr.bf16.mxu0 0
  %552 = vmatpush2.bf16.xpose.msra.mxu0 0
  %553 = vmatprep.subr.bf16.mxu0 0
  %554 = vmatpush2.bf16.xpose.msra.mxu0 0
  %555 = vmatprep.mubr.bf16.mxu0 0
  %556 = vmatmul.mubr.bf16.gmra.mxu0 %v500
  %v557 = vpop.f32.mrf.mxu0
  %v558 = vadd.f32 0.0, %v557
  %v559 = vpop.f32.mrf.mxu0
  %v560 = vpop.f32.mrf.mxu0
  %v561 = vadd.f32 0.0, %v560
  %v562 = vpop.f32.mrf.mxu0
  %563 = vmatprep.mubr.bf16.mxu0 0
  %564 = vmatmul.mubr.bf16.gmra.mxu0 %v503
  %v565 = vpop.f32.mrf.mxu0
  %v566 = vadd.f32 0.0, %v565
  %v567 = vpop.f32.mrf.mxu0
  %v568 = vpop.f32.mrf.mxu0
  %v569 = vadd.f32 0.0, %v568
  %v570 = vpop.f32.mrf.mxu0
  %571 = vmatprep.mubr.bf16.mxu0 0
  %572 = vmatmul.mubr.bf16.gmra.mxu0 %v506
  %v573 = vpop.f32.mrf.mxu0
  %v574 = vadd.f32 0.0, %v573
  %v575 = vpop.f32.mrf.mxu0
  %v576 = vpop.f32.mrf.mxu0
  %v577 = vadd.f32 0.0, %v576
  %v578 = vpop.f32.mrf.mxu0
  %579 = vmatprep.mubr.bf16.mxu0 0
  %580 = vmatmul.mubr.bf16.gmra.mxu0 %v509
  %v581 = vpop.f32.mrf.mxu0
  %v582 = vadd.f32 0.0, %v581
  %v583 = vpop.f32.mrf.mxu0
  %v584 = vpop.f32.mrf.mxu0
  %v585 = vadd.f32 0.0, %v584
  %v586 = vpop.f32.mrf.mxu0
  %587 = vdwg.mxu0
  %v588 = vsel %vm301, %v558, -inf
  %589 = vmax.xlane.f32.xlu0 %v588
  %v590 = vpop.xlane.xlu0 %589
  %v591 = vsel %vm301, %v561, -inf
  %592 = vmax.xlane.f32.xlu0 %v591
  %v593 = vpop.xlane.xlu0 %592
  %v594 = vsel %vm301, %v566, -inf
  %595 = vmax.xlane.f32.xlu0 %v594
  %v596 = vpop.xlane.xlu0 %595
  %v597 = vsel %vm301, %v569, -inf
  %598 = vmax.xlane.f32.xlu0 %v597
  %v599 = vpop.xlane.xlu0 %598
  %v600 = vsel %vm301, %v574, -inf
  %601 = vmax.xlane.f32.xlu0 %v600
  %v602 = vpop.xlane.xlu0 %601
  %v603 = vsel %vm301, %v577, -inf
  %604 = vmax.xlane.f32.xlu0 %v603
  %v605 = vpop.xlane.xlu0 %604
  %v606 = vsel %vm301, %v582, -inf
  %607 = vmax.xlane.f32.xlu0 %v606
  %v608 = vpop.xlane.xlu0 %607
  %v609 = vsel %vm301, %v585, -inf
  %610 = vmax.xlane.f32.xlu0 %v609
  %v611 = vpop.xlane.xlu0 %610
  %v612 = vsub.f32 %v558, %v590
  %v613 = vsub.f32 %v561, %v593
  %v614 = vsub.f32 %v566, %v596
  %v615 = vsub.f32 %v569, %v599
  %v616 = vsub.f32 %v574, %v602
  %v617 = vsub.f32 %v577, %v605
  %v618 = vsub.f32 %v582, %v608
  %v619 = vsub.f32 %v585, %v611
  %v620 = vmul.f32 %v612, 1.442695
  %v621 = vpow.pop %v620
  %v622 = vmul.f32 %v613, 1.442695
  %v623 = vpow.pop %v622
  %v624 = vmul.f32 %v614, 1.442695
  %v625 = vpow.pop %v624
  %v626 = vmul.f32 %v615, 1.442695
  %v627 = vpow.pop %v626
  %v628 = vmul.f32 %v616, 1.442695
  %v629 = vpow.pop %v628
  %v630 = vmul.f32 %v617, 1.442695
  %v631 = vpow.pop %v630
  %v632 = vmul.f32 %v618, 1.442695
  %v633 = vpow.pop %v632
  %v634 = vmul.f32 %v619, 1.442695
  %v635 = vpow.pop %v634
  %v636 = vsel %vm301, %v621, 0.0
  %637 = vadd.xlane.f32.xlu0 %v636
  %v638 = vpop.xlane.xlu0 %637
  %v639 = vsel %vm301, %v623, 0.0
  %640 = vadd.xlane.f32.xlu0 %v639
  %v641 = vpop.xlane.xlu0 %640
  %v642 = vsel %vm301, %v625, 0.0
  %643 = vadd.xlane.f32.xlu0 %v642
  %v644 = vpop.xlane.xlu0 %643
  %v645 = vsel %vm301, %v627, 0.0
  %646 = vadd.xlane.f32.xlu0 %v645
  %v647 = vpop.xlane.xlu0 %646
  %v648 = vsel %vm301, %v629, 0.0
  %649 = vadd.xlane.f32.xlu0 %v648
  %v650 = vpop.xlane.xlu0 %649
  %v651 = vsel %vm301, %v631, 0.0
  %652 = vadd.xlane.f32.xlu0 %v651
  %v653 = vpop.xlane.xlu0 %652
  %v654 = vsel %vm301, %v633, 0.0
  %655 = vadd.xlane.f32.xlu0 %v654
  %v656 = vpop.xlane.xlu0 %655
  %v657 = vsel %vm301, %v635, 0.0
  %658 = vadd.xlane.f32.xlu0 %v657
  %v659 = vpop.xlane.xlu0 %658
  %v660 = vrcp.pop %v638
  %v661 = vmul.f32 %v621, %v660
  %v662 = vrcp.pop %v641
  %v663 = vmul.f32 %v623, %v662
  %v664 = vrcp.pop %v644
  %v665 = vmul.f32 %v625, %v664
  %v666 = vrcp.pop %v647
  %v667 = vmul.f32 %v627, %v666
  %v668 = vrcp.pop %v650
  %v669 = vmul.f32 %v629, %v668
  %v670 = vrcp.pop %v653
  %v671 = vmul.f32 %v631, %v670
  %v672 = vrcp.pop %v656
  %v673 = vmul.f32 %v633, %v672
  %v674 = vrcp.pop %v659
  %v675 = vmul.f32 %v635, %v674
  %v676 = vpack.c.bf16 %v663, %v661
  %v677 = vpack.c.bf16 %v667, %v665
  %v678 = vpack.c.bf16 %v671, %v669
  %v679 = vpack.c.bf16 %v675, %v673
  %680 = vrot.lane.b32.xlu0 %v194, 64
  %v681 = vpop.permute.xlu0 %680
  %682 = vrot.lane.b32.xlu0 %v195, 64
  %v683 = vpop.permute.xlu0 %682
  %684 = vrot.lane.b32.xlu0 %v196, 64
  %v685 = vpop.permute.xlu0 %684
  %686 = vrot.lane.b32.xlu0 %v197, 64
  %v687 = vpop.permute.xlu0 %686
  %v693 = vsel %vm301, %v676, 0
  %v696 = vsel %vm301, %v677, 0
  %v699 = vsel %vm301, %v678, 0
  %v702 = vsel %vm301, %v679, 0
  %704 = vmatprep.subr.bf16.mxu0 0
  %705 = vmatpush1.bf16.msra.mxu0 0
  %706 = vmatprep.subr.bf16.mxu0 0
  %707 = vmatpush1.bf16.msra.mxu0 0
  %708 = vmatprep.subr.bf16.mxu0 0
  %709 = vmatpush1.bf16.msra.mxu0 0
  %710 = vmatprep.subr.bf16.mxu0 0
  %711 = vmatpush1.bf16.msra.mxu0 0
  %712 = vmatprep.subr.bf16.mxu0 0
  %713 = vmatpush1.bf16.msra.mxu0 %v687
  %714 = vmatprep.subr.bf16.mxu0 0
  %715 = vmatpush1.bf16.msra.mxu0 %v685
  %716 = vmatprep.subr.bf16.mxu0 0
  %717 = vmatpush1.bf16.msra.mxu0 %v683
  %718 = vmatprep.subr.bf16.mxu0 0
  %719 = vmatpush1.bf16.msra.mxu0 %v681
  %720 = vmatprep.subr.bf16.mxu0 0
  %721 = vmatpush2.bf16.msra.mxu0 0
  %722 = vmatprep.subr.bf16.mxu0 0
  %723 = vmatpush2.bf16.msra.mxu0 0
  %724 = vmatprep.subr.bf16.mxu0 0
  %725 = vmatpush2.bf16.msra.mxu0 0
  %726 = vmatprep.subr.bf16.mxu0 0
  %727 = vmatpush2.bf16.msra.mxu0 0
  %728 = vmatprep.subr.bf16.mxu0 0
  %729 = vmatpush2.bf16.msra.mxu0 0
  %730 = vmatprep.subr.bf16.mxu0 0
  %731 = vmatpush2.bf16.msra.mxu0 0
  %732 = vmatprep.subr.bf16.mxu0 0
  %733 = vmatpush2.bf16.msra.mxu0 0
  %734 = vmatprep.subr.bf16.mxu0 0
  %735 = vmatpush2.bf16.msra.mxu0 0
  %736 = vmatprep.mubr.bf16.mxu0 0
  %737 = vmatmul.mubr.bf16.gmra.mxu0 %v693
  %v738 = vpop.f32.mrf.mxu0
  %v739 = vadd.f32 0.0, %v738
  %v740 = vpop.f32.mrf.mxu0
  %v741 = vpop.f32.mrf.mxu0
  %v742 = vadd.f32 0.0, %v741
  %v743 = vpop.f32.mrf.mxu0
  %744 = vmatprep.mubr.bf16.mxu0 0
  %745 = vmatmul.mubr.bf16.gmra.mxu0 %v696
  %v746 = vpop.f32.mrf.mxu0
  %v747 = vadd.f32 0.0, %v746
  %v748 = vpop.f32.mrf.mxu0
  %v749 = vpop.f32.mrf.mxu0
  %v750 = vadd.f32 0.0, %v749
  %v751 = vpop.f32.mrf.mxu0
  %752 = vmatprep.mubr.bf16.mxu0 0
  %753 = vmatmul.mubr.bf16.gmra.mxu0 %v699
  %v754 = vpop.f32.mrf.mxu0
  %v755 = vadd.f32 0.0, %v754
  %v756 = vpop.f32.mrf.mxu0
  %v757 = vpop.f32.mrf.mxu0
  %v758 = vadd.f32 0.0, %v757
  %v759 = vpop.f32.mrf.mxu0
  %760 = vmatprep.mubr.bf16.mxu0 0
  %761 = vmatmul.mubr.bf16.gmra.mxu0 %v702
  %v762 = vpop.f32.mrf.mxu0
  %v763 = vadd.f32 0.0, %v762
  %v764 = vpop.f32.mrf.mxu0
  %v765 = vpop.f32.mrf.mxu0
  %v766 = vadd.f32 0.0, %v765
  %v767 = vpop.f32.mrf.mxu0
  %768 = vdwg.mxu0
  %v769 = vpack.c.bf16 %v742, %v739
  %v770 = vpack.c.bf16 %v750, %v747
  %v771 = vpack.c.bf16 %v758, %v755
  %v772 = vpack.c.bf16 %v766, %v763
  %s773 = scalar_lea.vmem %s3, 4
  %v774 = vld [vmem:[%s773] sm:$0xf]
  %775 = vrot.lane.b32.xlu0 %v190, 120
  %v776 = vpop.permute.xlu0 %775
  %777 = vrot.lane.b32.xlu0 %v191, 120
  %v778 = vpop.permute.xlu0 %777
  %779 = vrot.lane.b32.xlu0 %v192, 120
  %v780 = vpop.permute.xlu0 %779
  %781 = vrot.lane.b32.xlu0 %v193, 120
  %v782 = vpop.permute.xlu0 %781
  %783 = vrot.lane.b32.xlu0 %v190, 88
  %v784 = vpop.permute.xlu0 %783
  %785 = vrot.lane.b32.xlu0 %v191, 88
  %v786 = vpop.permute.xlu0 %785
  %787 = vrot.lane.b32.xlu0 %v192, 88
  %v788 = vpop.permute.xlu0 %787
  %789 = vrot.lane.b32.xlu0 %v193, 88
  %v790 = vpop.permute.xlu0 %789
  %v792 = vsel %vm211, %v776, 0
  %v795 = vsel %vm211, %v778, 0
  %v798 = vsel %vm211, %v780, 0
  %v801 = vsel %vm211, %v782, 0
  %v804 = vsel %vm211, %v784, 0
  %v807 = vsel %vm211, %v786, 0
  %v810 = vsel %vm211, %v788, 0
  %v813 = vsel %vm211, %v790, 0
  %815 = vmatprep.subr.bf16.mxu0 0
  %816 = vmatpush1.bf16.xpose.msra.mxu0 0
  %817 = vmatprep.subr.bf16.mxu0 0
  %818 = vmatpush1.bf16.xpose.msra.mxu0 0
  %819 = vmatprep.subr.bf16.mxu0 0
  %820 = vmatpush1.bf16.xpose.msra.mxu0 0
  %821 = vmatprep.subr.bf16.mxu0 0
  %822 = vmatpush1.bf16.xpose.msra.mxu0 0
  %823 = vmatprep.subr.bf16.mxu0 0
  %824 = vmatpush1.bf16.xpose.msra.mxu0 %v813
  %825 = vmatprep.subr.bf16.mxu0 0
  %826 = vmatpush1.bf16.xpose.msra.mxu0 %v810
  %827 = vmatprep.subr.bf16.mxu0 0
  %828 = vmatpush1.bf16.xpose.msra.mxu0 %v807
  %829 = vmatprep.subr.bf16.mxu0 0
  %830 = vmatpush1.bf16.xpose.msra.mxu0 %v804
  %831 = vmatprep.subr.bf16.mxu0 0
  %832 = vmatpush2.bf16.xpose.msra.mxu0 0
  %833 = vmatprep.subr.bf16.mxu0 0
  %834 = vmatpush2.bf16.xpose.msra.mxu0 0
  %835 = vmatprep.subr.bf16.mxu0 0
  %836 = vmatpush2.bf16.xpose.msra.mxu0 0
  %837 = vmatprep.subr.bf16.mxu0 0
  %838 = vmatpush2.bf16.xpose.msra.mxu0 0
  %839 = vmatprep.subr.bf16.mxu0 0
  %840 = vmatpush2.bf16.xpose.msra.mxu0 0
  %841 = vmatprep.subr.bf16.mxu0 0
  %842 = vmatpush2.bf16.xpose.msra.mxu0 0
  %843 = vmatprep.subr.bf16.mxu0 0
  %844 = vmatpush2.bf16.xpose.msra.mxu0 0
  %845 = vmatprep.subr.bf16.mxu0 0
  %846 = vmatpush2.bf16.xpose.msra.mxu0 0
  %847 = vmatprep.mubr.bf16.mxu0 0
  %848 = vmatmul.mubr.bf16.gmra.mxu0 %v792
  %v849 = vpop.f32.mrf.mxu0
  %v850 = vadd.f32 0.0, %v849
  %v851 = vpop.f32.mrf.mxu0
  %v852 = vpop.f32.mrf.mxu0
  %v853 = vadd.f32 0.0, %v852
  %v854 = vpop.f32.mrf.mxu0
  %855 = vmatprep.mubr.bf16.mxu0 0
  %856 = vmatmul.mubr.bf16.gmra.mxu0 %v795
  %v857 = vpop.f32.mrf.mxu0
  %v858 = vadd.f32 0.0, %v857
  %v859 = vpop.f32.mrf.mxu0
  %v860 = vpop.f32.mrf.mxu0
  %v861 = vadd.f32 0.0, %v860
  %v862 = vpop.f32.mrf.mxu0
  %863 = vmatprep.mubr.bf16.mxu0 0
  %864 = vmatmul.mubr.bf16.gmra.mxu0 %v798
  %v865 = vpop.f32.mrf.mxu0
  %v866 = vadd.f32 0.0, %v865
  %v867 = vpop.f32.mrf.mxu0
  %v868 = vpop.f32.mrf.mxu0
  %v869 = vadd.f32 0.0, %v868
  %v870 = vpop.f32.mrf.mxu0
  %871 = vmatprep.mubr.bf16.mxu0 0
  %872 = vmatmul.mubr.bf16.gmra.mxu0 %v801
  %v873 = vpop.f32.mrf.mxu0
  %v874 = vadd.f32 0.0, %v873
  %v875 = vpop.f32.mrf.mxu0
  %v876 = vpop.f32.mrf.mxu0
  %v877 = vadd.f32 0.0, %v876
  %v878 = vpop.f32.mrf.mxu0
  %879 = vdwg.mxu0
  %v880 = vsel %vm301, %v850, -inf
  %881 = vmax.xlane.f32.xlu0 %v880
  %v882 = vpop.xlane.xlu0 %881
  %v883 = vsel %vm301, %v853, -inf
  %884 = vmax.xlane.f32.xlu0 %v883
  %v885 = vpop.xlane.xlu0 %884
  %v886 = vsel %vm301, %v858, -inf
  %887 = vmax.xlane.f32.xlu0 %v886
  %v888 = vpop.xlane.xlu0 %887
  %v889 = vsel %vm301, %v861, -inf
  %890 = vmax.xlane.f32.xlu0 %v889
  %v891 = vpop.xlane.xlu0 %890
  %v892 = vsel %vm301, %v866, -inf
  %893 = vmax.xlane.f32.xlu0 %v892
  %v894 = vpop.xlane.xlu0 %893
  %v895 = vsel %vm301, %v869, -inf
  %896 = vmax.xlane.f32.xlu0 %v895
  %v897 = vpop.xlane.xlu0 %896
  %v898 = vsel %vm301, %v874, -inf
  %899 = vmax.xlane.f32.xlu0 %v898
  %v900 = vpop.xlane.xlu0 %899
  %v901 = vsel %vm301, %v877, -inf
  %902 = vmax.xlane.f32.xlu0 %v901
  %v903 = vpop.xlane.xlu0 %902
  %v904 = vsub.f32 %v850, %v882
  %v905 = vsub.f32 %v853, %v885
  %v906 = vsub.f32 %v858, %v888
  %v907 = vsub.f32 %v861, %v891
  %v908 = vsub.f32 %v866, %v894
  %v909 = vsub.f32 %v869, %v897
  %v910 = vsub.f32 %v874, %v900
  %v911 = vsub.f32 %v877, %v903
  %v912 = vmul.f32 %v904, 1.442695
  %v913 = vpow.pop %v912
  %v914 = vmul.f32 %v905, 1.442695
  %v915 = vpow.pop %v914
  %v916 = vmul.f32 %v906, 1.442695
  %v917 = vpow.pop %v916
  %v918 = vmul.f32 %v907, 1.442695
  %v919 = vpow.pop %v918
  %v920 = vmul.f32 %v908, 1.442695
  %v921 = vpow.pop %v920
  %v922 = vmul.f32 %v909, 1.442695
  %v923 = vpow.pop %v922
  %v924 = vmul.f32 %v910, 1.442695
  %v925 = vpow.pop %v924
  %v926 = vmul.f32 %v911, 1.442695
  %v927 = vpow.pop %v926
  %v928 = vsel %vm301, %v913, 0.0
  %929 = vadd.xlane.f32.xlu0 %v928
  %v930 = vpop.xlane.xlu0 %929
  %v931 = vsel %vm301, %v915, 0.0
  %932 = vadd.xlane.f32.xlu0 %v931
  %v933 = vpop.xlane.xlu0 %932
  %v934 = vsel %vm301, %v917, 0.0
  %935 = vadd.xlane.f32.xlu0 %v934
  %v936 = vpop.xlane.xlu0 %935
  %v937 = vsel %vm301, %v919, 0.0
  %938 = vadd.xlane.f32.xlu0 %v937
  %v939 = vpop.xlane.xlu0 %938
  %v940 = vsel %vm301, %v921, 0.0
  %941 = vadd.xlane.f32.xlu0 %v940
  %v942 = vpop.xlane.xlu0 %941
  %v943 = vsel %vm301, %v923, 0.0
  %944 = vadd.xlane.f32.xlu0 %v943
  %v945 = vpop.xlane.xlu0 %944
  %v946 = vsel %vm301, %v925, 0.0
  %947 = vadd.xlane.f32.xlu0 %v946
  %v948 = vpop.xlane.xlu0 %947
  %v949 = vsel %vm301, %v927, 0.0
  %950 = vadd.xlane.f32.xlu0 %v949
  %v951 = vpop.xlane.xlu0 %950
  %v952 = vrcp.pop %v930
  %v953 = vmul.f32 %v913, %v952
  %v954 = vrcp.pop %v933
  %v955 = vmul.f32 %v915, %v954
  %v956 = vrcp.pop %v936
  %v957 = vmul.f32 %v917, %v956
  %v958 = vrcp.pop %v939
  %v959 = vmul.f32 %v919, %v958
  %v960 = vrcp.pop %v942
  %v961 = vmul.f32 %v921, %v960
  %v962 = vrcp.pop %v945
  %v963 = vmul.f32 %v923, %v962
  %v964 = vrcp.pop %v948
  %v965 = vmul.f32 %v925, %v964
  %v966 = vrcp.pop %v951
  %v967 = vmul.f32 %v927, %v966
  %v968 = vpack.c.bf16 %v955, %v953
  %v969 = vpack.c.bf16 %v959, %v957
  %v970 = vpack.c.bf16 %v963, %v961
  %v971 = vpack.c.bf16 %v967, %v965
  %972 = vrot.lane.b32.xlu0 %v190, 56
  %v973 = vpop.permute.xlu0 %972
  %974 = vrot.lane.b32.xlu0 %v191, 56
  %v975 = vpop.permute.xlu0 %974
  %976 = vrot.lane.b32.xlu0 %v192, 56
  %v977 = vpop.permute.xlu0 %976
  %978 = vrot.lane.b32.xlu0 %v193, 56
  %v979 = vpop.permute.xlu0 %978
  %v985 = vsel %vm301, %v968, 0
  %v988 = vsel %vm301, %v969, 0
  %v991 = vsel %vm301, %v970, 0
  %v994 = vsel %vm301, %v971, 0
  %996 = vmatprep.subr.bf16.mxu0 0
  %997 = vmatpush1.bf16.msra.mxu0 0
  %998 = vmatprep.subr.bf16.mxu0 0
  %999 = vmatpush1.bf16.msra.mxu0 0
  %1000 = vmatprep.subr.bf16.mxu0 0
  %1001 = vmatpush1.bf16.msra.mxu0 0
  %1002 = vmatprep.subr.bf16.mxu0 0
  %1003 = vmatpush1.bf16.msra.mxu0 0
  %1004 = vmatprep.subr.bf16.mxu0 0
  %1005 = vmatpush1.bf16.msra.mxu0 %v979
  %1006 = vmatprep.subr.bf16.mxu0 0
  %1007 = vmatpush1.bf16.msra.mxu0 %v977
  %1008 = vmatprep.subr.bf16.mxu0 0
  %1009 = vmatpush1.bf16.msra.mxu0 %v975
  %1010 = vmatprep.subr.bf16.mxu0 0
  %1011 = vmatpush1.bf16.msra.mxu0 %v973
  %1012 = vmatprep.subr.bf16.mxu0 0
  %1013 = vmatpush2.bf16.msra.mxu0 0
  %1014 = vmatprep.subr.bf16.mxu0 0
  %1015 = vmatpush2.bf16.msra.mxu0 0
  %1016 = vmatprep.subr.bf16.mxu0 0
  %1017 = vmatpush2.bf16.msra.mxu0 0
  %1018 = vmatprep.subr.bf16.mxu0 0
  %1019 = vmatpush2.bf16.msra.mxu0 0
  %1020 = vmatprep.subr.bf16.mxu0 0
  %1021 = vmatpush2.bf16.msra.mxu0 0
  %1022 = vmatprep.subr.bf16.mxu0 0
  %1023 = vmatpush2.bf16.msra.mxu0 0
  %1024 = vmatprep.subr.bf16.mxu0 0
  %1025 = vmatpush2.bf16.msra.mxu0 0
  %1026 = vmatprep.subr.bf16.mxu0 0
  %1027 = vmatpush2.bf16.msra.mxu0 0
  %1028 = vmatprep.mubr.bf16.mxu0 0
  %1029 = vmatmul.mubr.bf16.gmra.mxu0 %v985
  %v1030 = vpop.f32.mrf.mxu0
  %v1031 = vadd.f32 0.0, %v1030
  %v1032 = vpop.f32.mrf.mxu0
  %v1033 = vpop.f32.mrf.mxu0
  %v1034 = vadd.f32 0.0, %v1033
  %v1035 = vpop.f32.mrf.mxu0
  %1036 = vmatprep.mubr.bf16.mxu0 0
  %1037 = vmatmul.mubr.bf16.gmra.mxu0 %v988
  %v1038 = vpop.f32.mrf.mxu0
  %v1039 = vadd.f32 0.0, %v1038
  %v1040 = vpop.f32.mrf.mxu0
  %v1041 = vpop.f32.mrf.mxu0
  %v1042 = vadd.f32 0.0, %v1041
  %v1043 = vpop.f32.mrf.mxu0
  %1044 = vmatprep.mubr.bf16.mxu0 0
  %1045 = vmatmul.mubr.bf16.gmra.mxu0 %v991
  %v1046 = vpop.f32.mrf.mxu0
  %v1047 = vadd.f32 0.0, %v1046
  %v1048 = vpop.f32.mrf.mxu0
  %v1049 = vpop.f32.mrf.mxu0
  %v1050 = vadd.f32 0.0, %v1049
  %v1051 = vpop.f32.mrf.mxu0
  %1052 = vmatprep.mubr.bf16.mxu0 0
  %1053 = vmatmul.mubr.bf16.gmra.mxu0 %v994
  %v1054 = vpop.f32.mrf.mxu0
  %v1055 = vadd.f32 0.0, %v1054
  %v1056 = vpop.f32.mrf.mxu0
  %v1057 = vpop.f32.mrf.mxu0
  %v1058 = vadd.f32 0.0, %v1057
  %v1059 = vpop.f32.mrf.mxu0
  %1060 = vdwg.mxu0
  %v1061 = vpack.c.bf16 %v1034, %v1031
  %v1062 = vpack.c.bf16 %v1042, %v1039
  %v1063 = vpack.c.bf16 %v1050, %v1047
  %v1064 = vpack.c.bf16 %v1058, %v1055
  %v1066 = vsel %vm211, %v1061, 0
  %v1069 = vsel %vm211, %v1062, 0
  %v1072 = vsel %vm211, %v1063, 0
  %v1075 = vsel %vm211, %v1064, 0
  %vm1077 = vcmask 1043456
  %v1079 = vsel %vm1077, %v774, 0
  %1081 = vmatprep.subr.bf16.mxu0 0
  %1082 = vmatpush1.bf16.msra.mxu0 0
  %1083 = vmatprep.subr.bf16.mxu0 0
  %1084 = vmatpush1.bf16.msra.mxu0 0
  %1085 = vmatprep.subr.bf16.mxu0 0
  %1086 = vmatpush1.bf16.msra.mxu0 0
  %1087 = vmatprep.subr.bf16.mxu0 0
  %1088 = vmatpush1.bf16.msra.mxu0 0
  %1089 = vmatprep.subr.bf16.mxu0 0
  %1090 = vmatpush1.bf16.msra.mxu0 0
  %1091 = vmatprep.subr.bf16.mxu0 0
  %1092 = vmatpush1.bf16.msra.mxu0 0
  %1093 = vmatprep.subr.bf16.mxu0 0
  %1094 = vmatpush1.bf16.msra.mxu0 0
  %1095 = vmatprep.subr.bf16.mxu0 0
  %1096 = vmatpush1.bf16.msra.mxu0 %v1079
  %1097 = vmatprep.subr.bf16.mxu0 0
  %1098 = vmatpush2.bf16.msra.mxu0 0
  %1099 = vmatprep.subr.bf16.mxu0 0
  %1100 = vmatpush2.bf16.msra.mxu0 0
  %1101 = vmatprep.subr.bf16.mxu0 0
  %1102 = vmatpush2.bf16.msra.mxu0 0
  %1103 = vmatprep.subr.bf16.mxu0 0
  %1104 = vmatpush2.bf16.msra.mxu0 0
  %1105 = vmatprep.subr.bf16.mxu0 0
  %1106 = vmatpush2.bf16.msra.mxu0 0
  %1107 = vmatprep.subr.bf16.mxu0 0
  %1108 = vmatpush2.bf16.msra.mxu0 0
  %1109 = vmatprep.subr.bf16.mxu0 0
  %1110 = vmatpush2.bf16.msra.mxu0 0
  %1111 = vmatprep.subr.bf16.mxu0 0
  %1112 = vmatpush2.bf16.msra.mxu0 0
  %1113 = vmatprep.mubr.bf16.mxu0 0
  %1114 = vmatmul.mubr.bf16.gmra.mxu0 %v1066
  %v1115 = vpop.f32.mrf.mxu0
  %v1116 = vadd.f32 0.0, %v1115
  %v1117 = vpop.f32.mrf.mxu0
  %v1118 = vpop.f32.mrf.mxu0
  %v1119 = vadd.f32 0.0, %v1118
  %v1120 = vpop.f32.mrf.mxu0
  %1121 = vmatprep.mubr.bf16.mxu0 0
  %1122 = vmatmul.mubr.bf16.gmra.mxu0 %v1069
  %v1123 = vpop.f32.mrf.mxu0
  %v1124 = vadd.f32 0.0, %v1123
  %v1125 = vpop.f32.mrf.mxu0
  %v1126 = vpop.f32.mrf.mxu0
  %v1127 = vadd.f32 0.0, %v1126
  %v1128 = vpop.f32.mrf.mxu0
  %1129 = vmatprep.mubr.bf16.mxu0 0
  %1130 = vmatmul.mubr.bf16.gmra.mxu0 %v1072
  %v1131 = vpop.f32.mrf.mxu0
  %v1132 = vadd.f32 0.0, %v1131
  %v1133 = vpop.f32.mrf.mxu0
  %v1134 = vpop.f32.mrf.mxu0
  %v1135 = vadd.f32 0.0, %v1134
  %v1136 = vpop.f32.mrf.mxu0
  %1137 = vmatprep.mubr.bf16.mxu0 0
  %1138 = vmatmul.mubr.bf16.gmra.mxu0 %v1075
  %v1139 = vpop.f32.mrf.mxu0
  %v1140 = vadd.f32 0.0, %v1139
  %v1141 = vpop.f32.mrf.mxu0
  %v1142 = vpop.f32.mrf.mxu0
  %v1143 = vadd.f32 0.0, %v1142
  %v1144 = vpop.f32.mrf.mxu0
  %1145 = vdwg.mxu0
  %v1147 = vsel %vm211, %v483, 0
  %v1150 = vsel %vm211, %v484, 0
  %v1153 = vsel %vm211, %v485, 0
  %v1156 = vsel %vm211, %v486, 0
  %v1159 = vsel %vm1077, %v198, 0
  %1161 = vmatprep.subr.bf16.mxu0 0
  %1162 = vmatpush1.bf16.msra.mxu0 0
  %1163 = vmatprep.subr.bf16.mxu0 0
  %1164 = vmatpush1.bf16.msra.mxu0 0
  %1165 = vmatprep.subr.bf16.mxu0 0
  %1166 = vmatpush1.bf16.msra.mxu0 0
  %1167 = vmatprep.subr.bf16.mxu0 0
  %1168 = vmatpush1.bf16.msra.mxu0 0
  %1169 = vmatprep.subr.bf16.mxu0 0
  %1170 = vmatpush1.bf16.msra.mxu0 0
  %1171 = vmatprep.subr.bf16.mxu0 0
  %1172 = vmatpush1.bf16.msra.mxu0 0
  %1173 = vmatprep.subr.bf16.mxu0 0
  %1174 = vmatpush1.bf16.msra.mxu0 0
  %1175 = vmatprep.subr.bf16.mxu0 0
  %1176 = vmatpush1.bf16.msra.mxu0 %v1159
  %1177 = vmatprep.subr.bf16.mxu0 0
  %1178 = vmatpush2.bf16.msra.mxu0 0
  %1179 = vmatprep.subr.bf16.mxu0 0
  %1180 = vmatpush2.bf16.msra.mxu0 0
  %1181 = vmatprep.subr.bf16.mxu0 0
  %1182 = vmatpush2.bf16.msra.mxu0 0
  %1183 = vmatprep.subr.bf16.mxu0 0
  %1184 = vmatpush2.bf16.msra.mxu0 0
  %1185 = vmatprep.subr.bf16.mxu0 0
  %1186 = vmatpush2.bf16.msra.mxu0 0
  %1187 = vmatprep.subr.bf16.mxu0 0
  %1188 = vmatpush2.bf16.msra.mxu0 0
  %1189 = vmatprep.subr.bf16.mxu0 0
  %1190 = vmatpush2.bf16.msra.mxu0 0
  %1191 = vmatprep.subr.bf16.mxu0 0
  %1192 = vmatpush2.bf16.msra.mxu0 0
  %1193 = vmatprep.mubr.bf16.mxu0 0
  %1194 = vmatmul.mubr.bf16.gmra.mxu0 %v1147
  %v1195 = vpop.f32.mrf.mxu0
  %v1196 = vadd.f32 %v1116, %v1195
  %v1197 = vpop.f32.mrf.mxu0
  %v1198 = vpop.f32.mrf.mxu0
  %v1199 = vadd.f32 %v1119, %v1198
  %v1200 = vpop.f32.mrf.mxu0
  %1201 = vmatprep.mubr.bf16.mxu0 0
  %1202 = vmatmul.mubr.bf16.gmra.mxu0 %v1150
  %v1203 = vpop.f32.mrf.mxu0
  %v1204 = vadd.f32 %v1124, %v1203
  %v1205 = vpop.f32.mrf.mxu0
  %v1206 = vpop.f32.mrf.mxu0
  %v1207 = vadd.f32 %v1127, %v1206
  %v1208 = vpop.f32.mrf.mxu0
  %1209 = vmatprep.mubr.bf16.mxu0 0
  %1210 = vmatmul.mubr.bf16.gmra.mxu0 %v1153
  %v1211 = vpop.f32.mrf.mxu0
  %v1212 = vadd.f32 %v1132, %v1211
  %v1213 = vpop.f32.mrf.mxu0
  %v1214 = vpop.f32.mrf.mxu0
  %v1215 = vadd.f32 %v1135, %v1214
  %v1216 = vpop.f32.mrf.mxu0
  %1217 = vmatprep.mubr.bf16.mxu0 0
  %1218 = vmatmul.mubr.bf16.gmra.mxu0 %v1156
  %v1219 = vpop.f32.mrf.mxu0
  %v1220 = vadd.f32 %v1140, %v1219
  %v1221 = vpop.f32.mrf.mxu0
  %v1222 = vpop.f32.mrf.mxu0
  %v1223 = vadd.f32 %v1143, %v1222
  %v1224 = vpop.f32.mrf.mxu0
  %1225 = vdwg.mxu0
  %1226 = vrot.lane.b32.xlu0 %v194, 120
  %v1227 = vpop.permute.xlu0 %1226
  %1228 = vrot.lane.b32.xlu0 %v195, 120
  %v1229 = vpop.permute.xlu0 %1228
  %1230 = vrot.lane.b32.xlu0 %v196, 120
  %v1231 = vpop.permute.xlu0 %1230
  %1232 = vrot.lane.b32.xlu0 %v197, 120
  %v1233 = vpop.permute.xlu0 %1232
  %1234 = vrot.lane.b32.xlu0 %v194, 88
  %v1235 = vpop.permute.xlu0 %1234
  %1236 = vrot.lane.b32.xlu0 %v195, 88
  %v1237 = vpop.permute.xlu0 %1236
  %1238 = vrot.lane.b32.xlu0 %v196, 88
  %v1239 = vpop.permute.xlu0 %1238
  %1240 = vrot.lane.b32.xlu0 %v197, 88
  %v1241 = vpop.permute.xlu0 %1240
  %v1243 = vsel %vm211, %v1227, 0
  %v1246 = vsel %vm211, %v1229, 0
  %v1249 = vsel %vm211, %v1231, 0
  %v1252 = vsel %vm211, %v1233, 0
  %v1255 = vsel %vm211, %v1235, 0
  %v1258 = vsel %vm211, %v1237, 0
  %v1261 = vsel %vm211, %v1239, 0
  %v1264 = vsel %vm211, %v1241, 0
  %1266 = vmatprep.subr.bf16.mxu0 0
  %1267 = vmatpush1.bf16.xpose.msra.mxu0 0
  %1268 = vmatprep.subr.bf16.mxu0 0
  %1269 = vmatpush1.bf16.xpose.msra.mxu0 0
  %1270 = vmatprep.subr.bf16.mxu0 0
  %1271 = vmatpush1.bf16.xpose.msra.mxu0 0
  %1272 = vmatprep.subr.bf16.mxu0 0
  %1273 = vmatpush1.bf16.xpose.msra.mxu0 0
  %1274 = vmatprep.subr.bf16.mxu0 0
  %1275 = vmatpush1.bf16.xpose.msra.mxu0 %v1264
  %1276 = vmatprep.subr.bf16.mxu0 0
  %1277 = vmatpush1.bf16.xpose.msra.mxu0 %v1261
  %1278 = vmatprep.subr.bf16.mxu0 0
  %1279 = vmatpush1.bf16.xpose.msra.mxu0 %v1258
  %1280 = vmatprep.subr.bf16.mxu0 0
  %1281 = vmatpush1.bf16.xpose.msra.mxu0 %v1255
  %1282 = vmatprep.subr.bf16.mxu0 0
  %1283 = vmatpush2.bf16.xpose.msra.mxu0 0
  %1284 = vmatprep.subr.bf16.mxu0 0
  %1285 = vmatpush2.bf16.xpose.msra.mxu0 0
  %1286 = vmatprep.subr.bf16.mxu0 0
  %1287 = vmatpush2.bf16.xpose.msra.mxu0 0
  %1288 = vmatprep.subr.bf16.mxu0 0
  %1289 = vmatpush2.bf16.xpose.msra.mxu0 0
  %1290 = vmatprep.subr.bf16.mxu0 0
  %1291 = vmatpush2.bf16.xpose.msra.mxu0 0
  %1292 = vmatprep.subr.bf16.mxu0 0
  %1293 = vmatpush2.bf16.xpose.msra.mxu0 0
  %1294 = vmatprep.subr.bf16.mxu0 0
  %1295 = vmatpush2.bf16.xpose.msra.mxu0 0
  %1296 = vmatprep.subr.bf16.mxu0 0
  %1297 = vmatpush2.bf16.xpose.msra.mxu0 0
  %1298 = vmatprep.mubr.bf16.mxu0 0
  %1299 = vmatmul.mubr.bf16.gmra.mxu0 %v1243
  %v1300 = vpop.f32.mrf.mxu0
  %v1301 = vadd.f32 0.0, %v1300
  %v1302 = vpop.f32.mrf.mxu0
  %v1303 = vpop.f32.mrf.mxu0
  %v1304 = vadd.f32 0.0, %v1303
  %v1305 = vpop.f32.mrf.mxu0
  %1306 = vmatprep.mubr.bf16.mxu0 0
  %1307 = vmatmul.mubr.bf16.gmra.mxu0 %v1246
  %v1308 = vpop.f32.mrf.mxu0
  %v1309 = vadd.f32 0.0, %v1308
  %v1310 = vpop.f32.mrf.mxu0
  %v1311 = vpop.f32.mrf.mxu0
  %v1312 = vadd.f32 0.0, %v1311
  %v1313 = vpop.f32.mrf.mxu0
  %1314 = vmatprep.mubr.bf16.mxu0 0
  %1315 = vmatmul.mubr.bf16.gmra.mxu0 %v1249
  %v1316 = vpop.f32.mrf.mxu0
  %v1317 = vadd.f32 0.0, %v1316
  %v1318 = vpop.f32.mrf.mxu0
  %v1319 = vpop.f32.mrf.mxu0
  %v1320 = vadd.f32 0.0, %v1319
  %v1321 = vpop.f32.mrf.mxu0
  %1322 = vmatprep.mubr.bf16.mxu0 0
  %1323 = vmatmul.mubr.bf16.gmra.mxu0 %v1252
  %v1324 = vpop.f32.mrf.mxu0
  %v1325 = vadd.f32 0.0, %v1324
  %v1326 = vpop.f32.mrf.mxu0
  %v1327 = vpop.f32.mrf.mxu0
  %v1328 = vadd.f32 0.0, %v1327
  %v1329 = vpop.f32.mrf.mxu0
  %1330 = vdwg.mxu0
  %v1331 = vsel %vm301, %v1301, -inf
  %1332 = vmax.xlane.f32.xlu0 %v1331
  %v1333 = vpop.xlane.xlu0 %1332
  %v1334 = vsel %vm301, %v1304, -inf
  %1335 = vmax.xlane.f32.xlu0 %v1334
  %v1336 = vpop.xlane.xlu0 %1335
  %v1337 = vsel %vm301, %v1309, -inf
  %1338 = vmax.xlane.f32.xlu0 %v1337
  %v1339 = vpop.xlane.xlu0 %1338
  %v1340 = vsel %vm301, %v1312, -inf
  %1341 = vmax.xlane.f32.xlu0 %v1340
  %v1342 = vpop.xlane.xlu0 %1341
  %v1343 = vsel %vm301, %v1317, -inf
  %1344 = vmax.xlane.f32.xlu0 %v1343
  %v1345 = vpop.xlane.xlu0 %1344
  %v1346 = vsel %vm301, %v1320, -inf
  %1347 = vmax.xlane.f32.xlu0 %v1346
  %v1348 = vpop.xlane.xlu0 %1347
  %v1349 = vsel %vm301, %v1325, -inf
  %1350 = vmax.xlane.f32.xlu0 %v1349
  %v1351 = vpop.xlane.xlu0 %1350
  %v1352 = vsel %vm301, %v1328, -inf
  %1353 = vmax.xlane.f32.xlu0 %v1352
  %v1354 = vpop.xlane.xlu0 %1353
  %v1355 = vsub.f32 %v1301, %v1333
  %v1356 = vsub.f32 %v1304, %v1336
  %v1357 = vsub.f32 %v1309, %v1339
  %v1358 = vsub.f32 %v1312, %v1342
  %v1359 = vsub.f32 %v1317, %v1345
  %v1360 = vsub.f32 %v1320, %v1348
  %v1361 = vsub.f32 %v1325, %v1351
  %v1362 = vsub.f32 %v1328, %v1354
  %v1363 = vmul.f32 %v1355, 1.442695
  %v1364 = vpow.pop %v1363
  %v1365 = vmul.f32 %v1356, 1.442695
  %v1366 = vpow.pop %v1365
  %v1367 = vmul.f32 %v1357, 1.442695
  %v1368 = vpow.pop %v1367
  %v1369 = vmul.f32 %v1358, 1.442695
  %v1370 = vpow.pop %v1369
  %v1371 = vmul.f32 %v1359, 1.442695
  %v1372 = vpow.pop %v1371
  %v1373 = vmul.f32 %v1360, 1.442695
  %v1374 = vpow.pop %v1373
  %v1375 = vmul.f32 %v1361, 1.442695
  %v1376 = vpow.pop %v1375
  %v1377 = vmul.f32 %v1362, 1.442695
  %v1378 = vpow.pop %v1377
  %v1379 = vsel %vm301, %v1364, 0.0
  %1380 = vadd.xlane.f32.xlu0 %v1379
  %v1381 = vpop.xlane.xlu0 %1380
  %v1382 = vsel %vm301, %v1366, 0.0
  %1383 = vadd.xlane.f32.xlu0 %v1382
  %v1384 = vpop.xlane.xlu0 %1383
  %v1385 = vsel %vm301, %v1368, 0.0
  %1386 = vadd.xlane.f32.xlu0 %v1385
  %v1387 = vpop.xlane.xlu0 %1386
  %v1388 = vsel %vm301, %v1370, 0.0
  %1389 = vadd.xlane.f32.xlu0 %v1388
  %v1390 = vpop.xlane.xlu0 %1389
  %v1391 = vsel %vm301, %v1372, 0.0
  %1392 = vadd.xlane.f32.xlu0 %v1391
  %v1393 = vpop.xlane.xlu0 %1392
  %v1394 = vsel %vm301, %v1374, 0.0
  %1395 = vadd.xlane.f32.xlu0 %v1394
  %v1396 = vpop.xlane.xlu0 %1395
  %v1397 = vsel %vm301, %v1376, 0.0
  %1398 = vadd.xlane.f32.xlu0 %v1397
  %v1399 = vpop.xlane.xlu0 %1398
  %v1400 = vsel %vm301, %v1378, 0.0
  %1401 = vadd.xlane.f32.xlu0 %v1400
  %v1402 = vpop.xlane.xlu0 %1401
  %v1403 = vrcp.pop %v1381
  %v1404 = vmul.f32 %v1364, %v1403
  %v1405 = vrcp.pop %v1384
  %v1406 = vmul.f32 %v1366, %v1405
  %v1407 = vrcp.pop %v1387
  %v1408 = vmul.f32 %v1368, %v1407
  %v1409 = vrcp.pop %v1390
  %v1410 = vmul.f32 %v1370, %v1409
  %v1411 = vrcp.pop %v1393
  %v1412 = vmul.f32 %v1372, %v1411
  %v1413 = vrcp.pop %v1396
  %v1414 = vmul.f32 %v1374, %v1413
  %v1415 = vrcp.pop %v1399
  %v1416 = vmul.f32 %v1376, %v1415
  %v1417 = vrcp.pop %v1402
  %v1418 = vmul.f32 %v1378, %v1417
  %v1419 = vpack.c.bf16 %v1406, %v1404
  %v1420 = vpack.c.bf16 %v1410, %v1408
  %v1421 = vpack.c.bf16 %v1414, %v1412
  %v1422 = vpack.c.bf16 %v1418, %v1416
  %1423 = vrot.lane.b32.xlu0 %v194, 56
  %v1424 = vpop.permute.xlu0 %1423
  %1425 = vrot.lane.b32.xlu0 %v195, 56
  %v1426 = vpop.permute.xlu0 %1425
  %1427 = vrot.lane.b32.xlu0 %v196, 56
  %v1428 = vpop.permute.xlu0 %1427
  %1429 = vrot.lane.b32.xlu0 %v197, 56
  %v1430 = vpop.permute.xlu0 %1429
  %v1436 = vsel %vm301, %v1419, 0
  %v1439 = vsel %vm301, %v1420, 0
  %v1442 = vsel %vm301, %v1421, 0
  %v1445 = vsel %vm301, %v1422, 0
  %1447 = vmatprep.subr.bf16.mxu0 0
  %1448 = vmatpush1.bf16.msra.mxu0 0
  %1449 = vmatprep.subr.bf16.mxu0 0
  %1450 = vmatpush1.bf16.msra.mxu0 0
  %1451 = vmatprep.subr.bf16.mxu0 0
  %1452 = vmatpush1.bf16.msra.mxu0 0
  %1453 = vmatprep.subr.bf16.mxu0 0
  %1454 = vmatpush1.bf16.msra.mxu0 0
  %1455 = vmatprep.subr.bf16.mxu0 0
  %1456 = vmatpush1.bf16.msra.mxu0 %v1430
  %1457 = vmatprep.subr.bf16.mxu0 0
  %1458 = vmatpush1.bf16.msra.mxu0 %v1428
  %1459 = vmatprep.subr.bf16.mxu0 0
  %1460 = vmatpush1.bf16.msra.mxu0 %v1426
  %1461 = vmatprep.subr.bf16.mxu0 0
  %1462 = vmatpush1.bf16.msra.mxu0 %v1424
  %1463 = vmatprep.subr.bf16.mxu0 0
  %1464 = vmatpush2.bf16.msra.mxu0 0
  %1465 = vmatprep.subr.bf16.mxu0 0
  %1466 = vmatpush2.bf16.msra.mxu0 0
  %1467 = vmatprep.subr.bf16.mxu0 0
  %1468 = vmatpush2.bf16.msra.mxu0 0
  %1469 = vmatprep.subr.bf16.mxu0 0
  %1470 = vmatpush2.bf16.msra.mxu0 0
  %1471 = vmatprep.subr.bf16.mxu0 0
  %1472 = vmatpush2.bf16.msra.mxu0 0
  %1473 = vmatprep.subr.bf16.mxu0 0
  %1474 = vmatpush2.bf16.msra.mxu0 0
  %1475 = vmatprep.subr.bf16.mxu0 0
  %1476 = vmatpush2.bf16.msra.mxu0 0
  %1477 = vmatprep.subr.bf16.mxu0 0
  %1478 = vmatpush2.bf16.msra.mxu0 0
  %1479 = vmatprep.mubr.bf16.mxu0 0
  %1480 = vmatmul.mubr.bf16.gmra.mxu0 %v1436
  %v1481 = vpop.f32.mrf.mxu0
  %v1482 = vadd.f32 0.0, %v1481
  %v1483 = vpop.f32.mrf.mxu0
  %v1484 = vpop.f32.mrf.mxu0
  %v1485 = vadd.f32 0.0, %v1484
  %v1486 = vpop.f32.mrf.mxu0
  %1487 = vmatprep.mubr.bf16.mxu0 0
  %1488 = vmatmul.mubr.bf16.gmra.mxu0 %v1439
  %v1489 = vpop.f32.mrf.mxu0
  %v1490 = vadd.f32 0.0, %v1489
  %v1491 = vpop.f32.mrf.mxu0
  %v1492 = vpop.f32.mrf.mxu0
  %v1493 = vadd.f32 0.0, %v1492
  %v1494 = vpop.f32.mrf.mxu0
  %1495 = vmatprep.mubr.bf16.mxu0 0
  %1496 = vmatmul.mubr.bf16.gmra.mxu0 %v1442
  %v1497 = vpop.f32.mrf.mxu0
  %v1498 = vadd.f32 0.0, %v1497
  %v1499 = vpop.f32.mrf.mxu0
  %v1500 = vpop.f32.mrf.mxu0
  %v1501 = vadd.f32 0.0, %v1500
  %v1502 = vpop.f32.mrf.mxu0
  %1503 = vmatprep.mubr.bf16.mxu0 0
  %1504 = vmatmul.mubr.bf16.gmra.mxu0 %v1445
  %v1505 = vpop.f32.mrf.mxu0
  %v1506 = vadd.f32 0.0, %v1505
  %v1507 = vpop.f32.mrf.mxu0
  %v1508 = vpop.f32.mrf.mxu0
  %v1509 = vadd.f32 0.0, %v1508
  %v1510 = vpop.f32.mrf.mxu0
  %1511 = vdwg.mxu0
  %v1512 = vpack.c.bf16 %v1485, %v1482
  %v1513 = vpack.c.bf16 %v1493, %v1490
  %v1514 = vpack.c.bf16 %v1501, %v1498
  %v1515 = vpack.c.bf16 %v1509, %v1506
  %v1517 = vsel %vm211, %v1512, 0
  %v1520 = vsel %vm211, %v1513, 0
  %v1523 = vsel %vm211, %v1514, 0
  %v1526 = vsel %vm211, %v1515, 0
  %1528 = vmatprep.subr.bf16.mxu0 0
  %1529 = vmatpush1.bf16.msra.mxu0 0
  %1530 = vmatprep.subr.bf16.mxu0 0
  %1531 = vmatpush1.bf16.msra.mxu0 0
  %1532 = vmatprep.subr.bf16.mxu0 0
  %1533 = vmatpush1.bf16.msra.mxu0 0
  %1534 = vmatprep.subr.bf16.mxu0 0
  %1535 = vmatpush1.bf16.msra.mxu0 0
  %1536 = vmatprep.subr.bf16.mxu0 0
  %1537 = vmatpush1.bf16.msra.mxu0 0
  %1538 = vmatprep.subr.bf16.mxu0 0
  %1539 = vmatpush1.bf16.msra.mxu0 0
  %1540 = vmatprep.subr.bf16.mxu0 0
  %1541 = vmatpush1.bf16.msra.mxu0 0
  %1542 = vmatprep.subr.bf16.mxu0 0
  %1543 = vmatpush1.bf16.msra.mxu0 %v1079
  %1544 = vmatprep.subr.bf16.mxu0 0
  %1545 = vmatpush2.bf16.msra.mxu0 0
  %1546 = vmatprep.subr.bf16.mxu0 0
  %1547 = vmatpush2.bf16.msra.mxu0 0
  %1548 = vmatprep.subr.bf16.mxu0 0
  %1549 = vmatpush2.bf16.msra.mxu0 0
  %1550 = vmatprep.subr.bf16.mxu0 0
  %1551 = vmatpush2.bf16.msra.mxu0 0
  %1552 = vmatprep.subr.bf16.mxu0 0
  %1553 = vmatpush2.bf16.msra.mxu0 0
  %1554 = vmatprep.subr.bf16.mxu0 0
  %1555 = vmatpush2.bf16.msra.mxu0 0
  %1556 = vmatprep.subr.bf16.mxu0 0
  %1557 = vmatpush2.bf16.msra.mxu0 0
  %1558 = vmatprep.subr.bf16.mxu0 0
  %1559 = vmatpush2.bf16.msra.mxu0 0
  %1560 = vmatprep.mubr.bf16.mxu0 0
  %1561 = vmatmul.mubr.bf16.gmra.mxu0 %v1517
  %v1562 = vpop.f32.mrf.mxu0
  %v1563 = vadd.f32 0.0, %v1562
  %v1564 = vpop.f32.mrf.mxu0
  %v1565 = vpop.f32.mrf.mxu0
  %v1566 = vadd.f32 0.0, %v1565
  %v1567 = vpop.f32.mrf.mxu0
  %1568 = vmatprep.mubr.bf16.mxu0 0
  %1569 = vmatmul.mubr.bf16.gmra.mxu0 %v1520
  %v1570 = vpop.f32.mrf.mxu0
  %v1571 = vadd.f32 0.0, %v1570
  %v1572 = vpop.f32.mrf.mxu0
  %v1573 = vpop.f32.mrf.mxu0
  %v1574 = vadd.f32 0.0, %v1573
  %v1575 = vpop.f32.mrf.mxu0
  %1576 = vmatprep.mubr.bf16.mxu0 0
  %1577 = vmatmul.mubr.bf16.gmra.mxu0 %v1523
  %v1578 = vpop.f32.mrf.mxu0
  %v1579 = vadd.f32 0.0, %v1578
  %v1580 = vpop.f32.mrf.mxu0
  %v1581 = vpop.f32.mrf.mxu0
  %v1582 = vadd.f32 0.0, %v1581
  %v1583 = vpop.f32.mrf.mxu0
  %1584 = vmatprep.mubr.bf16.mxu0 0
  %1585 = vmatmul.mubr.bf16.gmra.mxu0 %v1526
  %v1586 = vpop.f32.mrf.mxu0
  %v1587 = vadd.f32 0.0, %v1586
  %v1588 = vpop.f32.mrf.mxu0
  %v1589 = vpop.f32.mrf.mxu0
  %v1590 = vadd.f32 0.0, %v1589
  %v1591 = vpop.f32.mrf.mxu0
  %1592 = vdwg.mxu0
  %v1594 = vsel %vm211, %v769, 0
  %v1597 = vsel %vm211, %v770, 0
  %v1600 = vsel %vm211, %v771, 0
  %v1603 = vsel %vm211, %v772, 0
  %1605 = vmatprep.subr.bf16.mxu0 0
  %1606 = vmatpush1.bf16.msra.mxu0 0
  %1607 = vmatprep.subr.bf16.mxu0 0
  %1608 = vmatpush1.bf16.msra.mxu0 0
  %1609 = vmatprep.subr.bf16.mxu0 0
  %1610 = vmatpush1.bf16.msra.mxu0 0
  %1611 = vmatprep.subr.bf16.mxu0 0
  %1612 = vmatpush1.bf16.msra.mxu0 0
  %1613 = vmatprep.subr.bf16.mxu0 0
  %1614 = vmatpush1.bf16.msra.mxu0 0
  %1615 = vmatprep.subr.bf16.mxu0 0
  %1616 = vmatpush1.bf16.msra.mxu0 0
  %1617 = vmatprep.subr.bf16.mxu0 0
  %1618 = vmatpush1.bf16.msra.mxu0 0
  %1619 = vmatprep.subr.bf16.mxu0 0
  %1620 = vmatpush1.bf16.msra.mxu0 %v1159
  %1621 = vmatprep.subr.bf16.mxu0 0
  %1622 = vmatpush2.bf16.msra.mxu0 0
  %1623 = vmatprep.subr.bf16.mxu0 0
  %1624 = vmatpush2.bf16.msra.mxu0 0
  %1625 = vmatprep.subr.bf16.mxu0 0
  %1626 = vmatpush2.bf16.msra.mxu0 0
  %1627 = vmatprep.subr.bf16.mxu0 0
  %1628 = vmatpush2.bf16.msra.mxu0 0
  %1629 = vmatprep.subr.bf16.mxu0 0
  %1630 = vmatpush2.bf16.msra.mxu0 0
  %1631 = vmatprep.subr.bf16.mxu0 0
  %1632 = vmatpush2.bf16.msra.mxu0 0
  %1633 = vmatprep.subr.bf16.mxu0 0
  %1634 = vmatpush2.bf16.msra.mxu0 0
  %1635 = vmatprep.subr.bf16.mxu0 0
  %1636 = vmatpush2.bf16.msra.mxu0 0
  %1637 = vmatprep.mubr.bf16.mxu0 0
  %1638 = vmatmul.mubr.bf16.gmra.mxu0 %v1594
  %v1639 = vpop.f32.mrf.mxu0
  %v1640 = vadd.f32 %v1563, %v1639
  %v1641 = vpop.f32.mrf.mxu0
  %v1642 = vpop.f32.mrf.mxu0
  %v1643 = vadd.f32 %v1566, %v1642
  %v1644 = vpop.f32.mrf.mxu0
  %1645 = vmatprep.mubr.bf16.mxu0 0
  %1646 = vmatmul.mubr.bf16.gmra.mxu0 %v1597
  %v1647 = vpop.f32.mrf.mxu0
  %v1648 = vadd.f32 %v1571, %v1647
  %v1649 = vpop.f32.mrf.mxu0
  %v1650 = vpop.f32.mrf.mxu0
  %v1651 = vadd.f32 %v1574, %v1650
  %v1652 = vpop.f32.mrf.mxu0
  %1653 = vmatprep.mubr.bf16.mxu0 0
  %1654 = vmatmul.mubr.bf16.gmra.mxu0 %v1600
  %v1655 = vpop.f32.mrf.mxu0
  %v1656 = vadd.f32 %v1579, %v1655
  %v1657 = vpop.f32.mrf.mxu0
  %v1658 = vpop.f32.mrf.mxu0
  %v1659 = vadd.f32 %v1582, %v1658
  %v1660 = vpop.f32.mrf.mxu0
  %1661 = vmatprep.mubr.bf16.mxu0 0
  %1662 = vmatmul.mubr.bf16.gmra.mxu0 %v1603
  %v1663 = vpop.f32.mrf.mxu0
  %v1664 = vadd.f32 %v1587, %v1663
  %v1665 = vpop.f32.mrf.mxu0
  %v1666 = vpop.f32.mrf.mxu0
  %v1667 = vadd.f32 %v1590, %v1666
  %v1668 = vpop.f32.mrf.mxu0
  %1669 = vdwg.mxu0
  %s1670 = scalar_lea.vmem %s3, 8
  %v1671 = vld [vmem:[%s1670] sm:$0xf]
  %1672 = vrot.lane.b32.xlu0 %v190, 112
  %v1673 = vpop.permute.xlu0 %1672
  %1674 = vrot.lane.b32.xlu0 %v191, 112
  %v1675 = vpop.permute.xlu0 %1674
  %1676 = vrot.lane.b32.xlu0 %v192, 112
  %v1677 = vpop.permute.xlu0 %1676
  %1678 = vrot.lane.b32.xlu0 %v193, 112
  %v1679 = vpop.permute.xlu0 %1678
  %1680 = vrot.lane.b32.xlu0 %v190, 80
  %v1681 = vpop.permute.xlu0 %1680
  %1682 = vrot.lane.b32.xlu0 %v191, 80
  %v1683 = vpop.permute.xlu0 %1682
  %1684 = vrot.lane.b32.xlu0 %v192, 80
  %v1685 = vpop.permute.xlu0 %1684
  %1686 = vrot.lane.b32.xlu0 %v193, 80
  %v1687 = vpop.permute.xlu0 %1686
  %v1689 = vsel %vm211, %v1673, 0
  %v1692 = vsel %vm211, %v1675, 0
  %v1695 = vsel %vm211, %v1677, 0
  %v1698 = vsel %vm211, %v1679, 0
  %v1701 = vsel %vm211, %v1681, 0
  %v1704 = vsel %vm211, %v1683, 0
  %v1707 = vsel %vm211, %v1685, 0
  %v1710 = vsel %vm211, %v1687, 0
  %1712 = vmatprep.subr.bf16.mxu0 0
  %1713 = vmatpush1.bf16.xpose.msra.mxu0 0
  %1714 = vmatprep.subr.bf16.mxu0 0
  %1715 = vmatpush1.bf16.xpose.msra.mxu0 0
  %1716 = vmatprep.subr.bf16.mxu0 0
  %1717 = vmatpush1.bf16.xpose.msra.mxu0 0
  %1718 = vmatprep.subr.bf16.mxu0 0
  %1719 = vmatpush1.bf16.xpose.msra.mxu0 0
  %1720 = vmatprep.subr.bf16.mxu0 0
  %1721 = vmatpush1.bf16.xpose.msra.mxu0 %v1710
  %1722 = vmatprep.subr.bf16.mxu0 0
  %1723 = vmatpush1.bf16.xpose.msra.mxu0 %v1707
  %1724 = vmatprep.subr.bf16.mxu0 0
  %1725 = vmatpush1.bf16.xpose.msra.mxu0 %v1704
  %1726 = vmatprep.subr.bf16.mxu0 0
  %1727 = vmatpush1.bf16.xpose.msra.mxu0 %v1701
  %1728 = vmatprep.subr.bf16.mxu0 0
  %1729 = vmatpush2.bf16.xpose.msra.mxu0 0
  %1730 = vmatprep.subr.bf16.mxu0 0
  %1731 = vmatpush2.bf16.xpose.msra.mxu0 0
  %1732 = vmatprep.subr.bf16.mxu0 0
  %1733 = vmatpush2.bf16.xpose.msra.mxu0 0
  %1734 = vmatprep.subr.bf16.mxu0 0
  %1735 = vmatpush2.bf16.xpose.msra.mxu0 0
  %1736 = vmatprep.subr.bf16.mxu0 0
  %1737 = vmatpush2.bf16.xpose.msra.mxu0 0
  %1738 = vmatprep.subr.bf16.mxu0 0
  %1739 = vmatpush2.bf16.xpose.msra.mxu0 0
  %1740 = vmatprep.subr.bf16.mxu0 0
  %1741 = vmatpush2.bf16.xpose.msra.mxu0 0
  %1742 = vmatprep.subr.bf16.mxu0 0
  %1743 = vmatpush2.bf16.xpose.msra.mxu0 0
  %1744 = vmatprep.mubr.bf16.mxu0 0
  %1745 = vmatmul.mubr.bf16.gmra.mxu0 %v1689
  %v1746 = vpop.f32.mrf.mxu0
  %v1747 = vadd.f32 0.0, %v1746
  %v1748 = vpop.f32.mrf.mxu0
  %v1749 = vpop.f32.mrf.mxu0
  %v1750 = vadd.f32 0.0, %v1749
  %v1751 = vpop.f32.mrf.mxu0
  %1752 = vmatprep.mubr.bf16.mxu0 0
  %1753 = vmatmul.mubr.bf16.gmra.mxu0 %v1692
  %v1754 = vpop.f32.mrf.mxu0
  %v1755 = vadd.f32 0.0, %v1754
  %v1756 = vpop.f32.mrf.mxu0
  %v1757 = vpop.f32.mrf.mxu0
  %v1758 = vadd.f32 0.0, %v1757
  %v1759 = vpop.f32.mrf.mxu0
  %1760 = vmatprep.mubr.bf16.mxu0 0
  %1761 = vmatmul.mubr.bf16.gmra.mxu0 %v1695
  %v1762 = vpop.f32.mrf.mxu0
  %v1763 = vadd.f32 0.0, %v1762
  %v1764 = vpop.f32.mrf.mxu0
  %v1765 = vpop.f32.mrf.mxu0
  %v1766 = vadd.f32 0.0, %v1765
  %v1767 = vpop.f32.mrf.mxu0
  %1768 = vmatprep.mubr.bf16.mxu0 0
  %1769 = vmatmul.mubr.bf16.gmra.mxu0 %v1698
  %v1770 = vpop.f32.mrf.mxu0
  %v1771 = vadd.f32 0.0, %v1770
  %v1772 = vpop.f32.mrf.mxu0
  %v1773 = vpop.f32.mrf.mxu0
  %v1774 = vadd.f32 0.0, %v1773
  %v1775 = vpop.f32.mrf.mxu0
  %1776 = vdwg.mxu0
  %v1777 = vsel %vm301, %v1747, -inf
  %1778 = vmax.xlane.f32.xlu0 %v1777
  %v1779 = vpop.xlane.xlu0 %1778
  %v1780 = vsel %vm301, %v1750, -inf
  %1781 = vmax.xlane.f32.xlu0 %v1780
  %v1782 = vpop.xlane.xlu0 %1781
  %v1783 = vsel %vm301, %v1755, -inf
  %1784 = vmax.xlane.f32.xlu0 %v1783
  %v1785 = vpop.xlane.xlu0 %1784
  %v1786 = vsel %vm301, %v1758, -inf
  %1787 = vmax.xlane.f32.xlu0 %v1786
  %v1788 = vpop.xlane.xlu0 %1787
  %v1789 = vsel %vm301, %v1763, -inf
  %1790 = vmax.xlane.f32.xlu0 %v1789
  %v1791 = vpop.xlane.xlu0 %1790
  %v1792 = vsel %vm301, %v1766, -inf
  %1793 = vmax.xlane.f32.xlu0 %v1792
  %v1794 = vpop.xlane.xlu0 %1793
  %v1795 = vsel %vm301, %v1771, -inf
  %1796 = vmax.xlane.f32.xlu0 %v1795
  %v1797 = vpop.xlane.xlu0 %1796
  %v1798 = vsel %vm301, %v1774, -inf
  %1799 = vmax.xlane.f32.xlu0 %v1798
  %v1800 = vpop.xlane.xlu0 %1799
  %v1801 = vsub.f32 %v1747, %v1779
  %v1802 = vsub.f32 %v1750, %v1782
  %v1803 = vsub.f32 %v1755, %v1785
  %v1804 = vsub.f32 %v1758, %v1788
  %v1805 = vsub.f32 %v1763, %v1791
  %v1806 = vsub.f32 %v1766, %v1794
  %v1807 = vsub.f32 %v1771, %v1797
  %v1808 = vsub.f32 %v1774, %v1800
  %v1809 = vmul.f32 %v1801, 1.442695
  %v1810 = vpow.pop %v1809
  %v1811 = vmul.f32 %v1802, 1.442695
  %v1812 = vpow.pop %v1811
  %v1813 = vmul.f32 %v1803, 1.442695
  %v1814 = vpow.pop %v1813
  %v1815 = vmul.f32 %v1804, 1.442695
  %v1816 = vpow.pop %v1815
  %v1817 = vmul.f32 %v1805, 1.442695
  %v1818 = vpow.pop %v1817
  %v1819 = vmul.f32 %v1806, 1.442695
  %v1820 = vpow.pop %v1819
  %v1821 = vmul.f32 %v1807, 1.442695
  %v1822 = vpow.pop %v1821
  %v1823 = vmul.f32 %v1808, 1.442695
  %v1824 = vpow.pop %v1823
  %v1825 = vsel %vm301, %v1810, 0.0
  %1826 = vadd.xlane.f32.xlu0 %v1825
  %v1827 = vpop.xlane.xlu0 %1826
  %v1828 = vsel %vm301, %v1812, 0.0
  %1829 = vadd.xlane.f32.xlu0 %v1828
  %v1830 = vpop.xlane.xlu0 %1829
  %v1831 = vsel %vm301, %v1814, 0.0
  %1832 = vadd.xlane.f32.xlu0 %v1831
  %v1833 = vpop.xlane.xlu0 %1832
  %v1834 = vsel %vm301, %v1816, 0.0
  %1835 = vadd.xlane.f32.xlu0 %v1834
  %v1836 = vpop.xlane.xlu0 %1835
  %v1837 = vsel %vm301, %v1818, 0.0
  %1838 = vadd.xlane.f32.xlu0 %v1837
  %v1839 = vpop.xlane.xlu0 %1838
  %v1840 = vsel %vm301, %v1820, 0.0
  %1841 = vadd.xlane.f32.xlu0 %v1840
  %v1842 = vpop.xlane.xlu0 %1841
  %v1843 = vsel %vm301, %v1822, 0.0
  %1844 = vadd.xlane.f32.xlu0 %v1843
  %v1845 = vpop.xlane.xlu0 %1844
  %v1846 = vsel %vm301, %v1824, 0.0
  %1847 = vadd.xlane.f32.xlu0 %v1846
  %v1848 = vpop.xlane.xlu0 %1847
  %v1849 = vrcp.pop %v1827
  %v1850 = vmul.f32 %v1810, %v1849
  %v1851 = vrcp.pop %v1830
  %v1852 = vmul.f32 %v1812, %v1851
  %v1853 = vrcp.pop %v1833
  %v1854 = vmul.f32 %v1814, %v1853
  %v1855 = vrcp.pop %v1836
  %v1856 = vmul.f32 %v1816, %v1855
  %v1857 = vrcp.pop %v1839
  %v1858 = vmul.f32 %v1818, %v1857
  %v1859 = vrcp.pop %v1842
  %v1860 = vmul.f32 %v1820, %v1859
  %v1861 = vrcp.pop %v1845
  %v1862 = vmul.f32 %v1822, %v1861
  %v1863 = vrcp.pop %v1848
  %v1864 = vmul.f32 %v1824, %v1863
  %v1865 = vpack.c.bf16 %v1852, %v1850
  %v1866 = vpack.c.bf16 %v1856, %v1854
  %v1867 = vpack.c.bf16 %v1860, %v1858
  %v1868 = vpack.c.bf16 %v1864, %v1862
  %1869 = vrot.lane.b32.xlu0 %v190, 48
  %v1870 = vpop.permute.xlu0 %1869
  %1871 = vrot.lane.b32.xlu0 %v191, 48
  %v1872 = vpop.permute.xlu0 %1871
  %1873 = vrot.lane.b32.xlu0 %v192, 48
  %v1874 = vpop.permute.xlu0 %1873
  %1875 = vrot.lane.b32.xlu0 %v193, 48
  %v1876 = vpop.permute.xlu0 %1875
  %v1882 = vsel %vm301, %v1865, 0
  %v1885 = vsel %vm301, %v1866, 0
  %v1888 = vsel %vm301, %v1867, 0
  %v1891 = vsel %vm301, %v1868, 0
  %1893 = vmatprep.subr.bf16.mxu0 0
  %1894 = vmatpush1.bf16.msra.mxu0 0
  %1895 = vmatprep.subr.bf16.mxu0 0
  %1896 = vmatpush1.bf16.msra.mxu0 0
  %1897 = vmatprep.subr.bf16.mxu0 0
  %1898 = vmatpush1.bf16.msra.mxu0 0
  %1899 = vmatprep.subr.bf16.mxu0 0
  %1900 = vmatpush1.bf16.msra.mxu0 0
  %1901 = vmatprep.subr.bf16.mxu0 0
  %1902 = vmatpush1.bf16.msra.mxu0 %v1876
  %1903 = vmatprep.subr.bf16.mxu0 0
  %1904 = vmatpush1.bf16.msra.mxu0 %v1874
  %1905 = vmatprep.subr.bf16.mxu0 0
  %1906 = vmatpush1.bf16.msra.mxu0 %v1872
  %1907 = vmatprep.subr.bf16.mxu0 0
  %1908 = vmatpush1.bf16.msra.mxu0 %v1870
  %1909 = vmatprep.subr.bf16.mxu0 0
  %1910 = vmatpush2.bf16.msra.mxu0 0
  %1911 = vmatprep.subr.bf16.mxu0 0
  %1912 = vmatpush2.bf16.msra.mxu0 0
  %1913 = vmatprep.subr.bf16.mxu0 0
  %1914 = vmatpush2.bf16.msra.mxu0 0
  %1915 = vmatprep.subr.bf16.mxu0 0
  %1916 = vmatpush2.bf16.msra.mxu0 0
  %1917 = vmatprep.subr.bf16.mxu0 0
  %1918 = vmatpush2.bf16.msra.mxu0 0
  %1919 = vmatprep.subr.bf16.mxu0 0
  %1920 = vmatpush2.bf16.msra.mxu0 0
  %1921 = vmatprep.subr.bf16.mxu0 0
  %1922 = vmatpush2.bf16.msra.mxu0 0
  %1923 = vmatprep.subr.bf16.mxu0 0
  %1924 = vmatpush2.bf16.msra.mxu0 0
  %1925 = vmatprep.mubr.bf16.mxu0 0
  %1926 = vmatmul.mubr.bf16.gmra.mxu0 %v1882
  %v1927 = vpop.f32.mrf.mxu0
  %v1928 = vadd.f32 0.0, %v1927
  %v1929 = vpop.f32.mrf.mxu0
  %v1930 = vpop.f32.mrf.mxu0
  %v1931 = vadd.f32 0.0, %v1930
  %v1932 = vpop.f32.mrf.mxu0
  %1933 = vmatprep.mubr.bf16.mxu0 0
  %1934 = vmatmul.mubr.bf16.gmra.mxu0 %v1885
  %v1935 = vpop.f32.mrf.mxu0
  %v1936 = vadd.f32 0.0, %v1935
  %v1937 = vpop.f32.mrf.mxu0
  %v1938 = vpop.f32.mrf.mxu0
  %v1939 = vadd.f32 0.0, %v1938
  %v1940 = vpop.f32.mrf.mxu0
  %1941 = vmatprep.mubr.bf16.mxu0 0
  %1942 = vmatmul.mubr.bf16.gmra.mxu0 %v1888
  %v1943 = vpop.f32.mrf.mxu0
  %v1944 = vadd.f32 0.0, %v1943
  %v1945 = vpop.f32.mrf.mxu0
  %v1946 = vpop.f32.mrf.mxu0
  %v1947 = vadd.f32 0.0, %v1946
  %v1948 = vpop.f32.mrf.mxu0
  %1949 = vmatprep.mubr.bf16.mxu0 0
  %1950 = vmatmul.mubr.bf16.gmra.mxu0 %v1891
  %v1951 = vpop.f32.mrf.mxu0
  %v1952 = vadd.f32 0.0, %v1951
  %v1953 = vpop.f32.mrf.mxu0
  %v1954 = vpop.f32.mrf.mxu0
  %v1955 = vadd.f32 0.0, %v1954
  %v1956 = vpop.f32.mrf.mxu0
  %1957 = vdwg.mxu0
  %v1958 = vpack.c.bf16 %v1931, %v1928
  %v1959 = vpack.c.bf16 %v1939, %v1936
  %v1960 = vpack.c.bf16 %v1947, %v1944
  %v1961 = vpack.c.bf16 %v1955, %v1952
  %v1963 = vsel %vm211, %v1958, 0
  %v1966 = vsel %vm211, %v1959, 0
  %v1969 = vsel %vm211, %v1960, 0
  %v1972 = vsel %vm211, %v1961, 0
  %v1975 = vsel %vm1077, %v1671, 0
  %1977 = vmatprep.subr.bf16.mxu0 0
  %1978 = vmatpush1.bf16.msra.mxu0 0
  %1979 = vmatprep.subr.bf16.mxu0 0
  %1980 = vmatpush1.bf16.msra.mxu0 0
  %1981 = vmatprep.subr.bf16.mxu0 0
  %1982 = vmatpush1.bf16.msra.mxu0 0
  %1983 = vmatprep.subr.bf16.mxu0 0
  %1984 = vmatpush1.bf16.msra.mxu0 0
  %1985 = vmatprep.subr.bf16.mxu0 0
  %1986 = vmatpush1.bf16.msra.mxu0 0
  %1987 = vmatprep.subr.bf16.mxu0 0
  %1988 = vmatpush1.bf16.msra.mxu0 0
  %1989 = vmatprep.subr.bf16.mxu0 0
  %1990 = vmatpush1.bf16.msra.mxu0 0
  %1991 = vmatprep.subr.bf16.mxu0 0
  %1992 = vmatpush1.bf16.msra.mxu0 %v1975
  %1993 = vmatprep.subr.bf16.mxu0 0
  %1994 = vmatpush2.bf16.msra.mxu0 0
  %1995 = vmatprep.subr.bf16.mxu0 0
  %1996 = vmatpush2.bf16.msra.mxu0 0
  %1997 = vmatprep.subr.bf16.mxu0 0
  %1998 = vmatpush2.bf16.msra.mxu0 0
  %1999 = vmatprep.subr.bf16.mxu0 0
  %2000 = vmatpush2.bf16.msra.mxu0 0
  %2001 = vmatprep.subr.bf16.mxu0 0
  %2002 = vmatpush2.bf16.msra.mxu0 0
  %2003 = vmatprep.subr.bf16.mxu0 0
  %2004 = vmatpush2.bf16.msra.mxu0 0
  %2005 = vmatprep.subr.bf16.mxu0 0
  %2006 = vmatpush2.bf16.msra.mxu0 0
  %2007 = vmatprep.subr.bf16.mxu0 0
  %2008 = vmatpush2.bf16.msra.mxu0 0
  %2009 = vmatprep.mubr.bf16.mxu0 0
  %2010 = vmatmul.mubr.bf16.gmra.mxu0 %v1963
  %v2011 = vpop.f32.mrf.mxu0
  %v2012 = vadd.f32 0.0, %v2011
  %v2013 = vpop.f32.mrf.mxu0
  %v2014 = vpop.f32.mrf.mxu0
  %v2015 = vadd.f32 0.0, %v2014
  %v2016 = vpop.f32.mrf.mxu0
  %2017 = vmatprep.mubr.bf16.mxu0 0
  %2018 = vmatmul.mubr.bf16.gmra.mxu0 %v1966
  %v2019 = vpop.f32.mrf.mxu0
  %v2020 = vadd.f32 0.0, %v2019
  %v2021 = vpop.f32.mrf.mxu0
  %v2022 = vpop.f32.mrf.mxu0
  %v2023 = vadd.f32 0.0, %v2022
  %v2024 = vpop.f32.mrf.mxu0
  %2025 = vmatprep.mubr.bf16.mxu0 0
  %2026 = vmatmul.mubr.bf16.gmra.mxu0 %v1969
  %v2027 = vpop.f32.mrf.mxu0
  %v2028 = vadd.f32 0.0, %v2027
  %v2029 = vpop.f32.mrf.mxu0
  %v2030 = vpop.f32.mrf.mxu0
  %v2031 = vadd.f32 0.0, %v2030
  %v2032 = vpop.f32.mrf.mxu0
  %2033 = vmatprep.mubr.bf16.mxu0 0
  %2034 = vmatmul.mubr.bf16.gmra.mxu0 %v1972
  %v2035 = vpop.f32.mrf.mxu0
  %v2036 = vadd.f32 0.0, %v2035
  %v2037 = vpop.f32.mrf.mxu0
  %v2038 = vpop.f32.mrf.mxu0
  %v2039 = vadd.f32 0.0, %v2038
  %v2040 = vpop.f32.mrf.mxu0
  %2041 = vdwg.mxu0
  %v2042 = vadd.f32 %v1196, %v2012
  %v2043 = vadd.f32 %v1199, %v2015
  %v2044 = vadd.f32 %v1204, %v2020
  %v2045 = vadd.f32 %v1207, %v2023
  %v2046 = vadd.f32 %v1212, %v2028
  %v2047 = vadd.f32 %v1215, %v2031
  %v2048 = vadd.f32 %v1220, %v2036
  %v2049 = vadd.f32 %v1223, %v2039
  %2050 = vrot.lane.b32.xlu0 %v194, 112
  %v2051 = vpop.permute.xlu0 %2050
  %2052 = vrot.lane.b32.xlu0 %v195, 112
  %v2053 = vpop.permute.xlu0 %2052
  %2054 = vrot.lane.b32.xlu0 %v196, 112
  %v2055 = vpop.permute.xlu0 %2054
  %2056 = vrot.lane.b32.xlu0 %v197, 112
  %v2057 = vpop.permute.xlu0 %2056
  %2058 = vrot.lane.b32.xlu0 %v194, 80
  %v2059 = vpop.permute.xlu0 %2058
  %2060 = vrot.lane.b32.xlu0 %v195, 80
  %v2061 = vpop.permute.xlu0 %2060
  %2062 = vrot.lane.b32.xlu0 %v196, 80
  %v2063 = vpop.permute.xlu0 %2062
  %2064 = vrot.lane.b32.xlu0 %v197, 80
  %v2065 = vpop.permute.xlu0 %2064
  %v2067 = vsel %vm211, %v2051, 0
  %v2070 = vsel %vm211, %v2053, 0
  %v2073 = vsel %vm211, %v2055, 0
  %v2076 = vsel %vm211, %v2057, 0
  %v2079 = vsel %vm211, %v2059, 0
  %v2082 = vsel %vm211, %v2061, 0
  %v2085 = vsel %vm211, %v2063, 0
  %v2088 = vsel %vm211, %v2065, 0
  %2090 = vmatprep.subr.bf16.mxu0 0
  %2091 = vmatpush1.bf16.xpose.msra.mxu0 0
  %2092 = vmatprep.subr.bf16.mxu0 0
  %2093 = vmatpush1.bf16.xpose.msra.mxu0 0
  %2094 = vmatprep.subr.bf16.mxu0 0
  %2095 = vmatpush1.bf16.xpose.msra.mxu0 0
  %2096 = vmatprep.subr.bf16.mxu0 0
  %2097 = vmatpush1.bf16.xpose.msra.mxu0 0
  %2098 = vmatprep.subr.bf16.mxu0 0
  %2099 = vmatpush1.bf16.xpose.msra.mxu0 %v2088
  %2100 = vmatprep.subr.bf16.mxu0 0
  %2101 = vmatpush1.bf16.xpose.msra.mxu0 %v2085
  %2102 = vmatprep.subr.bf16.mxu0 0
  %2103 = vmatpush1.bf16.xpose.msra.mxu0 %v2082
  %2104 = vmatprep.subr.bf16.mxu0 0
  %2105 = vmatpush1.bf16.xpose.msra.mxu0 %v2079
  %2106 = vmatprep.subr.bf16.mxu0 0
  %2107 = vmatpush2.bf16.xpose.msra.mxu0 0
  %2108 = vmatprep.subr.bf16.mxu0 0
  %2109 = vmatpush2.bf16.xpose.msra.mxu0 0
  %2110 = vmatprep.subr.bf16.mxu0 0
  %2111 = vmatpush2.bf16.xpose.msra.mxu0 0
  %2112 = vmatprep.subr.bf16.mxu0 0
  %2113 = vmatpush2.bf16.xpose.msra.mxu0 0
  %2114 = vmatprep.subr.bf16.mxu0 0
  %2115 = vmatpush2.bf16.xpose.msra.mxu0 0
  %2116 = vmatprep.subr.bf16.mxu0 0
  %2117 = vmatpush2.bf16.xpose.msra.mxu0 0
  %2118 = vmatprep.subr.bf16.mxu0 0
  %2119 = vmatpush2.bf16.xpose.msra.mxu0 0
  %2120 = vmatprep.subr.bf16.mxu0 0
  %2121 = vmatpush2.bf16.xpose.msra.mxu0 0
  %2122 = vmatprep.mubr.bf16.mxu0 0
  %2123 = vmatmul.mubr.bf16.gmra.mxu0 %v2067
  %v2124 = vpop.f32.mrf.mxu0
  %v2125 = vadd.f32 0.0, %v2124
  %v2126 = vpop.f32.mrf.mxu0
  %v2127 = vpop.f32.mrf.mxu0
  %v2128 = vadd.f32 0.0, %v2127
  %v2129 = vpop.f32.mrf.mxu0
  %2130 = vmatprep.mubr.bf16.mxu0 0
  %2131 = vmatmul.mubr.bf16.gmra.mxu0 %v2070
  %v2132 = vpop.f32.mrf.mxu0
  %v2133 = vadd.f32 0.0, %v2132
  %v2134 = vpop.f32.mrf.mxu0
  %v2135 = vpop.f32.mrf.mxu0
  %v2136 = vadd.f32 0.0, %v2135
  %v2137 = vpop.f32.mrf.mxu0
  %2138 = vmatprep.mubr.bf16.mxu0 0
  %2139 = vmatmul.mubr.bf16.gmra.mxu0 %v2073
  %v2140 = vpop.f32.mrf.mxu0
  %v2141 = vadd.f32 0.0, %v2140
  %v2142 = vpop.f32.mrf.mxu0
  %v2143 = vpop.f32.mrf.mxu0
  %v2144 = vadd.f32 0.0, %v2143
  %v2145 = vpop.f32.mrf.mxu0
  %2146 = vmatprep.mubr.bf16.mxu0 0
  %2147 = vmatmul.mubr.bf16.gmra.mxu0 %v2076
  %v2148 = vpop.f32.mrf.mxu0
  %v2149 = vadd.f32 0.0, %v2148
  %v2150 = vpop.f32.mrf.mxu0
  %v2151 = vpop.f32.mrf.mxu0
  %v2152 = vadd.f32 0.0, %v2151
  %v2153 = vpop.f32.mrf.mxu0
  %2154 = vdwg.mxu0
  %v2155 = vsel %vm301, %v2125, -inf
  %2156 = vmax.xlane.f32.xlu0 %v2155
  %v2157 = vpop.xlane.xlu0 %2156
  %v2158 = vsel %vm301, %v2128, -inf
  %2159 = vmax.xlane.f32.xlu0 %v2158
  %v2160 = vpop.xlane.xlu0 %2159
  %v2161 = vsel %vm301, %v2133, -inf
  %2162 = vmax.xlane.f32.xlu0 %v2161
  %v2163 = vpop.xlane.xlu0 %2162
  %v2164 = vsel %vm301, %v2136, -inf
  %2165 = vmax.xlane.f32.xlu0 %v2164
  %v2166 = vpop.xlane.xlu0 %2165
  %v2167 = vsel %vm301, %v2141, -inf
  %2168 = vmax.xlane.f32.xlu0 %v2167
  %v2169 = vpop.xlane.xlu0 %2168
  %v2170 = vsel %vm301, %v2144, -inf
  %2171 = vmax.xlane.f32.xlu0 %v2170
  %v2172 = vpop.xlane.xlu0 %2171
  %v2173 = vsel %vm301, %v2149, -inf
  %2174 = vmax.xlane.f32.xlu0 %v2173
  %v2175 = vpop.xlane.xlu0 %2174
  %v2176 = vsel %vm301, %v2152, -inf
  %2177 = vmax.xlane.f32.xlu0 %v2176
  %v2178 = vpop.xlane.xlu0 %2177
  %v2179 = vsub.f32 %v2125, %v2157
  %v2180 = vsub.f32 %v2128, %v2160
  %v2181 = vsub.f32 %v2133, %v2163
  %v2182 = vsub.f32 %v2136, %v2166
  %v2183 = vsub.f32 %v2141, %v2169
  %v2184 = vsub.f32 %v2144, %v2172
  %v2185 = vsub.f32 %v2149, %v2175
  %v2186 = vsub.f32 %v2152, %v2178
  %v2187 = vmul.f32 %v2179, 1.442695
  %v2188 = vpow.pop %v2187
  %v2189 = vmul.f32 %v2180, 1.442695
  %v2190 = vpow.pop %v2189
  %v2191 = vmul.f32 %v2181, 1.442695
  %v2192 = vpow.pop %v2191
  %v2193 = vmul.f32 %v2182, 1.442695
  %v2194 = vpow.pop %v2193
  %v2195 = vmul.f32 %v2183, 1.442695
  %v2196 = vpow.pop %v2195
  %v2197 = vmul.f32 %v2184, 1.442695
  %v2198 = vpow.pop %v2197
  %v2199 = vmul.f32 %v2185, 1.442695
  %v2200 = vpow.pop %v2199
  %v2201 = vmul.f32 %v2186, 1.442695
  %v2202 = vpow.pop %v2201
  %v2203 = vsel %vm301, %v2188, 0.0
  %2204 = vadd.xlane.f32.xlu0 %v2203
  %v2205 = vpop.xlane.xlu0 %2204
  %v2206 = vsel %vm301, %v2190, 0.0
  %2207 = vadd.xlane.f32.xlu0 %v2206
  %v2208 = vpop.xlane.xlu0 %2207
  %v2209 = vsel %vm301, %v2192, 0.0
  %2210 = vadd.xlane.f32.xlu0 %v2209
  %v2211 = vpop.xlane.xlu0 %2210
  %v2212 = vsel %vm301, %v2194, 0.0
  %2213 = vadd.xlane.f32.xlu0 %v2212
  %v2214 = vpop.xlane.xlu0 %2213
  %v2215 = vsel %vm301, %v2196, 0.0
  %2216 = vadd.xlane.f32.xlu0 %v2215
  %v2217 = vpop.xlane.xlu0 %2216
  %v2218 = vsel %vm301, %v2198, 0.0
  %2219 = vadd.xlane.f32.xlu0 %v2218
  %v2220 = vpop.xlane.xlu0 %2219
  %v2221 = vsel %vm301, %v2200, 0.0
  %2222 = vadd.xlane.f32.xlu0 %v2221
  %v2223 = vpop.xlane.xlu0 %2222
  %v2224 = vsel %vm301, %v2202, 0.0
  %2225 = vadd.xlane.f32.xlu0 %v2224
  %v2226 = vpop.xlane.xlu0 %2225
  %v2227 = vrcp.pop %v2205
  %v2228 = vmul.f32 %v2188, %v2227
  %v2229 = vrcp.pop %v2208
  %v2230 = vmul.f32 %v2190, %v2229
  %v2231 = vrcp.pop %v2211
  %v2232 = vmul.f32 %v2192, %v2231
  %v2233 = vrcp.pop %v2214
  %v2234 = vmul.f32 %v2194, %v2233
  %v2235 = vrcp.pop %v2217
  %v2236 = vmul.f32 %v2196, %v2235
  %v2237 = vrcp.pop %v2220
  %v2238 = vmul.f32 %v2198, %v2237
  %v2239 = vrcp.pop %v2223
  %v2240 = vmul.f32 %v2200, %v2239
  %v2241 = vrcp.pop %v2226
  %v2242 = vmul.f32 %v2202, %v2241
  %v2243 = vpack.c.bf16 %v2230, %v2228
  %v2244 = vpack.c.bf16 %v2234, %v2232
  %v2245 = vpack.c.bf16 %v2238, %v2236
  %v2246 = vpack.c.bf16 %v2242, %v2240
  %2247 = vrot.lane.b32.xlu0 %v194, 48
  %v2248 = vpop.permute.xlu0 %2247
  %2249 = vrot.lane.b32.xlu0 %v195, 48
  %v2250 = vpop.permute.xlu0 %2249
  %2251 = vrot.lane.b32.xlu0 %v196, 48
  %v2252 = vpop.permute.xlu0 %2251
  %2253 = vrot.lane.b32.xlu0 %v197, 48
  %v2254 = vpop.permute.xlu0 %2253
  %v2260 = vsel %vm301, %v2243, 0
  %v2263 = vsel %vm301, %v2244, 0
  %v2266 = vsel %vm301, %v2245, 0
  %v2269 = vsel %vm301, %v2246, 0
  %2271 = vmatprep.subr.bf16.mxu0 0
  %2272 = vmatpush1.bf16.msra.mxu0 0
  %2273 = vmatprep.subr.bf16.mxu0 0
  %2274 = vmatpush1.bf16.msra.mxu0 0
  %2275 = vmatprep.subr.bf16.mxu0 0
  %2276 = vmatpush1.bf16.msra.mxu0 0
  %2277 = vmatprep.subr.bf16.mxu0 0
  %2278 = vmatpush1.bf16.msra.mxu0 0
  %2279 = vmatprep.subr.bf16.mxu0 0
  %2280 = vmatpush1.bf16.msra.mxu0 %v2254
  %2281 = vmatprep.subr.bf16.mxu0 0
  %2282 = vmatpush1.bf16.msra.mxu0 %v2252
  %2283 = vmatprep.subr.bf16.mxu0 0
  %2284 = vmatpush1.bf16.msra.mxu0 %v2250
  %2285 = vmatprep.subr.bf16.mxu0 0
  %2286 = vmatpush1.bf16.msra.mxu0 %v2248
  %2287 = vmatprep.subr.bf16.mxu0 0
  %2288 = vmatpush2.bf16.msra.mxu0 0
  %2289 = vmatprep.subr.bf16.mxu0 0
  %2290 = vmatpush2.bf16.msra.mxu0 0
  %2291 = vmatprep.subr.bf16.mxu0 0
  %2292 = vmatpush2.bf16.msra.mxu0 0
  %2293 = vmatprep.subr.bf16.mxu0 0
  %2294 = vmatpush2.bf16.msra.mxu0 0
  %2295 = vmatprep.subr.bf16.mxu0 0
  %2296 = vmatpush2.bf16.msra.mxu0 0
  %2297 = vmatprep.subr.bf16.mxu0 0
  %2298 = vmatpush2.bf16.msra.mxu0 0
  %2299 = vmatprep.subr.bf16.mxu0 0
  %2300 = vmatpush2.bf16.msra.mxu0 0
  %2301 = vmatprep.subr.bf16.mxu0 0
  %2302 = vmatpush2.bf16.msra.mxu0 0
  %2303 = vmatprep.mubr.bf16.mxu0 0
  %2304 = vmatmul.mubr.bf16.gmra.mxu0 %v2260
  %v2305 = vpop.f32.mrf.mxu0
  %v2306 = vadd.f32 0.0, %v2305
  %v2307 = vpop.f32.mrf.mxu0
  %v2308 = vpop.f32.mrf.mxu0
  %v2309 = vadd.f32 0.0, %v2308
  %v2310 = vpop.f32.mrf.mxu0
  %2311 = vmatprep.mubr.bf16.mxu0 0
  %2312 = vmatmul.mubr.bf16.gmra.mxu0 %v2263
  %v2313 = vpop.f32.mrf.mxu0
  %v2314 = vadd.f32 0.0, %v2313
  %v2315 = vpop.f32.mrf.mxu0
  %v2316 = vpop.f32.mrf.mxu0
  %v2317 = vadd.f32 0.0, %v2316
  %v2318 = vpop.f32.mrf.mxu0
  %2319 = vmatprep.mubr.bf16.mxu0 0
  %2320 = vmatmul.mubr.bf16.gmra.mxu0 %v2266
  %v2321 = vpop.f32.mrf.mxu0
  %v2322 = vadd.f32 0.0, %v2321
  %v2323 = vpop.f32.mrf.mxu0
  %v2324 = vpop.f32.mrf.mxu0
  %v2325 = vadd.f32 0.0, %v2324
  %v2326 = vpop.f32.mrf.mxu0
  %2327 = vmatprep.mubr.bf16.mxu0 0
  %2328 = vmatmul.mubr.bf16.gmra.mxu0 %v2269
  %v2329 = vpop.f32.mrf.mxu0
  %v2330 = vadd.f32 0.0, %v2329
  %v2331 = vpop.f32.mrf.mxu0
  %v2332 = vpop.f32.mrf.mxu0
  %v2333 = vadd.f32 0.0, %v2332
  %v2334 = vpop.f32.mrf.mxu0
  %2335 = vdwg.mxu0
  %v2336 = vpack.c.bf16 %v2309, %v2306
  %v2337 = vpack.c.bf16 %v2317, %v2314
  %v2338 = vpack.c.bf16 %v2325, %v2322
  %v2339 = vpack.c.bf16 %v2333, %v2330
  %v2341 = vsel %vm211, %v2336, 0
  %v2344 = vsel %vm211, %v2337, 0
  %v2347 = vsel %vm211, %v2338, 0
  %v2350 = vsel %vm211, %v2339, 0
  %2352 = vmatprep.subr.bf16.mxu0 0
  %2353 = vmatpush1.bf16.msra.mxu0 0
  %2354 = vmatprep.subr.bf16.mxu0 0
  %2355 = vmatpush1.bf16.msra.mxu0 0
  %2356 = vmatprep.subr.bf16.mxu0 0
  %2357 = vmatpush1.bf16.msra.mxu0 0
  %2358 = vmatprep.subr.bf16.mxu0 0
  %2359 = vmatpush1.bf16.msra.mxu0 0
  %2360 = vmatprep.subr.bf16.mxu0 0
  %2361 = vmatpush1.bf16.msra.mxu0 0
  %2362 = vmatprep.subr.bf16.mxu0 0
  %2363 = vmatpush1.bf16.msra.mxu0 0
  %2364 = vmatprep.subr.bf16.mxu0 0
  %2365 = vmatpush1.bf16.msra.mxu0 0
  %2366 = vmatprep.subr.bf16.mxu0 0
  %2367 = vmatpush1.bf16.msra.mxu0 %v1975
  %2368 = vmatprep.subr.bf16.mxu0 0
  %2369 = vmatpush2.bf16.msra.mxu0 0
  %2370 = vmatprep.subr.bf16.mxu0 0
  %2371 = vmatpush2.bf16.msra.mxu0 0
  %2372 = vmatprep.subr.bf16.mxu0 0
  %2373 = vmatpush2.bf16.msra.mxu0 0
  %2374 = vmatprep.subr.bf16.mxu0 0
  %2375 = vmatpush2.bf16.msra.mxu0 0
  %2376 = vmatprep.subr.bf16.mxu0 0
  %2377 = vmatpush2.bf16.msra.mxu0 0
  %2378 = vmatprep.subr.bf16.mxu0 0
  %2379 = vmatpush2.bf16.msra.mxu0 0
  %2380 = vmatprep.subr.bf16.mxu0 0
  %2381 = vmatpush2.bf16.msra.mxu0 0
  %2382 = vmatprep.subr.bf16.mxu0 0
  %2383 = vmatpush2.bf16.msra.mxu0 0
  %2384 = vmatprep.mubr.bf16.mxu0 0
  %2385 = vmatmul.mubr.bf16.gmra.mxu0 %v2341
  %v2386 = vpop.f32.mrf.mxu0
  %v2387 = vadd.f32 0.0, %v2386
  %v2388 = vpop.f32.mrf.mxu0
  %v2389 = vpop.f32.mrf.mxu0
  %v2390 = vadd.f32 0.0, %v2389
  %v2391 = vpop.f32.mrf.mxu0
  %2392 = vmatprep.mubr.bf16.mxu0 0
  %2393 = vmatmul.mubr.bf16.gmra.mxu0 %v2344
  %v2394 = vpop.f32.mrf.mxu0
  %v2395 = vadd.f32 0.0, %v2394
  %v2396 = vpop.f32.mrf.mxu0
  %v2397 = vpop.f32.mrf.mxu0
  %v2398 = vadd.f32 0.0, %v2397
  %v2399 = vpop.f32.mrf.mxu0
  %2400 = vmatprep.mubr.bf16.mxu0 0
  %2401 = vmatmul.mubr.bf16.gmra.mxu0 %v2347
  %v2402 = vpop.f32.mrf.mxu0
  %v2403 = vadd.f32 0.0, %v2402
  %v2404 = vpop.f32.mrf.mxu0
  %v2405 = vpop.f32.mrf.mxu0
  %v2406 = vadd.f32 0.0, %v2405
  %v2407 = vpop.f32.mrf.mxu0
  %2408 = vmatprep.mubr.bf16.mxu0 0
  %2409 = vmatmul.mubr.bf16.gmra.mxu0 %v2350
  %v2410 = vpop.f32.mrf.mxu0
  %v2411 = vadd.f32 0.0, %v2410
  %v2412 = vpop.f32.mrf.mxu0
  %v2413 = vpop.f32.mrf.mxu0
  %v2414 = vadd.f32 0.0, %v2413
  %v2415 = vpop.f32.mrf.mxu0
  %2416 = vdwg.mxu0
  %v2417 = vadd.f32 %v1640, %v2387
  %v2418 = vadd.f32 %v1643, %v2390
  %v2419 = vadd.f32 %v1648, %v2395
  %v2420 = vadd.f32 %v1651, %v2398
  %v2421 = vadd.f32 %v1656, %v2403
  %v2422 = vadd.f32 %v1659, %v2406
  %v2423 = vadd.f32 %v1664, %v2411
  %v2424 = vadd.f32 %v1667, %v2414
  %s2425 = scalar_lea.vmem %s3, 12
  %v2426 = vld [vmem:[%s2425] sm:$0xf]
  %2427 = vrot.lane.b32.xlu0 %v190, 104
  %v2428 = vpop.permute.xlu0 %2427
  %2429 = vrot.lane.b32.xlu0 %v191, 104
  %v2430 = vpop.permute.xlu0 %2429
  %2431 = vrot.lane.b32.xlu0 %v192, 104
  %v2432 = vpop.permute.xlu0 %2431
  %2433 = vrot.lane.b32.xlu0 %v193, 104
  %v2434 = vpop.permute.xlu0 %2433
  %2435 = vrot.lane.b32.xlu0 %v190, 72
  %v2436 = vpop.permute.xlu0 %2435
  %2437 = vrot.lane.b32.xlu0 %v191, 72
  %v2438 = vpop.permute.xlu0 %2437
  %2439 = vrot.lane.b32.xlu0 %v192, 72
  %v2440 = vpop.permute.xlu0 %2439
  %2441 = vrot.lane.b32.xlu0 %v193, 72
  %v2442 = vpop.permute.xlu0 %2441
  %v2444 = vsel %vm211, %v2428, 0
  %v2447 = vsel %vm211, %v2430, 0
  %v2450 = vsel %vm211, %v2432, 0
  %v2453 = vsel %vm211, %v2434, 0
  %v2456 = vsel %vm211, %v2436, 0
  %v2459 = vsel %vm211, %v2438, 0
  %v2462 = vsel %vm211, %v2440, 0
  %v2465 = vsel %vm211, %v2442, 0
  %2467 = vmatprep.subr.bf16.mxu0 0
  %2468 = vmatpush1.bf16.xpose.msra.mxu0 0
  %2469 = vmatprep.subr.bf16.mxu0 0
  %2470 = vmatpush1.bf16.xpose.msra.mxu0 0
  %2471 = vmatprep.subr.bf16.mxu0 0
  %2472 = vmatpush1.bf16.xpose.msra.mxu0 0
  %2473 = vmatprep.subr.bf16.mxu0 0
  %2474 = vmatpush1.bf16.xpose.msra.mxu0 0
  %2475 = vmatprep.subr.bf16.mxu0 0
  %2476 = vmatpush1.bf16.xpose.msra.mxu0 %v2465
  %2477 = vmatprep.subr.bf16.mxu0 0
  %2478 = vmatpush1.bf16.xpose.msra.mxu0 %v2462
  %2479 = vmatprep.subr.bf16.mxu0 0
  %2480 = vmatpush1.bf16.xpose.msra.mxu0 %v2459
  %2481 = vmatprep.subr.bf16.mxu0 0
  %2482 = vmatpush1.bf16.xpose.msra.mxu0 %v2456
  %2483 = vmatprep.subr.bf16.mxu0 0
  %2484 = vmatpush2.bf16.xpose.msra.mxu0 0
  %2485 = vmatprep.subr.bf16.mxu0 0
  %2486 = vmatpush2.bf16.xpose.msra.mxu0 0
  %2487 = vmatprep.subr.bf16.mxu0 0
  %2488 = vmatpush2.bf16.xpose.msra.mxu0 0
  %2489 = vmatprep.subr.bf16.mxu0 0
  %2490 = vmatpush2.bf16.xpose.msra.mxu0 0
  %2491 = vmatprep.subr.bf16.mxu0 0
  %2492 = vmatpush2.bf16.xpose.msra.mxu0 0
  %2493 = vmatprep.subr.bf16.mxu0 0
  %2494 = vmatpush2.bf16.xpose.msra.mxu0 0
  %2495 = vmatprep.subr.bf16.mxu0 0
  %2496 = vmatpush2.bf16.xpose.msra.mxu0 0
  %2497 = vmatprep.subr.bf16.mxu0 0
  %2498 = vmatpush2.bf16.xpose.msra.mxu0 0
  %2499 = vmatprep.mubr.bf16.mxu0 0
  %2500 = vmatmul.mubr.bf16.gmra.mxu0 %v2444
  %v2501 = vpop.f32.mrf.mxu0
  %v2502 = vadd.f32 0.0, %v2501
  %v2503 = vpop.f32.mrf.mxu0
  %v2504 = vpop.f32.mrf.mxu0
  %v2505 = vadd.f32 0.0, %v2504
  %v2506 = vpop.f32.mrf.mxu0
  %2507 = vmatprep.mubr.bf16.mxu0 0
  %2508 = vmatmul.mubr.bf16.gmra.mxu0 %v2447
  %v2509 = vpop.f32.mrf.mxu0
  %v2510 = vadd.f32 0.0, %v2509
  %v2511 = vpop.f32.mrf.mxu0
  %v2512 = vpop.f32.mrf.mxu0
  %v2513 = vadd.f32 0.0, %v2512
  %v2514 = vpop.f32.mrf.mxu0
  %2515 = vmatprep.mubr.bf16.mxu0 0
  %2516 = vmatmul.mubr.bf16.gmra.mxu0 %v2450
  %v2517 = vpop.f32.mrf.mxu0
  %v2518 = vadd.f32 0.0, %v2517
  %v2519 = vpop.f32.mrf.mxu0
  %v2520 = vpop.f32.mrf.mxu0
  %v2521 = vadd.f32 0.0, %v2520
  %v2522 = vpop.f32.mrf.mxu0
  %2523 = vmatprep.mubr.bf16.mxu0 0
  %2524 = vmatmul.mubr.bf16.gmra.mxu0 %v2453
  %v2525 = vpop.f32.mrf.mxu0
  %v2526 = vadd.f32 0.0, %v2525
  %v2527 = vpop.f32.mrf.mxu0
  %v2528 = vpop.f32.mrf.mxu0
  %v2529 = vadd.f32 0.0, %v2528
  %v2530 = vpop.f32.mrf.mxu0
  %2531 = vdwg.mxu0
  %v2532 = vsel %vm301, %v2502, -inf
  %2533 = vmax.xlane.f32.xlu0 %v2532
  %v2534 = vpop.xlane.xlu0 %2533
  %v2535 = vsel %vm301, %v2505, -inf
  %2536 = vmax.xlane.f32.xlu0 %v2535
  %v2537 = vpop.xlane.xlu0 %2536
  %v2538 = vsel %vm301, %v2510, -inf
  %2539 = vmax.xlane.f32.xlu0 %v2538
  %v2540 = vpop.xlane.xlu0 %2539
  %v2541 = vsel %vm301, %v2513, -inf
  %2542 = vmax.xlane.f32.xlu0 %v2541
  %v2543 = vpop.xlane.xlu0 %2542
  %v2544 = vsel %vm301, %v2518, -inf
  %2545 = vmax.xlane.f32.xlu0 %v2544
  %v2546 = vpop.xlane.xlu0 %2545
  %v2547 = vsel %vm301, %v2521, -inf
  %2548 = vmax.xlane.f32.xlu0 %v2547
  %v2549 = vpop.xlane.xlu0 %2548
  %v2550 = vsel %vm301, %v2526, -inf
  %2551 = vmax.xlane.f32.xlu0 %v2550
  %v2552 = vpop.xlane.xlu0 %2551
  %v2553 = vsel %vm301, %v2529, -inf
  %2554 = vmax.xlane.f32.xlu0 %v2553
  %v2555 = vpop.xlane.xlu0 %2554
  %v2556 = vsub.f32 %v2502, %v2534
  %v2557 = vsub.f32 %v2505, %v2537
  %v2558 = vsub.f32 %v2510, %v2540
  %v2559 = vsub.f32 %v2513, %v2543
  %v2560 = vsub.f32 %v2518, %v2546
  %v2561 = vsub.f32 %v2521, %v2549
  %v2562 = vsub.f32 %v2526, %v2552
  %v2563 = vsub.f32 %v2529, %v2555
  %v2564 = vmul.f32 %v2556, 1.442695
  %v2565 = vpow.pop %v2564
  %v2566 = vmul.f32 %v2557, 1.442695
  %v2567 = vpow.pop %v2566
  %v2568 = vmul.f32 %v2558, 1.442695
  %v2569 = vpow.pop %v2568
  %v2570 = vmul.f32 %v2559, 1.442695
  %v2571 = vpow.pop %v2570
  %v2572 = vmul.f32 %v2560, 1.442695
  %v2573 = vpow.pop %v2572
  %v2574 = vmul.f32 %v2561, 1.442695
  %v2575 = vpow.pop %v2574
  %v2576 = vmul.f32 %v2562, 1.442695
  %v2577 = vpow.pop %v2576
  %v2578 = vmul.f32 %v2563, 1.442695
  %v2579 = vpow.pop %v2578
  %v2580 = vsel %vm301, %v2565, 0.0
  %2581 = vadd.xlane.f32.xlu0 %v2580
  %v2582 = vpop.xlane.xlu0 %2581
  %v2583 = vsel %vm301, %v2567, 0.0
  %2584 = vadd.xlane.f32.xlu0 %v2583
  %v2585 = vpop.xlane.xlu0 %2584
  %v2586 = vsel %vm301, %v2569, 0.0
  %2587 = vadd.xlane.f32.xlu0 %v2586
  %v2588 = vpop.xlane.xlu0 %2587
  %v2589 = vsel %vm301, %v2571, 0.0
  %2590 = vadd.xlane.f32.xlu0 %v2589
  %v2591 = vpop.xlane.xlu0 %2590
  %v2592 = vsel %vm301, %v2573, 0.0
  %2593 = vadd.xlane.f32.xlu0 %v2592
  %v2594 = vpop.xlane.xlu0 %2593
  %v2595 = vsel %vm301, %v2575, 0.0
  %2596 = vadd.xlane.f32.xlu0 %v2595
  %v2597 = vpop.xlane.xlu0 %2596
  %v2598 = vsel %vm301, %v2577, 0.0
  %2599 = vadd.xlane.f32.xlu0 %v2598
  %v2600 = vpop.xlane.xlu0 %2599
  %v2601 = vsel %vm301, %v2579, 0.0
  %2602 = vadd.xlane.f32.xlu0 %v2601
  %v2603 = vpop.xlane.xlu0 %2602
  %v2604 = vrcp.pop %v2582
  %v2605 = vmul.f32 %v2565, %v2604
  %v2606 = vrcp.pop %v2585
  %v2607 = vmul.f32 %v2567, %v2606
  %v2608 = vrcp.pop %v2588
  %v2609 = vmul.f32 %v2569, %v2608
  %v2610 = vrcp.pop %v2591
  %v2611 = vmul.f32 %v2571, %v2610
  %v2612 = vrcp.pop %v2594
  %v2613 = vmul.f32 %v2573, %v2612
  %v2614 = vrcp.pop %v2597
  %v2615 = vmul.f32 %v2575, %v2614
  %v2616 = vrcp.pop %v2600
  %v2617 = vmul.f32 %v2577, %v2616
  %v2618 = vrcp.pop %v2603
  %v2619 = vmul.f32 %v2579, %v2618
  %v2620 = vpack.c.bf16 %v2607, %v2605
  %v2621 = vpack.c.bf16 %v2611, %v2609
  %v2622 = vpack.c.bf16 %v2615, %v2613
  %v2623 = vpack.c.bf16 %v2619, %v2617
  %2624 = vrot.lane.b32.xlu0 %v190, 40
  %v2625 = vpop.permute.xlu0 %2624
  %2626 = vrot.lane.b32.xlu0 %v191, 40
  %v2627 = vpop.permute.xlu0 %2626
  %2628 = vrot.lane.b32.xlu0 %v192, 40
  %v2629 = vpop.permute.xlu0 %2628
  %2630 = vrot.lane.b32.xlu0 %v193, 40
  %v2631 = vpop.permute.xlu0 %2630
  %v2637 = vsel %vm301, %v2620, 0
  %v2640 = vsel %vm301, %v2621, 0
  %v2643 = vsel %vm301, %v2622, 0
  %v2646 = vsel %vm301, %v2623, 0
  %2648 = vmatprep.subr.bf16.mxu0 0
  %2649 = vmatpush1.bf16.msra.mxu0 0
  %2650 = vmatprep.subr.bf16.mxu0 0
  %2651 = vmatpush1.bf16.msra.mxu0 0
  %2652 = vmatprep.subr.bf16.mxu0 0
  %2653 = vmatpush1.bf16.msra.mxu0 0
  %2654 = vmatprep.subr.bf16.mxu0 0
  %2655 = vmatpush1.bf16.msra.mxu0 0
  %2656 = vmatprep.subr.bf16.mxu0 0
  %2657 = vmatpush1.bf16.msra.mxu0 %v2631
  %2658 = vmatprep.subr.bf16.mxu0 0
  %2659 = vmatpush1.bf16.msra.mxu0 %v2629
  %2660 = vmatprep.subr.bf16.mxu0 0
  %2661 = vmatpush1.bf16.msra.mxu0 %v2627
  %2662 = vmatprep.subr.bf16.mxu0 0
  %2663 = vmatpush1.bf16.msra.mxu0 %v2625
  %2664 = vmatprep.subr.bf16.mxu0 0
  %2665 = vmatpush2.bf16.msra.mxu0 0
  %2666 = vmatprep.subr.bf16.mxu0 0
  %2667 = vmatpush2.bf16.msra.mxu0 0
  %2668 = vmatprep.subr.bf16.mxu0 0
  %2669 = vmatpush2.bf16.msra.mxu0 0
  %2670 = vmatprep.subr.bf16.mxu0 0
  %2671 = vmatpush2.bf16.msra.mxu0 0
  %2672 = vmatprep.subr.bf16.mxu0 0
  %2673 = vmatpush2.bf16.msra.mxu0 0
  %2674 = vmatprep.subr.bf16.mxu0 0
  %2675 = vmatpush2.bf16.msra.mxu0 0
  %2676 = vmatprep.subr.bf16.mxu0 0
  %2677 = vmatpush2.bf16.msra.mxu0 0
  %2678 = vmatprep.subr.bf16.mxu0 0
  %2679 = vmatpush2.bf16.msra.mxu0 0
  %2680 = vmatprep.mubr.bf16.mxu0 0
  %2681 = vmatmul.mubr.bf16.gmra.mxu0 %v2637
  %v2682 = vpop.f32.mrf.mxu0
  %v2683 = vadd.f32 0.0, %v2682
  %v2684 = vpop.f32.mrf.mxu0
  %v2685 = vpop.f32.mrf.mxu0
  %v2686 = vadd.f32 0.0, %v2685
  %v2687 = vpop.f32.mrf.mxu0
  %2688 = vmatprep.mubr.bf16.mxu0 0
  %2689 = vmatmul.mubr.bf16.gmra.mxu0 %v2640
  %v2690 = vpop.f32.mrf.mxu0
  %v2691 = vadd.f32 0.0, %v2690
  %v2692 = vpop.f32.mrf.mxu0
  %v2693 = vpop.f32.mrf.mxu0
  %v2694 = vadd.f32 0.0, %v2693
  %v2695 = vpop.f32.mrf.mxu0
  %2696 = vmatprep.mubr.bf16.mxu0 0
  %2697 = vmatmul.mubr.bf16.gmra.mxu0 %v2643
  %v2698 = vpop.f32.mrf.mxu0
  %v2699 = vadd.f32 0.0, %v2698
  %v2700 = vpop.f32.mrf.mxu0
  %v2701 = vpop.f32.mrf.mxu0
  %v2702 = vadd.f32 0.0, %v2701
  %v2703 = vpop.f32.mrf.mxu0
  %2704 = vmatprep.mubr.bf16.mxu0 0
  %2705 = vmatmul.mubr.bf16.gmra.mxu0 %v2646
  %v2706 = vpop.f32.mrf.mxu0
  %v2707 = vadd.f32 0.0, %v2706
  %v2708 = vpop.f32.mrf.mxu0
  %v2709 = vpop.f32.mrf.mxu0
  %v2710 = vadd.f32 0.0, %v2709
  %v2711 = vpop.f32.mrf.mxu0
  %2712 = vdwg.mxu0
  %v2713 = vpack.c.bf16 %v2686, %v2683
  %v2714 = vpack.c.bf16 %v2694, %v2691
  %v2715 = vpack.c.bf16 %v2702, %v2699
  %v2716 = vpack.c.bf16 %v2710, %v2707
  %v2718 = vsel %vm211, %v2713, 0
  %v2721 = vsel %vm211, %v2714, 0
  %v2724 = vsel %vm211, %v2715, 0
  %v2727 = vsel %vm211, %v2716, 0
  %v2730 = vsel %vm1077, %v2426, 0
  %2732 = vmatprep.subr.bf16.mxu0 0
  %2733 = vmatpush1.bf16.msra.mxu0 0
  %2734 = vmatprep.subr.bf16.mxu0 0
  %2735 = vmatpush1.bf16.msra.mxu0 0
  %2736 = vmatprep.subr.bf16.mxu0 0
  %2737 = vmatpush1.bf16.msra.mxu0 0
  %2738 = vmatprep.subr.bf16.mxu0 0
  %2739 = vmatpush1.bf16.msra.mxu0 0
  %2740 = vmatprep.subr.bf16.mxu0 0
  %2741 = vmatpush1.bf16.msra.mxu0 0
  %2742 = vmatprep.subr.bf16.mxu0 0
  %2743 = vmatpush1.bf16.msra.mxu0 0
  %2744 = vmatprep.subr.bf16.mxu0 0
  %2745 = vmatpush1.bf16.msra.mxu0 0
  %2746 = vmatprep.subr.bf16.mxu0 0
  %2747 = vmatpush1.bf16.msra.mxu0 %v2730
  %2748 = vmatprep.subr.bf16.mxu0 0
  %2749 = vmatpush2.bf16.msra.mxu0 0
  %2750 = vmatprep.subr.bf16.mxu0 0
  %2751 = vmatpush2.bf16.msra.mxu0 0
  %2752 = vmatprep.subr.bf16.mxu0 0
  %2753 = vmatpush2.bf16.msra.mxu0 0
  %2754 = vmatprep.subr.bf16.mxu0 0
  %2755 = vmatpush2.bf16.msra.mxu0 0
  %2756 = vmatprep.subr.bf16.mxu0 0
  %2757 = vmatpush2.bf16.msra.mxu0 0
  %2758 = vmatprep.subr.bf16.mxu0 0
  %2759 = vmatpush2.bf16.msra.mxu0 0
  %2760 = vmatprep.subr.bf16.mxu0 0
  %2761 = vmatpush2.bf16.msra.mxu0 0
  %2762 = vmatprep.subr.bf16.mxu0 0
  %2763 = vmatpush2.bf16.msra.mxu0 0
  %2764 = vmatprep.mubr.bf16.mxu0 0
  %2765 = vmatmul.mubr.bf16.gmra.mxu0 %v2718
  %v2766 = vpop.f32.mrf.mxu0
  %v2767 = vadd.f32 0.0, %v2766
  %v2768 = vpop.f32.mrf.mxu0
  %v2769 = vpop.f32.mrf.mxu0
  %v2770 = vadd.f32 0.0, %v2769
  %v2771 = vpop.f32.mrf.mxu0
  %2772 = vmatprep.mubr.bf16.mxu0 0
  %2773 = vmatmul.mubr.bf16.gmra.mxu0 %v2721
  %v2774 = vpop.f32.mrf.mxu0
  %v2775 = vadd.f32 0.0, %v2774
  %v2776 = vpop.f32.mrf.mxu0
  %v2777 = vpop.f32.mrf.mxu0
  %v2778 = vadd.f32 0.0, %v2777
  %v2779 = vpop.f32.mrf.mxu0
  %2780 = vmatprep.mubr.bf16.mxu0 0
  %2781 = vmatmul.mubr.bf16.gmra.mxu0 %v2724
  %v2782 = vpop.f32.mrf.mxu0
  %v2783 = vadd.f32 0.0, %v2782
  %v2784 = vpop.f32.mrf.mxu0
  %v2785 = vpop.f32.mrf.mxu0
  %v2786 = vadd.f32 0.0, %v2785
  %v2787 = vpop.f32.mrf.mxu0
  %2788 = vmatprep.mubr.bf16.mxu0 0
  %2789 = vmatmul.mubr.bf16.gmra.mxu0 %v2727
  %v2790 = vpop.f32.mrf.mxu0
  %v2791 = vadd.f32 0.0, %v2790
  %v2792 = vpop.f32.mrf.mxu0
  %v2793 = vpop.f32.mrf.mxu0
  %v2794 = vadd.f32 0.0, %v2793
  %v2795 = vpop.f32.mrf.mxu0
  %2796 = vdwg.mxu0
  %v2797 = vadd.f32 %v2042, %v2767
  %v2798 = vadd.f32 %v2043, %v2770
  %v2799 = vadd.f32 %v2044, %v2775
  %v2800 = vadd.f32 %v2045, %v2778
  %v2801 = vadd.f32 %v2046, %v2783
  %v2802 = vadd.f32 %v2047, %v2786
  %v2803 = vadd.f32 %v2048, %v2791
  %v2804 = vadd.f32 %v2049, %v2794
  %2805 = vrot.lane.b32.xlu0 %v194, 104
  %v2806 = vpop.permute.xlu0 %2805
  %2807 = vrot.lane.b32.xlu0 %v195, 104
  %v2808 = vpop.permute.xlu0 %2807
  %2809 = vrot.lane.b32.xlu0 %v196, 104
  %v2810 = vpop.permute.xlu0 %2809
  %2811 = vrot.lane.b32.xlu0 %v197, 104
  %v2812 = vpop.permute.xlu0 %2811
  %2813 = vrot.lane.b32.xlu0 %v194, 72
  %v2814 = vpop.permute.xlu0 %2813
  %2815 = vrot.lane.b32.xlu0 %v195, 72
  %v2816 = vpop.permute.xlu0 %2815
  %2817 = vrot.lane.b32.xlu0 %v196, 72
  %v2818 = vpop.permute.xlu0 %2817
  %2819 = vrot.lane.b32.xlu0 %v197, 72
  %v2820 = vpop.permute.xlu0 %2819
  %v2822 = vsel %vm211, %v2806, 0
  %v2825 = vsel %vm211, %v2808, 0
  %v2828 = vsel %vm211, %v2810, 0
  %v2831 = vsel %vm211, %v2812, 0
  %v2834 = vsel %vm211, %v2814, 0
  %v2837 = vsel %vm211, %v2816, 0
  %v2840 = vsel %vm211, %v2818, 0
  %v2843 = vsel %vm211, %v2820, 0
  %2845 = vmatprep.subr.bf16.mxu0 0
  %2846 = vmatpush1.bf16.xpose.msra.mxu0 0
  %2847 = vmatprep.subr.bf16.mxu0 0
  %2848 = vmatpush1.bf16.xpose.msra.mxu0 0
  %2849 = vmatprep.subr.bf16.mxu0 0
  %2850 = vmatpush1.bf16.xpose.msra.mxu0 0
  %2851 = vmatprep.subr.bf16.mxu0 0
  %2852 = vmatpush1.bf16.xpose.msra.mxu0 0
  %2853 = vmatprep.subr.bf16.mxu0 0
  %2854 = vmatpush1.bf16.xpose.msra.mxu0 %v2843
  %2855 = vmatprep.subr.bf16.mxu0 0
  %2856 = vmatpush1.bf16.xpose.msra.mxu0 %v2840
  %2857 = vmatprep.subr.bf16.mxu0 0
  %2858 = vmatpush1.bf16.xpose.msra.mxu0 %v2837
  %2859 = vmatprep.subr.bf16.mxu0 0
  %2860 = vmatpush1.bf16.xpose.msra.mxu0 %v2834
  %2861 = vmatprep.subr.bf16.mxu0 0
  %2862 = vmatpush2.bf16.xpose.msra.mxu0 0
  %2863 = vmatprep.subr.bf16.mxu0 0
  %2864 = vmatpush2.bf16.xpose.msra.mxu0 0
  %2865 = vmatprep.subr.bf16.mxu0 0
  %2866 = vmatpush2.bf16.xpose.msra.mxu0 0
  %2867 = vmatprep.subr.bf16.mxu0 0
  %2868 = vmatpush2.bf16.xpose.msra.mxu0 0
  %2869 = vmatprep.subr.bf16.mxu0 0
  %2870 = vmatpush2.bf16.xpose.msra.mxu0 0
  %2871 = vmatprep.subr.bf16.mxu0 0
  %2872 = vmatpush2.bf16.xpose.msra.mxu0 0
  %2873 = vmatprep.subr.bf16.mxu0 0
  %2874 = vmatpush2.bf16.xpose.msra.mxu0 0
  %2875 = vmatprep.subr.bf16.mxu0 0
  %2876 = vmatpush2.bf16.xpose.msra.mxu0 0
  %2877 = vmatprep.mubr.bf16.mxu0 0
  %2878 = vmatmul.mubr.bf16.gmra.mxu0 %v2822
  %v2879 = vpop.f32.mrf.mxu0
  %v2880 = vadd.f32 0.0, %v2879
  %v2881 = vpop.f32.mrf.mxu0
  %v2882 = vpop.f32.mrf.mxu0
  %v2883 = vadd.f32 0.0, %v2882
  %v2884 = vpop.f32.mrf.mxu0
  %2885 = vmatprep.mubr.bf16.mxu0 0
  %2886 = vmatmul.mubr.bf16.gmra.mxu0 %v2825
  %v2887 = vpop.f32.mrf.mxu0
  %v2888 = vadd.f32 0.0, %v2887
  %v2889 = vpop.f32.mrf.mxu0
  %v2890 = vpop.f32.mrf.mxu0
  %v2891 = vadd.f32 0.0, %v2890
  %v2892 = vpop.f32.mrf.mxu0
  %2893 = vmatprep.mubr.bf16.mxu0 0
  %2894 = vmatmul.mubr.bf16.gmra.mxu0 %v2828
  %v2895 = vpop.f32.mrf.mxu0
  %v2896 = vadd.f32 0.0, %v2895
  %v2897 = vpop.f32.mrf.mxu0
  %v2898 = vpop.f32.mrf.mxu0
  %v2899 = vadd.f32 0.0, %v2898
  %v2900 = vpop.f32.mrf.mxu0
  %2901 = vmatprep.mubr.bf16.mxu0 0
  %2902 = vmatmul.mubr.bf16.gmra.mxu0 %v2831
  %v2903 = vpop.f32.mrf.mxu0
  %v2904 = vadd.f32 0.0, %v2903
  %v2905 = vpop.f32.mrf.mxu0
  %v2906 = vpop.f32.mrf.mxu0
  %v2907 = vadd.f32 0.0, %v2906
  %v2908 = vpop.f32.mrf.mxu0
  %2909 = vdwg.mxu0
  %v2910 = vsel %vm301, %v2880, -inf
  %2911 = vmax.xlane.f32.xlu0 %v2910
  %v2912 = vpop.xlane.xlu0 %2911
  %v2913 = vsel %vm301, %v2883, -inf
  %2914 = vmax.xlane.f32.xlu0 %v2913
  %v2915 = vpop.xlane.xlu0 %2914
  %v2916 = vsel %vm301, %v2888, -inf
  %2917 = vmax.xlane.f32.xlu0 %v2916
  %v2918 = vpop.xlane.xlu0 %2917
  %v2919 = vsel %vm301, %v2891, -inf
  %2920 = vmax.xlane.f32.xlu0 %v2919
  %v2921 = vpop.xlane.xlu0 %2920
  %v2922 = vsel %vm301, %v2896, -inf
  %2923 = vmax.xlane.f32.xlu0 %v2922
  %v2924 = vpop.xlane.xlu0 %2923
  %v2925 = vsel %vm301, %v2899, -inf
  %2926 = vmax.xlane.f32.xlu0 %v2925
  %v2927 = vpop.xlane.xlu0 %2926
  %v2928 = vsel %vm301, %v2904, -inf
  %2929 = vmax.xlane.f32.xlu0 %v2928
  %v2930 = vpop.xlane.xlu0 %2929
  %v2931 = vsel %vm301, %v2907, -inf
  %2932 = vmax.xlane.f32.xlu0 %v2931
  %v2933 = vpop.xlane.xlu0 %2932
  %v2934 = vsub.f32 %v2880, %v2912
  %v2935 = vsub.f32 %v2883, %v2915
  %v2936 = vsub.f32 %v2888, %v2918
  %v2937 = vsub.f32 %v2891, %v2921
  %v2938 = vsub.f32 %v2896, %v2924
  %v2939 = vsub.f32 %v2899, %v2927
  %v2940 = vsub.f32 %v2904, %v2930
  %v2941 = vsub.f32 %v2907, %v2933
  %v2942 = vmul.f32 %v2934, 1.442695
  %v2943 = vpow.pop %v2942
  %v2944 = vmul.f32 %v2935, 1.442695
  %v2945 = vpow.pop %v2944
  %v2946 = vmul.f32 %v2936, 1.442695
  %v2947 = vpow.pop %v2946
  %v2948 = vmul.f32 %v2937, 1.442695
  %v2949 = vpow.pop %v2948
  %v2950 = vmul.f32 %v2938, 1.442695
  %v2951 = vpow.pop %v2950
  %v2952 = vmul.f32 %v2939, 1.442695
  %v2953 = vpow.pop %v2952
  %v2954 = vmul.f32 %v2940, 1.442695
  %v2955 = vpow.pop %v2954
  %v2956 = vmul.f32 %v2941, 1.442695
  %v2957 = vpow.pop %v2956
  %v2958 = vsel %vm301, %v2943, 0.0
  %2959 = vadd.xlane.f32.xlu0 %v2958
  %v2960 = vpop.xlane.xlu0 %2959
  %v2961 = vsel %vm301, %v2945, 0.0
  %2962 = vadd.xlane.f32.xlu0 %v2961
  %v2963 = vpop.xlane.xlu0 %2962
  %v2964 = vsel %vm301, %v2947, 0.0
  %2965 = vadd.xlane.f32.xlu0 %v2964
  %v2966 = vpop.xlane.xlu0 %2965
  %v2967 = vsel %vm301, %v2949, 0.0
  %2968 = vadd.xlane.f32.xlu0 %v2967
  %v2969 = vpop.xlane.xlu0 %2968
  %v2970 = vsel %vm301, %v2951, 0.0
  %2971 = vadd.xlane.f32.xlu0 %v2970
  %v2972 = vpop.xlane.xlu0 %2971
  %v2973 = vsel %vm301, %v2953, 0.0
  %2974 = vadd.xlane.f32.xlu0 %v2973
  %v2975 = vpop.xlane.xlu0 %2974
  %v2976 = vsel %vm301, %v2955, 0.0
  %2977 = vadd.xlane.f32.xlu0 %v2976
  %v2978 = vpop.xlane.xlu0 %2977
  %v2979 = vsel %vm301, %v2957, 0.0
  %2980 = vadd.xlane.f32.xlu0 %v2979
  %v2981 = vpop.xlane.xlu0 %2980
  %v2982 = vrcp.pop %v2960
  %v2983 = vmul.f32 %v2943, %v2982
  %v2984 = vrcp.pop %v2963
  %v2985 = vmul.f32 %v2945, %v2984
  %v2986 = vrcp.pop %v2966
  %v2987 = vmul.f32 %v2947, %v2986
  %v2988 = vrcp.pop %v2969
  %v2989 = vmul.f32 %v2949, %v2988
  %v2990 = vrcp.pop %v2972
  %v2991 = vmul.f32 %v2951, %v2990
  %v2992 = vrcp.pop %v2975
  %v2993 = vmul.f32 %v2953, %v2992
  %v2994 = vrcp.pop %v2978
  %v2995 = vmul.f32 %v2955, %v2994
  %v2996 = vrcp.pop %v2981
  %v2997 = vmul.f32 %v2957, %v2996
  %v2998 = vpack.c.bf16 %v2985, %v2983
  %v2999 = vpack.c.bf16 %v2989, %v2987
  %v3000 = vpack.c.bf16 %v2993, %v2991
  %v3001 = vpack.c.bf16 %v2997, %v2995
  %3002 = vrot.lane.b32.xlu0 %v194, 40
  %v3003 = vpop.permute.xlu0 %3002
  %3004 = vrot.lane.b32.xlu0 %v195, 40
  %v3005 = vpop.permute.xlu0 %3004
  %3006 = vrot.lane.b32.xlu0 %v196, 40
  %v3007 = vpop.permute.xlu0 %3006
  %3008 = vrot.lane.b32.xlu0 %v197, 40
  %v3009 = vpop.permute.xlu0 %3008
  %v3015 = vsel %vm301, %v2998, 0
  %v3018 = vsel %vm301, %v2999, 0
  %v3021 = vsel %vm301, %v3000, 0
  %v3024 = vsel %vm301, %v3001, 0
  %3026 = vmatprep.subr.bf16.mxu0 0
  %3027 = vmatpush1.bf16.msra.mxu0 0
  %3028 = vmatprep.subr.bf16.mxu0 0
  %3029 = vmatpush1.bf16.msra.mxu0 0
  %3030 = vmatprep.subr.bf16.mxu0 0
  %3031 = vmatpush1.bf16.msra.mxu0 0
  %3032 = vmatprep.subr.bf16.mxu0 0
  %3033 = vmatpush1.bf16.msra.mxu0 0
  %3034 = vmatprep.subr.bf16.mxu0 0
  %3035 = vmatpush1.bf16.msra.mxu0 %v3009
  %3036 = vmatprep.subr.bf16.mxu0 0
  %3037 = vmatpush1.bf16.msra.mxu0 %v3007
  %3038 = vmatprep.subr.bf16.mxu0 0
  %3039 = vmatpush1.bf16.msra.mxu0 %v3005
  %3040 = vmatprep.subr.bf16.mxu0 0
  %3041 = vmatpush1.bf16.msra.mxu0 %v3003
  %3042 = vmatprep.subr.bf16.mxu0 0
  %3043 = vmatpush2.bf16.msra.mxu0 0
  %3044 = vmatprep.subr.bf16.mxu0 0
  %3045 = vmatpush2.bf16.msra.mxu0 0
  %3046 = vmatprep.subr.bf16.mxu0 0
  %3047 = vmatpush2.bf16.msra.mxu0 0
  %3048 = vmatprep.subr.bf16.mxu0 0
  %3049 = vmatpush2.bf16.msra.mxu0 0
  %3050 = vmatprep.subr.bf16.mxu0 0
  %3051 = vmatpush2.bf16.msra.mxu0 0
  %3052 = vmatprep.subr.bf16.mxu0 0
  %3053 = vmatpush2.bf16.msra.mxu0 0
  %3054 = vmatprep.subr.bf16.mxu0 0
  %3055 = vmatpush2.bf16.msra.mxu0 0
  %3056 = vmatprep.subr.bf16.mxu0 0
  %3057 = vmatpush2.bf16.msra.mxu0 0
  %3058 = vmatprep.mubr.bf16.mxu0 0
  %3059 = vmatmul.mubr.bf16.gmra.mxu0 %v3015
  %v3060 = vpop.f32.mrf.mxu0
  %v3061 = vadd.f32 0.0, %v3060
  %v3062 = vpop.f32.mrf.mxu0
  %v3063 = vpop.f32.mrf.mxu0
  %v3064 = vadd.f32 0.0, %v3063
  %v3065 = vpop.f32.mrf.mxu0
  %3066 = vmatprep.mubr.bf16.mxu0 0
  %3067 = vmatmul.mubr.bf16.gmra.mxu0 %v3018
  %v3068 = vpop.f32.mrf.mxu0
  %v3069 = vadd.f32 0.0, %v3068
  %v3070 = vpop.f32.mrf.mxu0
  %v3071 = vpop.f32.mrf.mxu0
  %v3072 = vadd.f32 0.0, %v3071
  %v3073 = vpop.f32.mrf.mxu0
  %3074 = vmatprep.mubr.bf16.mxu0 0
  %3075 = vmatmul.mubr.bf16.gmra.mxu0 %v3021
  %v3076 = vpop.f32.mrf.mxu0
  %v3077 = vadd.f32 0.0, %v3076
  %v3078 = vpop.f32.mrf.mxu0
  %v3079 = vpop.f32.mrf.mxu0
  %v3080 = vadd.f32 0.0, %v3079
  %v3081 = vpop.f32.mrf.mxu0
  %3082 = vmatprep.mubr.bf16.mxu0 0
  %3083 = vmatmul.mubr.bf16.gmra.mxu0 %v3024
  %v3084 = vpop.f32.mrf.mxu0
  %v3085 = vadd.f32 0.0, %v3084
  %v3086 = vpop.f32.mrf.mxu0
  %v3087 = vpop.f32.mrf.mxu0
  %v3088 = vadd.f32 0.0, %v3087
  %v3089 = vpop.f32.mrf.mxu0
  %3090 = vdwg.mxu0
  %v3091 = vpack.c.bf16 %v3064, %v3061
  %v3092 = vpack.c.bf16 %v3072, %v3069
  %v3093 = vpack.c.bf16 %v3080, %v3077
  %v3094 = vpack.c.bf16 %v3088, %v3085
  %v3096 = vsel %vm211, %v3091, 0
  %v3099 = vsel %vm211, %v3092, 0
  %v3102 = vsel %vm211, %v3093, 0
  %v3105 = vsel %vm211, %v3094, 0
  %3107 = vmatprep.subr.bf16.mxu0 0
  %3108 = vmatpush1.bf16.msra.mxu0 0
  %3109 = vmatprep.subr.bf16.mxu0 0
  %3110 = vmatpush1.bf16.msra.mxu0 0
  %3111 = vmatprep.subr.bf16.mxu0 0
  %3112 = vmatpush1.bf16.msra.mxu0 0
  %3113 = vmatprep.subr.bf16.mxu0 0
  %3114 = vmatpush1.bf16.msra.mxu0 0
  %3115 = vmatprep.subr.bf16.mxu0 0
  %3116 = vmatpush1.bf16.msra.mxu0 0
  %3117 = vmatprep.subr.bf16.mxu0 0
  %3118 = vmatpush1.bf16.msra.mxu0 0
  %3119 = vmatprep.subr.bf16.mxu0 0
  %3120 = vmatpush1.bf16.msra.mxu0 0
  %3121 = vmatprep.subr.bf16.mxu0 0
  %3122 = vmatpush1.bf16.msra.mxu0 %v2730
  %3123 = vmatprep.subr.bf16.mxu0 0
  %3124 = vmatpush2.bf16.msra.mxu0 0
  %3125 = vmatprep.subr.bf16.mxu0 0
  %3126 = vmatpush2.bf16.msra.mxu0 0
  %3127 = vmatprep.subr.bf16.mxu0 0
  %3128 = vmatpush2.bf16.msra.mxu0 0
  %3129 = vmatprep.subr.bf16.mxu0 0
  %3130 = vmatpush2.bf16.msra.mxu0 0
  %3131 = vmatprep.subr.bf16.mxu0 0
  %3132 = vmatpush2.bf16.msra.mxu0 0
  %3133 = vmatprep.subr.bf16.mxu0 0
  %3134 = vmatpush2.bf16.msra.mxu0 0
  %3135 = vmatprep.subr.bf16.mxu0 0
  %3136 = vmatpush2.bf16.msra.mxu0 0
  %3137 = vmatprep.subr.bf16.mxu0 0
  %3138 = vmatpush2.bf16.msra.mxu0 0
  %3139 = vmatprep.mubr.bf16.mxu0 0
  %3140 = vmatmul.mubr.bf16.gmra.mxu0 %v3096
  %v3141 = vpop.f32.mrf.mxu0
  %v3142 = vadd.f32 0.0, %v3141
  %v3143 = vpop.f32.mrf.mxu0
  %v3144 = vpop.f32.mrf.mxu0
  %v3145 = vadd.f32 0.0, %v3144
  %v3146 = vpop.f32.mrf.mxu0
  %3147 = vmatprep.mubr.bf16.mxu0 0
  %3148 = vmatmul.mubr.bf16.gmra.mxu0 %v3099
  %v3149 = vpop.f32.mrf.mxu0
  %v3150 = vadd.f32 0.0, %v3149
  %v3151 = vpop.f32.mrf.mxu0
  %v3152 = vpop.f32.mrf.mxu0
  %v3153 = vadd.f32 0.0, %v3152
  %v3154 = vpop.f32.mrf.mxu0
  %3155 = vmatprep.mubr.bf16.mxu0 0
  %3156 = vmatmul.mubr.bf16.gmra.mxu0 %v3102
  %v3157 = vpop.f32.mrf.mxu0
  %v3158 = vadd.f32 0.0, %v3157
  %v3159 = vpop.f32.mrf.mxu0
  %v3160 = vpop.f32.mrf.mxu0
  %v3161 = vadd.f32 0.0, %v3160
  %v3162 = vpop.f32.mrf.mxu0
  %3163 = vmatprep.mubr.bf16.mxu0 0
  %3164 = vmatmul.mubr.bf16.gmra.mxu0 %v3105
  %v3165 = vpop.f32.mrf.mxu0
  %v3166 = vadd.f32 0.0, %v3165
  %v3167 = vpop.f32.mrf.mxu0
  %v3168 = vpop.f32.mrf.mxu0
  %v3169 = vadd.f32 0.0, %v3168
  %v3170 = vpop.f32.mrf.mxu0
  %3171 = vdwg.mxu0
  %v3172 = vadd.f32 %v2417, %v3142
  %v3173 = vadd.f32 %v2418, %v3145
  %v3174 = vadd.f32 %v2419, %v3150
  %v3175 = vadd.f32 %v2420, %v3153
  %v3176 = vadd.f32 %v2421, %v3158
  %v3177 = vadd.f32 %v2422, %v3161
  %v3178 = vadd.f32 %v2423, %v3166
  %v3179 = vadd.f32 %v2424, %v3169
  %v3180 = vld [vmem:[%s4] sm:$0x1]
  %v3182 = vlaneseq
  %v3183 = vshrl.u32 %v3182, 7
  %v3184 = vsub.s32 0, %v3183
  %v3185 = vrot.slane %v3180, %v3184
  %v3187 = vadd.f32 %v2797, %v3185
  %v3188 = vadd.f32 %v2798, %v3185
  %v3189 = vadd.f32 %v2799, %v3185
  %v3190 = vadd.f32 %v2800, %v3185
  %v3191 = vadd.f32 %v2801, %v3185
  %v3192 = vadd.f32 %v2802, %v3185
  %v3193 = vadd.f32 %v2803, %v3185
  %v3194 = vadd.f32 %v2804, %v3185
  %3195 = vst.msk [vmem:[%s5] sm:$0xff] %vm68, %v3187
  %3196 = vst.msk [vmem:[%s5 + $0x8] sm:$0xff] %vm68, %v3188
  %3197 = vst.msk [vmem:[%s5 + $0x10] sm:$0xff] %vm68, %v3189
  %3198 = vst.msk [vmem:[%s5 + $0x18] sm:$0xff] %vm68, %v3190
  %3199 = vst.msk [vmem:[%s5 + $0x20] sm:$0xff] %vm68, %v3191
  %3200 = vst.msk [vmem:[%s5 + $0x28] sm:$0xff] %vm68, %v3192
  %3201 = vst.msk [vmem:[%s5 + $0x30] sm:$0xff] %vm68, %v3193
  %3202 = vst.msk [vmem:[%s5 + $0x38] sm:$0xff] %vm68, %v3194
  %v3203 = vld [vmem:[%s4] sm:$0x1]
  %v3205 = vlaneseq
  %v3206 = vshrl.u32 %v3205, 7
  %v3207 = vsub.s32 0, %v3206
  %v3208 = vrot.slane %v3203, %v3207
  %v3210 = vadd.f32 %v3172, %v3208
  %v3211 = vadd.f32 %v3173, %v3208
  %v3212 = vadd.f32 %v3174, %v3208
  %v3213 = vadd.f32 %v3175, %v3208
  %v3214 = vadd.f32 %v3176, %v3208
  %v3215 = vadd.f32 %v3177, %v3208
  %v3216 = vadd.f32 %v3178, %v3208
  %v3217 = vadd.f32 %v3179, %v3208
  %3218 = vst.msk [vmem:[%s5 + $0x40] sm:$0xff] %vm68, %v3210
  %3219 = vst.msk [vmem:[%s5 + $0x48] sm:$0xff] %vm68, %v3211
  %3220 = vst.msk [vmem:[%s5 + $0x50] sm:$0xff] %vm68, %v3212
  %3221 = vst.msk [vmem:[%s5 + $0x58] sm:$0xff] %vm68, %v3213
  %3222 = vst.msk [vmem:[%s5 + $0x60] sm:$0xff] %vm68, %v3214
  %3223 = vst.msk [vmem:[%s5 + $0x68] sm:$0xff] %vm68, %v3215
  %3224 = vst.msk [vmem:[%s5 + $0x70] sm:$0xff] %vm68, %v3216
  %3225 = vst.msk [vmem:[%s5 + $0x78] sm:$0xff] %vm68, %v3217
  // Predicated region
  $region22: #{tpu_custom_call.1} parent=0 // pred_check
    _
  $region23: #{tpu_custom_call.1} parent=0 // pred_check_branch
    %3227 = sbr.rel (0) target = $region25
  $region24: #{tpu_custom_call.1} parent=0 // pred_region
    _
  $region25: #{tpu_custom_call.1} parent=0 // pred_fallthru
    _
  // Predicated region
  $region26: #{tpu_custom_call.1} parent=0 // pred_check
    _
  $region27: #{tpu_custom_call.1} parent=0 // pred_check_branch
    %3229 = sbr.rel (0) target = $region29
  $region28: #{tpu_custom_call.1} parent=0 // pred_region
    _
  $region29: #{tpu_custom_call.1} parent=0 // pred_fallthru
    _

</llo_original>
